<compile_context>
chip_gen: v5e
topology: v5e:2x2
jax: 0.10.0
libtpu: 0.0.40
codegen_flags: <defaults>
</compile_context>

<pallas_src>
import functools

import numpy as np
import jax
import jax.numpy as jnp
from jax.experimental import pallas as pl
from jax.experimental.pallas import tpu as pltpu

NEG_SLOPE = 0.2
EPS = 1e-5
HIGHEST = jax.lax.Precision.HIGHEST


def _round_up(x, m):
    return ((x + m - 1) // m) * m


def _lrelu(x):
    return jnp.where(x >= 0, x, NEG_SLOPE * x)


# ------------------------- static config -------------------------

def make_config(latent_dim, nb_layers_mapping, img_channel, init_channel,
                start_size, nb_blocks):
    chans = [init_channel // (2 ** i) for i in range(nb_blocks + 1)]
    sizes = [start_size * (2 ** i) for i in range(nb_blocks + 1)]
    hws = [s * s for s in sizes]
    # conv stages: (cin, cout, resolution_index)
    convs = [(chans[0], chans[0], 0)]
    for i in range(1, nb_blocks + 1):
        convs += [(chans[i - 1], chans[i], i), (chans[i], chans[i], i)]
    # norm stages (AddNoise -> LeakyReLU -> InstanceNorm -> AdaIN): two per res
    norm_chs = []
    for r in range(nb_blocks + 1):
        norm_chs += [(chans[r], r), (chans[r], r)]
    # packed style-column offsets (scale / shift segments, 8-aligned)
    style_offs, off = [], 0
    for (C, _r) in norm_chs:
        seg = _round_up(C, 8)
        style_offs.append((off, off + seg))
        off += 2 * seg
    return dict(latent_dim=latent_dim, nb_layers_mapping=nb_layers_mapping,
                img_channel=img_channel, init_channel=init_channel,
                start_size=start_size, nb_blocks=nb_blocks, chans=chans,
                sizes=sizes, hws=hws, convs=convs, norm_chs=norm_chs,
                style_offs=style_offs, style_dim=off)


# ------------------------- parameters -------------------------

def init_params(key, cfg):
    latent = cfg["latent_dim"]
    ks = iter(jax.random.split(key, 128))

    def dense(din, dout):
        s = 1.0 / np.sqrt(din)
        return (jax.random.uniform(next(ks), (din, dout), jnp.float32, -s, s),
                jax.random.uniform(next(ks), (dout,), jnp.float32, -s, s))

    def conv3(cin, cout):
        s = 1.0 / np.sqrt(9.0 * cin)
        return (jax.random.uniform(next(ks), (cout, 3, 3, cin), jnp.float32, -s, s),
                jax.random.uniform(next(ks), (cout,), jnp.float32, -s, s))

    P = {}
    P["mapping"] = [dense(latent, latent) for _ in range(cfg["nb_layers_mapping"])]
    P["init_const"] = jnp.ones(
        (cfg["chans"][0], cfg["sizes"][0], cfg["sizes"][0]), jnp.float32)
    P["bias_init"] = jnp.ones((cfg["chans"][0],), jnp.float32)
    P["ada"] = [dense(latent, 2 * C) for (C, _r) in cfg["norm_chs"]]
    P["conv"] = [conv3(cin, cout) for (cin, cout, _r) in cfg["convs"]]
    # PyTorch inits AddNoise weights to zero; small random values are used here
    # so the noise path is actually exercised by the correctness check.
    P["noise_w"] = [0.1 * jax.random.normal(next(ks), (C,), jnp.float32)
                    for (C, _r) in cfg["norm_chs"]]
    P["out"] = dense(cfg["chans"][-1], cfg["img_channel"])
    return P


# ------------------------- kernel-side constant helpers -------------------------

def _upsample_matrix(H, W):
    # (H*W, 4*H*W) 0/1 matrix for 2x nearest-neighbour upsampling in flat layout.
    U = np.zeros((H * W, 4 * H * W), np.float32)
    for h2 in range(2 * H):
        for w2 in range(2 * W):
            U[(h2 // 2) * W + (w2 // 2), h2 * (2 * W) + w2] = 1.0
    return U


def _edge_masks(H, W):
    # row 0: valid when w > 0   (used for kernel tap dx = -1)
    # row 1: valid when w < W-1 (used for kernel tap dx = +1)
    m = np.zeros((2, H * W), np.float32)
    for h in range(H):
        for w in range(W):
            p = h * W + w
            m[0, p] = 1.0 if w > 0 else 0.0
            m[1, p] = 1.0 if w < W - 1 else 0.0
    return m


def pack_kernel_params(P, cfg):
    kp = {}
    # packed (and 8-aligned) AdaIN style weights: one matmul gives all styles.
    wcols, bcols = [], []
    for s, (C, _r) in enumerate(cfg["norm_chs"]):
        Ws, bs = P["ada"][s]
        seg = _round_up(C, 8)
        pad = seg - C
        wcols += [jnp.pad(Ws[:, :C], ((0, 0), (0, pad))),
                  jnp.pad(Ws[:, C:], ((0, 0), (0, pad)))]
        bcols += [jnp.pad(bs[:C], (0, pad)), jnp.pad(bs[C:], (0, pad))]
    kp["style_w"] = jnp.concatenate(wcols, axis=1)        # (latent, style_dim)
    kp["style_b"] = jnp.concatenate(bcols)                # (style_dim,)
    # init constant + bias, channel-major flat layout
    C0, S0 = cfg["chans"][0], cfg["sizes"][0]
    kp["x0"] = (P["init_const"] + P["bias_init"][:, None, None]).reshape(C0, S0 * S0)
    # conv weights: (Cout,3,3,Cin) -> (9, Cout, Cin) bf16, tap k = ky*3+kx
    kp["conv_w"] = [jnp.transpose(Wc, (1, 2, 0, 3))
                    .reshape(9, Wc.shape[0], Wc.shape[3]).astype(jnp.bfloat16)
                    for (Wc, _b) in P["conv"]]
    kp["conv_b"] = [bc[:, None] for (_w, bc) in P["conv"]]
    kp["noise_w"] = [nw[:, None] for nw in P["noise_w"]]
    kp["up"] = [jnp.asarray(_upsample_matrix(cfg["sizes"][r], cfg["sizes"][r]),
                            jnp.bfloat16) for r in range(cfg["nb_blocks"])]
    kp["mask"] = [jnp.asarray(_edge_masks(cfg["sizes"][r], cfg["sizes"][r]),
                              jnp.float32) for r in range(cfg["nb_blocks"] + 1)]
    Wo, bo = P["out"]
    kp["wout"] = Wo                      # (C_last, img_channel)
    kp["bout"] = bo[:, None]             # (img_channel, 1)
    return kp


# ------------------------- the fused Pallas kernel -------------------------

def _make_kernel(cfg):
    nb = cfg["nb_blocks"]
    n_res = nb + 1
    hws, widths = cfg["hws"], cfg["sizes"]
    convs, norm_chs = cfg["convs"], cfg["norm_chs"]
    style_offs = cfg["style_offs"]
    img_channel = cfg["img_channel"]
    n_conv, n_norm = len(convs), len(norm_chs)

    def kernel(*refs):
        it = iter(refs)
        styles_ref = next(it)
        noise_refs = [next(it) for _ in range(n_res)]
        mask_refs = [next(it) for _ in range(n_res)]
        x0_ref = next(it)
        up_refs = [next(it) for _ in range(nb)]
        cw_refs = [next(it) for _ in range(n_conv)]
        cb_refs = [next(it) for _ in range(n_conv)]
        nw_refs = [next(it) for _ in range(n_norm)]
        wout_ref = next(it)
        bout_ref = next(it)
        o_ref = next(it)

        styles = styles_ref[0]                               # (style_dim, 1) f32

        def norm_stage(y, s_idx):
            # AddNoise -> LeakyReLU -> InstanceNorm -> AdaIN modulation.
            C, r = norm_chs[s_idx]
            nz = noise_refs[r][0, (s_idx % 2):(s_idx % 2) + 1, :]   # (1, hw)
            nw = nw_refs[s_idx][...]                                # (C, 1)
            sc_off, sh_off = style_offs[s_idx]
            sc = styles[sc_off:sc_off + C, :]                       # (C, 1)
            sh = styles[sh_off:sh_off + C, :]
            y = y + nw * nz
            y = jnp.where(y >= 0, y, NEG_SLOPE * y)
            mean = jnp.mean(y, axis=1, keepdims=True)
            var = jnp.mean((y - mean) * (y - mean), axis=1, keepdims=True)
            y = (y - mean) * jax.lax.rsqrt(var + EPS)
            return y * (1.0 + sc) + sh

        def conv3x3(x, c_idx):
            # 3x3 "SAME" conv in flat (Cin, H*W) layout: 9 shifted copies
            # (static slices + zero concat + edge masks) feed 9 bf16 matmuls.
            cin, cout, r = convs[c_idx]
            hw, W = hws[r], widths[r]
            m = mask_refs[r][...]
            left_ok, right_ok = m[0:1, :], m[1:2, :]
            wref = cw_refs[c_idx]
            acc = jnp.zeros((cout, hw), jnp.float32)
            k = 0
            for dy in (-1, 0, 1):
                for dx in (-1, 0, 1):
                    delta = dy * W + dx
                    if delta > 0:
                        shx = jnp.concatenate(
                            [x[:, delta:], jnp.zeros((cin, delta), jnp.float32)],
                            axis=1)
                    elif delta < 0:
                        shx = jnp.concatenate(
                            [jnp.zeros((cin, -delta), jnp.float32),
                             x[:, :hw + delta]], axis=1)
                    else:
                        shx = x
                    if dx == 1:
                        shx = shx * right_ok
                    elif dx == -1:
                        shx = shx * left_ok
                    acc = acc + jnp.dot(wref[k], shx.astype(jnp.bfloat16),
                                        preferred_element_type=jnp.float32)
                    k += 1
            return acc + cb_refs[c_idx][...]

        # --- InitSynthesisBlock ---
        x = x0_ref[...]                                      # (C0, hw0) f32
        x = norm_stage(x, 0)
        x = norm_stage(conv3x3(x, 0), 1)

        # --- SynthesisBlocks (2x nearest upsample fused in as a 0/1 matmul) ---
        ci, si = 1, 2
        for blk in range(nb):
            x = jnp.dot(x.astype(jnp.bfloat16), up_refs[blk][...],
                        preferred_element_type=jnp.float32)
            x = norm_stage(conv3x3(x, ci), si); ci += 1; si += 1
            x = norm_stage(conv3x3(x, ci), si); ci += 1; si += 1

        # --- 1x1 out conv + tanh as a VPU weighted channel sum (lane-dense) ---
        wout = wout_ref[...]                                 # (C_last, img_ch)
        rows = [jnp.sum(wout[:, c:c + 1] * x, axis=0, keepdims=True)
                for c in range(img_channel)]
        y = rows[0] if img_channel == 1 else jnp.concatenate(rows, axis=0)
        o_ref[0] = jnp.tanh(y + bout_ref[...])

    return kernel


# ------------------------- forward pass (Pallas) -------------------------

def style_generator_forward(z, P, kp, noises, *, cfg):
    B = z.shape[0]
    nb = cfg["nb_blocks"]
    n_res = nb + 1
    S_pad = cfg["style_dim"]
    IC, HWf = cfg["img_channel"], cfg["hws"][-1]

    # Mapping network + packed AdaIN style linears: tiny, left to XLA.
    w = z
    for Wm, bm in P["mapping"]:
        w = _lrelu(jnp.dot(w, Wm, precision=HIGHEST) + bm)
    styles = jnp.dot(w, kp["style_w"], precision=HIGHEST) + kp["style_b"]
    styles = styles[:, :, None]                              # (B, S_pad, 1)

    # noise, lane-dense: (B, 2, H*W) per resolution (two norm stages each).
    noise_stacked = [
        jnp.stack([noises[2 * r].reshape(B, cfg["hws"][r]),
                   noises[2 * r + 1].reshape(B, cfg["hws"][r])], axis=1)
        for r in range(n_res)]

    args, in_specs = [], []

    def add(a, spec):
        args.append(a)
        in_specs.append(spec)

    add(styles, pl.BlockSpec((1, S_pad, 1), lambda b: (b, 0, 0)))
    for r in range(n_res):
        add(noise_stacked[r],
            pl.BlockSpec((1, 2, cfg["hws"][r]), lambda b: (b, 0, 0)))
    for r in range(n_res):
        add(kp["mask"][r], pl.BlockSpec(kp["mask"][r].shape, lambda b: (0, 0)))
    add(kp["x0"], pl.BlockSpec(kp["x0"].shape, lambda b: (0, 0)))
    for U in kp["up"]:
        add(U, pl.BlockSpec(U.shape, lambda b: (0, 0)))
    for Wc in kp["conv_w"]:
        add(Wc, pl.BlockSpec(Wc.shape, lambda b: (0, 0, 0)))
    for bc in kp["conv_b"]:
        add(bc, pl.BlockSpec(bc.shape, lambda b: (0, 0)))
    for nw in kp["noise_w"]:
        add(nw, pl.BlockSpec(nw.shape, lambda b: (0, 0)))
    add(kp["wout"], pl.BlockSpec(kp["wout"].shape, lambda b: (0, 0)))
    add(kp["bout"], pl.BlockSpec(kp["bout"].shape, lambda b: (0, 0)))

    out = pl.pallas_call(
        _make_kernel(cfg),
        out_shape=jax.ShapeDtypeStruct((B, IC, HWf), jnp.float32),
        grid=(B,),
        in_specs=in_specs,
        out_specs=pl.BlockSpec((1, IC, HWf), lambda b: (b, 0, 0)),
        compiler_params=pltpu.CompilerParams(dimension_semantics=("parallel",)),
    )(*args)

    Hf = cfg["sizes"][-1]
    return out.reshape(B, IC, Hf, Hf)                        # NCHW, like PyTorch


# ------------------------- pure-JAX reference -------------------------

def ref_forward(z, P, noises, *, cfg):
    # Mirrors the PyTorch module; convs use the same bf16-input / f32-accum
    # precision the kernel uses on the MXU.
    B = z.shape[0]
    nb = cfg["nb_blocks"]

    w = z
    for Wm, bm in P["mapping"]:
        w = _lrelu(jnp.dot(w, Wm, precision=HIGHEST) + bm)

    def instance_norm(x):
        m = x.mean(axis=(1, 2), keepdims=True)
        v = ((x - m) ** 2).mean(axis=(1, 2), keepdims=True)
        return (x - m) * jax.lax.rsqrt(v + EPS)

    def adain(x, s_idx):
        Ws, bs = P["ada"][s_idx]
        C = x.shape[-1]
        st = jnp.dot(w, Ws, precision=HIGHEST) + bs
        sc = st[:, :C].reshape(B, 1, 1, C)
        sh = st[:, C:].reshape(B, 1, 1, C)
        return instance_norm(x) * (1.0 + sc) + sh

    def add_noise(x, s_idx, nz):
        nw = P["noise_w"][s_idx].reshape(1, 1, 1, -1)
        return _lrelu(x + nw * nz[..., None])

    def conv3(x, c_idx):
        Wc, bc = P["conv"][c_idx]                      # (Cout, 3, 3, Cin)
        k = jnp.transpose(Wc, (1, 2, 3, 0))            # HWIO
        y = jax.lax.conv_general_dilated(
            x.astype(jnp.bfloat16), k.astype(jnp.bfloat16), (1, 1), "SAME",
            dimension_numbers=("NHWC", "HWIO", "NHWC"),
            preferred_element_type=jnp.float32)
        return y + bc.reshape(1, 1, 1, -1)

    S0, C0 = cfg["sizes"][0], cfg["chans"][0]
    x = jnp.broadcast_to(jnp.transpose(P["init_const"], (1, 2, 0))[None]
                         + P["bias_init"].reshape(1, 1, 1, C0), (B, S0, S0, C0))
    x = add_noise(x, 0, noises[0]); x = adain(x, 0)
    x = conv3(x, 0)
    x = add_noise(x, 1, noises[1]); x = adain(x, 1)

    ci, si = 1, 2
    for _blk in range(nb):
        x = jnp.repeat(jnp.repeat(x, 2, axis=1), 2, axis=2)
        x = conv3(x, ci); ci += 1
        x = add_noise(x, si, noises[si]); x = adain(x, si); si += 1
        x = conv3(x, ci); ci += 1
        x = add_noise(x, si, noises[si]); x = adain(x, si); si += 1

    Wo, bo = P["out"]
    y = jnp.tanh(jnp.einsum("bhwc,co->bhwo", x, Wo, precision=HIGHEST)
                 + bo.reshape(1, 1, 1, -1))
    return jnp.transpose(y, (0, 3, 1, 2))                    # NCHW


# ------------------------- main -------------------------

if __name__ == "__main__":
    cfg = make_config(latent_dim=32, nb_layers_mapping=3, img_channel=1,
                      init_channel=16, start_size=4, nb_blocks=2)
    B = 2

    key = jax.random.PRNGKey(0)
    k_params, k_z, k_noise = jax.random.split(key, 3)

    P = init_params(k_params, cfg)
    kp = pack_kernel_params(P, cfg)
    z = jax.random.normal(k_z, (B, cfg["latent_dim"]), jnp.float32)

    # per-stage spatial noise (torch.randn in AddNoise), shared by both paths
    nkeys = jax.random.split(k_noise, 2 * (cfg["nb_blocks"] + 1))
    noises = []
    for r in range(cfg["nb_blocks"] + 1):
        H = cfg["sizes"][r]
        noises.append(jax.random.normal(nkeys[2 * r], (B, H, H), jnp.float32))
        noises.append(jax.random.normal(nkeys[2 * r + 1], (B, H, H), jnp.float32))

    fwd = jax.jit(functools.partial(style_generator_forward, cfg=cfg))
    out = jax.block_until_ready(fwd(z, P, kp, noises))

    Hf = cfg["sizes"][-1]
    assert out.shape == (B, cfg["img_channel"], Hf, Hf), out.shape
    assert bool(jnp.all(jnp.isfinite(out)))

    ref = jax.block_until_ready(
        jax.jit(functools.partial(ref_forward, cfg=cfg))(z, P, noises))
    err = float(jnp.max(jnp.abs(out - ref)))
    assert err < 2e-3, f"max abs err vs reference: {err}"

    print("KERNEL_OK")
</pallas_src>

<mosaic_0001>
module attributes {stable_mosaic.version = 11 : i64} {
  func.func @kernel(%arg0: i32, %arg1: memref<1x128x1xf32, #tpu.memory_space<vmem>>, %arg2: memref<1x2x16xf32, #tpu.memory_space<vmem>>, %arg3: memref<1x2x64xf32, #tpu.memory_space<vmem>>, %arg4: memref<1x2x256xf32, #tpu.memory_space<vmem>>, %arg5: memref<2x16xf32, #tpu.memory_space<vmem>>, %arg6: memref<2x64xf32, #tpu.memory_space<vmem>>, %arg7: memref<2x256xf32, #tpu.memory_space<vmem>>, %arg8: memref<16x16xf32, #tpu.memory_space<vmem>>, %arg9: memref<16x64xbf16, #tpu.memory_space<vmem>>, %arg10: memref<64x256xbf16, #tpu.memory_space<vmem>>, %arg11: memref<9x16x16xbf16, #tpu.memory_space<vmem>>, %arg12: memref<9x8x16xbf16, #tpu.memory_space<vmem>>, %arg13: memref<9x8x8xbf16, #tpu.memory_space<vmem>>, %arg14: memref<9x4x8xbf16, #tpu.memory_space<vmem>>, %arg15: memref<9x4x4xbf16, #tpu.memory_space<vmem>>, %arg16: memref<16x1xf32, #tpu.memory_space<vmem>>, %arg17: memref<8x1xf32, #tpu.memory_space<vmem>>, %arg18: memref<8x1xf32, #tpu.memory_space<vmem>>, %arg19: memref<4x1xf32, #tpu.memory_space<vmem>>, %arg20: memref<4x1xf32, #tpu.memory_space<vmem>>, %arg21: memref<16x1xf32, #tpu.memory_space<vmem>>, %arg22: memref<16x1xf32, #tpu.memory_space<vmem>>, %arg23: memref<8x1xf32, #tpu.memory_space<vmem>>, %arg24: memref<8x1xf32, #tpu.memory_space<vmem>>, %arg25: memref<4x1xf32, #tpu.memory_space<vmem>>, %arg26: memref<4x1xf32, #tpu.memory_space<vmem>>, %arg27: memref<4x1xf32, #tpu.memory_space<vmem>>, %arg28: memref<1x1xf32, #tpu.memory_space<vmem>>, %arg29: memref<1x1x256xf32, #tpu.memory_space<vmem>>) attributes {dimension_semantics = [#tpu.dimension_semantics<parallel>], iteration_bounds = array<i64: 2>, scalar_prefetch = 0 : i64, scratch_operands = 0 : i64, tpu.core_type = #tpu.core_type<tc>, window_params = [{transform_indices = @transform_0, window_bounds = array<i64: 1, 128, 1>}, {transform_indices = @transform_1, window_bounds = array<i64: 1, 2, 16>}, {transform_indices = @transform_2, window_bounds = array<i64: 1, 2, 64>}, {transform_indices = @transform_3, window_bounds = array<i64: 1, 2, 256>}, {pipeline_mode = #tpu.pipeline_mode<synchronous>, transform_indices = @transform_4, window_bounds = array<i64: 2, 16>}, {pipeline_mode = #tpu.pipeline_mode<synchronous>, transform_indices = @transform_5, window_bounds = array<i64: 2, 64>}, {pipeline_mode = #tpu.pipeline_mode<synchronous>, transform_indices = @transform_6, window_bounds = array<i64: 2, 256>}, {pipeline_mode = #tpu.pipeline_mode<synchronous>, transform_indices = @transform_7, window_bounds = array<i64: 16, 16>}, {pipeline_mode = #tpu.pipeline_mode<synchronous>, transform_indices = @transform_8, window_bounds = array<i64: 16, 64>}, {pipeline_mode = #tpu.pipeline_mode<synchronous>, transform_indices = @transform_9, window_bounds = array<i64: 64, 256>}, {pipeline_mode = #tpu.pipeline_mode<synchronous>, transform_indices = @transform_10, window_bounds = array<i64: 9, 16, 16>}, {pipeline_mode = #tpu.pipeline_mode<synchronous>, transform_indices = @transform_11, window_bounds = array<i64: 9, 8, 16>}, {pipeline_mode = #tpu.pipeline_mode<synchronous>, transform_indices = @transform_12, window_bounds = array<i64: 9, 8, 8>}, {pipeline_mode = #tpu.pipeline_mode<synchronous>, transform_indices = @transform_13, window_bounds = array<i64: 9, 4, 8>}, {pipeline_mode = #tpu.pipeline_mode<synchronous>, transform_indices = @transform_14, window_bounds = array<i64: 9, 4, 4>}, {pipeline_mode = #tpu.pipeline_mode<synchronous>, transform_indices = @transform_15, window_bounds = array<i64: 16, 1>}, {pipeline_mode = #tpu.pipeline_mode<synchronous>, transform_indices = @transform_16, window_bounds = array<i64: 8, 1>}, {pipeline_mode = #tpu.pipeline_mode<synchronous>, transform_indices = @transform_17, window_bounds = array<i64: 8, 1>}, {pipeline_mode = #tpu.pipeline_mode<synchronous>, transform_indices = @transform_18, window_bounds = array<i64: 4, 1>}, {pipeline_mode = #tpu.pipeline_mode<synchronous>, transform_indices = @transform_19, window_bounds = array<i64: 4, 1>}, {pipeline_mode = #tpu.pipeline_mode<synchronous>, transform_indices = @transform_20, window_bounds = array<i64: 16, 1>}, {pipeline_mode = #tpu.pipeline_mode<synchronous>, transform_indices = @transform_21, window_bounds = array<i64: 16, 1>}, {pipeline_mode = #tpu.pipeline_mode<synchronous>, transform_indices = @transform_22, window_bounds = array<i64: 8, 1>}, {pipeline_mode = #tpu.pipeline_mode<synchronous>, transform_indices = @transform_23, window_bounds = array<i64: 8, 1>}, {pipeline_mode = #tpu.pipeline_mode<synchronous>, transform_indices = @transform_24, window_bounds = array<i64: 4, 1>}, {pipeline_mode = #tpu.pipeline_mode<synchronous>, transform_indices = @transform_25, window_bounds = array<i64: 4, 1>}, {pipeline_mode = #tpu.pipeline_mode<synchronous>, transform_indices = @transform_26, window_bounds = array<i64: 4, 1>}, {pipeline_mode = #tpu.pipeline_mode<synchronous>, transform_indices = @transform_27, window_bounds = array<i64: 1, 1>}, {transform_indices = @transform_28, window_bounds = array<i64: 1, 1, 256>}]} {
    %c0 = arith.constant 0 : index
    %c0_0 = arith.constant 0 : index
    %c0_1 = arith.constant 0 : index
    %0 = vector.load %arg1[%c0, %c0_0, %c0_1] : memref<1x128x1xf32, #tpu.memory_space<vmem>>, vector<1x128x1xf32>
    %1 = vector.shape_cast %0 : vector<1x128x1xf32> to vector<128x1xf32>
    %c0_2 = arith.constant 0 : index
    %c0_3 = arith.constant 0 : index
    %2 = vector.load %arg8[%c0_2, %c0_3] : memref<16x16xf32, #tpu.memory_space<vmem>>, vector<16x16xf32>
    %c0_4 = arith.constant 0 : index
    %c0_5 = arith.constant 0 : index
    %c0_6 = arith.constant 0 : index
    %3 = vector.load %arg2[%c0_4, %c0_5, %c0_6] : memref<1x2x16xf32, #tpu.memory_space<vmem>>, vector<1x1x16xf32>
    %4 = vector.shape_cast %3 : vector<1x1x16xf32> to vector<1x16xf32>
    %c0_7 = arith.constant 0 : index
    %c0_8 = arith.constant 0 : index
    %5 = vector.load %arg21[%c0_7, %c0_8] : memref<16x1xf32, #tpu.memory_space<vmem>>, vector<16x1xf32>
    %6 = vector.extract_strided_slice %1 {offsets = [0, 0], sizes = [16, 1], strides = [1, 1]} : vector<128x1xf32> to vector<16x1xf32>
    %7 = vector.extract_strided_slice %1 {offsets = [16, 0], sizes = [16, 1], strides = [1, 1]} : vector<128x1xf32> to vector<16x1xf32>
    %8 = vector.broadcast %5 : vector<16x1xf32> to vector<16x16xf32>
    %9 = vector.broadcast %4 : vector<1x16xf32> to vector<16x16xf32>
    %10 = arith.mulf %8, %9 : vector<16x16xf32>
    %11 = arith.addf %2, %10 : vector<16x16xf32>
    %cst = arith.constant 0.000000e+00 : f32
    %12 = vector.broadcast %cst : f32 to vector<16x16xf32>
    %13 = arith.cmpf oge, %11, %12 : vector<16x16xf32>
    %cst_9 = arith.constant 2.000000e-01 : f32
    %14 = vector.broadcast %cst_9 : f32 to vector<16x16xf32>
    %15 = arith.mulf %14, %11 : vector<16x16xf32>
    %16 = arith.select %13, %11, %15 : vector<16x16xi1>, vector<16x16xf32>
    %cst_10 = arith.constant dense<0.000000e+00> : vector<16xf32>
    %17 = vector.multi_reduction <add>, %16, %cst_10 [1] : vector<16x16xf32> to vector<16xf32>
    %18 = vector.shape_cast %17 : vector<16xf32> to vector<16x1xf32>
    %cst_11 = arith.constant 1.600000e+01 : f32
    %19 = vector.broadcast %cst_11 : f32 to vector<16x1xf32>
    %20 = arith.divf %18, %19 : vector<16x1xf32>
    %21 = vector.broadcast %20 : vector<16x1xf32> to vector<16x16xf32>
    %22 = arith.subf %16, %21 : vector<16x16xf32>
    %23 = vector.broadcast %20 : vector<16x1xf32> to vector<16x16xf32>
    %24 = arith.subf %16, %23 : vector<16x16xf32>
    %25 = arith.mulf %22, %24 : vector<16x16xf32>
    %cst_12 = arith.constant dense<0.000000e+00> : vector<16xf32>
    %26 = vector.multi_reduction <add>, %25, %cst_12 [1] : vector<16x16xf32> to vector<16xf32>
    %27 = vector.shape_cast %26 : vector<16xf32> to vector<16x1xf32>
    %cst_13 = arith.constant 1.600000e+01 : f32
    %28 = vector.broadcast %cst_13 : f32 to vector<16x1xf32>
    %29 = arith.divf %27, %28 : vector<16x1xf32>
    %30 = vector.broadcast %20 : vector<16x1xf32> to vector<16x16xf32>
    %31 = arith.subf %16, %30 : vector<16x16xf32>
    %cst_14 = arith.constant 9.99999974E-6 : f32
    %32 = vector.broadcast %cst_14 : f32 to vector<16x1xf32>
    %33 = arith.addf %29, %32 : vector<16x1xf32>
    %34 = math.rsqrt %33 : vector<16x1xf32>
    %35 = vector.broadcast %34 : vector<16x1xf32> to vector<16x16xf32>
    %36 = arith.mulf %31, %35 : vector<16x16xf32>
    %cst_15 = arith.constant 1.000000e+00 : f32
    %37 = vector.broadcast %cst_15 : f32 to vector<16x1xf32>
    %38 = arith.addf %37, %6 : vector<16x1xf32>
    %39 = vector.broadcast %38 : vector<16x1xf32> to vector<16x16xf32>
    %40 = arith.mulf %36, %39 : vector<16x16xf32>
    %41 = vector.broadcast %7 : vector<16x1xf32> to vector<16x16xf32>
    %42 = arith.addf %40, %41 : vector<16x16xf32>
    %c0_16 = arith.constant 0 : index
    %c0_17 = arith.constant 0 : index
    %43 = vector.load %arg5[%c0_16, %c0_17] : memref<2x16xf32, #tpu.memory_space<vmem>>, vector<2x16xf32>
    %44 = vector.extract_strided_slice %43 {offsets = [0, 0], sizes = [1, 16], strides = [1, 1]} : vector<2x16xf32> to vector<1x16xf32>
    %45 = vector.extract_strided_slice %43 {offsets = [1, 0], sizes = [1, 16], strides = [1, 1]} : vector<2x16xf32> to vector<1x16xf32>
    %cst_18 = arith.constant 0.000000e+00 : f32
    %46 = vector.broadcast %cst_18 : f32 to vector<16x16xf32>
    %cst_19 = arith.constant 0.000000e+00 : f32
    %47 = vector.broadcast %cst_19 : f32 to vector<16x5xf32>
    %48 = vector.extract_strided_slice %42 {offsets = [0, 0], sizes = [16, 11], strides = [1, 1]} : vector<16x16xf32> to vector<16x11xf32>
    %49 = tpu.concatenate %47, %48 in 1 : vector<16x5xf32>, vector<16x11xf32> -> vector<16x16xf32>
    %50 = vector.broadcast %44 : vector<1x16xf32> to vector<16x16xf32>
    %51 = arith.mulf %49, %50 : vector<16x16xf32>
    %c0_20 = arith.constant 0 : index
    %c0_21 = arith.constant 0 : index
    %c0_22 = arith.constant 0 : index
    %52 = vector.load %arg11[%c0_20, %c0_21, %c0_22] : memref<9x16x16xbf16, #tpu.memory_space<vmem>>, vector<1x16x16xbf16>
    %53 = vector.shape_cast %52 : vector<1x16x16xbf16> to vector<16x16xbf16>
    %54 = arith.truncf %51 : vector<16x16xf32> to vector<16x16xbf16>
    %cst_23 = arith.constant dense<0.000000e+00> : vector<16x16xf32>
    %55 = tpu.matmul %53, %54, %cst_23 {dimension_numbers = #tpu.dot_dimension_numbers<[1], [0], [0], [1], [0, 0, 1, 1], [], []>} : vector<16x16xbf16>, vector<16x16xbf16>, vector<16x16xf32> -> vector<16x16xf32>
    %56 = arith.addf %46, %55 : vector<16x16xf32>
    %cst_24 = arith.constant 0.000000e+00 : f32
    %57 = vector.broadcast %cst_24 : f32 to vector<16x4xf32>
    %58 = vector.extract_strided_slice %42 {offsets = [0, 0], sizes = [16, 12], strides = [1, 1]} : vector<16x16xf32> to vector<16x12xf32>
    %59 = tpu.concatenate %57, %58 in 1 : vector<16x4xf32>, vector<16x12xf32> -> vector<16x16xf32>
    %c1 = arith.constant 1 : index
    %c0_25 = arith.constant 0 : index
    %c0_26 = arith.constant 0 : index
    %60 = vector.load %arg11[%c1, %c0_25, %c0_26] : memref<9x16x16xbf16, #tpu.memory_space<vmem>>, vector<1x16x16xbf16>
    %61 = vector.shape_cast %60 : vector<1x16x16xbf16> to vector<16x16xbf16>
    %62 = arith.truncf %59 : vector<16x16xf32> to vector<16x16xbf16>
    %cst_27 = arith.constant dense<0.000000e+00> : vector<16x16xf32>
    %63 = tpu.matmul %61, %62, %cst_27 {dimension_numbers = #tpu.dot_dimension_numbers<[1], [0], [0], [1], [0, 0, 1, 1], [], []>} : vector<16x16xbf16>, vector<16x16xbf16>, vector<16x16xf32> -> vector<16x16xf32>
    %64 = arith.addf %56, %63 : vector<16x16xf32>
    %cst_28 = arith.constant 0.000000e+00 : f32
    %65 = vector.broadcast %cst_28 : f32 to vector<16x3xf32>
    %66 = vector.extract_strided_slice %42 {offsets = [0, 0], sizes = [16, 13], strides = [1, 1]} : vector<16x16xf32> to vector<16x13xf32>
    %67 = tpu.concatenate %65, %66 in 1 : vector<16x3xf32>, vector<16x13xf32> -> vector<16x16xf32>
    %68 = vector.broadcast %45 : vector<1x16xf32> to vector<16x16xf32>
    %69 = arith.mulf %67, %68 : vector<16x16xf32>
    %c2 = arith.constant 2 : index
    %c0_29 = arith.constant 0 : index
    %c0_30 = arith.constant 0 : index
    %70 = vector.load %arg11[%c2, %c0_29, %c0_30] : memref<9x16x16xbf16, #tpu.memory_space<vmem>>, vector<1x16x16xbf16>
    %71 = vector.shape_cast %70 : vector<1x16x16xbf16> to vector<16x16xbf16>
    %72 = arith.truncf %69 : vector<16x16xf32> to vector<16x16xbf16>
    %cst_31 = arith.constant dense<0.000000e+00> : vector<16x16xf32>
    %73 = tpu.matmul %71, %72, %cst_31 {dimension_numbers = #tpu.dot_dimension_numbers<[1], [0], [0], [1], [0, 0, 1, 1], [], []>} : vector<16x16xbf16>, vector<16x16xbf16>, vector<16x16xf32> -> vector<16x16xf32>
    %74 = arith.addf %64, %73 : vector<16x16xf32>
    %cst_32 = arith.constant 0.000000e+00 : f32
    %75 = vector.broadcast %cst_32 : f32 to vector<16x1xf32>
    %76 = vector.extract_strided_slice %42 {offsets = [0, 0], sizes = [16, 15], strides = [1, 1]} : vector<16x16xf32> to vector<16x15xf32>
    %77 = tpu.concatenate %75, %76 in 1 : vector<16x1xf32>, vector<16x15xf32> -> vector<16x16xf32>
    %78 = vector.broadcast %44 : vector<1x16xf32> to vector<16x16xf32>
    %79 = arith.mulf %77, %78 : vector<16x16xf32>
    %c3 = arith.constant 3 : index
    %c0_33 = arith.constant 0 : index
    %c0_34 = arith.constant 0 : index
    %80 = vector.load %arg11[%c3, %c0_33, %c0_34] : memref<9x16x16xbf16, #tpu.memory_space<vmem>>, vector<1x16x16xbf16>
    %81 = vector.shape_cast %80 : vector<1x16x16xbf16> to vector<16x16xbf16>
    %82 = arith.truncf %79 : vector<16x16xf32> to vector<16x16xbf16>
    %cst_35 = arith.constant dense<0.000000e+00> : vector<16x16xf32>
    %83 = tpu.matmul %81, %82, %cst_35 {dimension_numbers = #tpu.dot_dimension_numbers<[1], [0], [0], [1], [0, 0, 1, 1], [], []>} : vector<16x16xbf16>, vector<16x16xbf16>, vector<16x16xf32> -> vector<16x16xf32>
    %84 = arith.addf %74, %83 : vector<16x16xf32>
    %c4 = arith.constant 4 : index
    %c0_36 = arith.constant 0 : index
    %c0_37 = arith.constant 0 : index
    %85 = vector.load %arg11[%c4, %c0_36, %c0_37] : memref<9x16x16xbf16, #tpu.memory_space<vmem>>, vector<1x16x16xbf16>
    %86 = vector.shape_cast %85 : vector<1x16x16xbf16> to vector<16x16xbf16>
    %87 = arith.truncf %42 : vector<16x16xf32> to vector<16x16xbf16>
    %cst_38 = arith.constant dense<0.000000e+00> : vector<16x16xf32>
    %88 = tpu.matmul %86, %87, %cst_38 {dimension_numbers = #tpu.dot_dimension_numbers<[1], [0], [0], [1], [0, 0, 1, 1], [], []>} : vector<16x16xbf16>, vector<16x16xbf16>, vector<16x16xf32> -> vector<16x16xf32>
    %89 = arith.addf %84, %88 : vector<16x16xf32>
    %90 = vector.extract_strided_slice %42 {offsets = [0, 1], sizes = [16, 15], strides = [1, 1]} : vector<16x16xf32> to vector<16x15xf32>
    %cst_39 = arith.constant 0.000000e+00 : f32
    %91 = vector.broadcast %cst_39 : f32 to vector<16x1xf32>
    %92 = tpu.concatenate %90, %91 in 1 : vector<16x15xf32>, vector<16x1xf32> -> vector<16x16xf32>
    %93 = vector.broadcast %45 : vector<1x16xf32> to vector<16x16xf32>
    %94 = arith.mulf %92, %93 : vector<16x16xf32>
    %c5 = arith.constant 5 : index
    %c0_40 = arith.constant 0 : index
    %c0_41 = arith.constant 0 : index
    %95 = vector.load %arg11[%c5, %c0_40, %c0_41] : memref<9x16x16xbf16, #tpu.memory_space<vmem>>, vector<1x16x16xbf16>
    %96 = vector.shape_cast %95 : vector<1x16x16xbf16> to vector<16x16xbf16>
    %97 = arith.truncf %94 : vector<16x16xf32> to vector<16x16xbf16>
    %cst_42 = arith.constant dense<0.000000e+00> : vector<16x16xf32>
    %98 = tpu.matmul %96, %97, %cst_42 {dimension_numbers = #tpu.dot_dimension_numbers<[1], [0], [0], [1], [0, 0, 1, 1], [], []>} : vector<16x16xbf16>, vector<16x16xbf16>, vector<16x16xf32> -> vector<16x16xf32>
    %99 = arith.addf %89, %98 : vector<16x16xf32>
    %100 = vector.extract_strided_slice %42 {offsets = [0, 3], sizes = [16, 13], strides = [1, 1]} : vector<16x16xf32> to vector<16x13xf32>
    %cst_43 = arith.constant 0.000000e+00 : f32
    %101 = vector.broadcast %cst_43 : f32 to vector<16x3xf32>
    %102 = tpu.concatenate %100, %101 in 1 : vector<16x13xf32>, vector<16x3xf32> -> vector<16x16xf32>
    %103 = vector.broadcast %44 : vector<1x16xf32> to vector<16x16xf32>
    %104 = arith.mulf %102, %103 : vector<16x16xf32>
    %c6 = arith.constant 6 : index
    %c0_44 = arith.constant 0 : index
    %c0_45 = arith.constant 0 : index
    %105 = vector.load %arg11[%c6, %c0_44, %c0_45] : memref<9x16x16xbf16, #tpu.memory_space<vmem>>, vector<1x16x16xbf16>
    %106 = vector.shape_cast %105 : vector<1x16x16xbf16> to vector<16x16xbf16>
    %107 = arith.truncf %104 : vector<16x16xf32> to vector<16x16xbf16>
    %cst_46 = arith.constant dense<0.000000e+00> : vector<16x16xf32>
    %108 = tpu.matmul %106, %107, %cst_46 {dimension_numbers = #tpu.dot_dimension_numbers<[1], [0], [0], [1], [0, 0, 1, 1], [], []>} : vector<16x16xbf16>, vector<16x16xbf16>, vector<16x16xf32> -> vector<16x16xf32>
    %109 = arith.addf %99, %108 : vector<16x16xf32>
    %110 = vector.extract_strided_slice %42 {offsets = [0, 4], sizes = [16, 12], strides = [1, 1]} : vector<16x16xf32> to vector<16x12xf32>
    %cst_47 = arith.constant 0.000000e+00 : f32
    %111 = vector.broadcast %cst_47 : f32 to vector<16x4xf32>
    %112 = tpu.concatenate %110, %111 in 1 : vector<16x12xf32>, vector<16x4xf32> -> vector<16x16xf32>
    %c7 = arith.constant 7 : index
    %c0_48 = arith.constant 0 : index
    %c0_49 = arith.constant 0 : index
    %113 = vector.load %arg11[%c7, %c0_48, %c0_49] : memref<9x16x16xbf16, #tpu.memory_space<vmem>>, vector<1x16x16xbf16>
    %114 = vector.shape_cast %113 : vector<1x16x16xbf16> to vector<16x16xbf16>
    %115 = arith.truncf %112 : vector<16x16xf32> to vector<16x16xbf16>
    %cst_50 = arith.constant dense<0.000000e+00> : vector<16x16xf32>
    %116 = tpu.matmul %114, %115, %cst_50 {dimension_numbers = #tpu.dot_dimension_numbers<[1], [0], [0], [1], [0, 0, 1, 1], [], []>} : vector<16x16xbf16>, vector<16x16xbf16>, vector<16x16xf32> -> vector<16x16xf32>
    %117 = arith.addf %109, %116 : vector<16x16xf32>
    %118 = vector.extract_strided_slice %42 {offsets = [0, 5], sizes = [16, 11], strides = [1, 1]} : vector<16x16xf32> to vector<16x11xf32>
    %cst_51 = arith.constant 0.000000e+00 : f32
    %119 = vector.broadcast %cst_51 : f32 to vector<16x5xf32>
    %120 = tpu.concatenate %118, %119 in 1 : vector<16x11xf32>, vector<16x5xf32> -> vector<16x16xf32>
    %121 = vector.broadcast %45 : vector<1x16xf32> to vector<16x16xf32>
    %122 = arith.mulf %120, %121 : vector<16x16xf32>
    %c8 = arith.constant 8 : index
    %c0_52 = arith.constant 0 : index
    %c0_53 = arith.constant 0 : index
    %123 = vector.load %arg11[%c8, %c0_52, %c0_53] : memref<9x16x16xbf16, #tpu.memory_space<vmem>>, vector<1x16x16xbf16>
    %124 = vector.shape_cast %123 : vector<1x16x16xbf16> to vector<16x16xbf16>
    %125 = arith.truncf %122 : vector<16x16xf32> to vector<16x16xbf16>
    %cst_54 = arith.constant dense<0.000000e+00> : vector<16x16xf32>
    %126 = tpu.matmul %124, %125, %cst_54 {dimension_numbers = #tpu.dot_dimension_numbers<[1], [0], [0], [1], [0, 0, 1, 1], [], []>} : vector<16x16xbf16>, vector<16x16xbf16>, vector<16x16xf32> -> vector<16x16xf32>
    %127 = arith.addf %117, %126 : vector<16x16xf32>
    %c0_55 = arith.constant 0 : index
    %c0_56 = arith.constant 0 : index
    %128 = vector.load %arg16[%c0_55, %c0_56] : memref<16x1xf32, #tpu.memory_space<vmem>>, vector<16x1xf32>
    %129 = vector.broadcast %128 : vector<16x1xf32> to vector<16x16xf32>
    %130 = arith.addf %127, %129 : vector<16x16xf32>
    %c0_57 = arith.constant 0 : index
    %c1_58 = arith.constant 1 : index
    %c0_59 = arith.constant 0 : index
    %131 = vector.load %arg2[%c0_57, %c1_58, %c0_59] : memref<1x2x16xf32, #tpu.memory_space<vmem>>, vector<1x1x16xf32>
    %132 = vector.shape_cast %131 : vector<1x1x16xf32> to vector<1x16xf32>
    %c0_60 = arith.constant 0 : index
    %c0_61 = arith.constant 0 : index
    %133 = vector.load %arg22[%c0_60, %c0_61] : memref<16x1xf32, #tpu.memory_space<vmem>>, vector<16x1xf32>
    %134 = vector.extract_strided_slice %1 {offsets = [32, 0], sizes = [16, 1], strides = [1, 1]} : vector<128x1xf32> to vector<16x1xf32>
    %135 = vector.extract_strided_slice %1 {offsets = [48, 0], sizes = [16, 1], strides = [1, 1]} : vector<128x1xf32> to vector<16x1xf32>
    %136 = vector.broadcast %133 : vector<16x1xf32> to vector<16x16xf32>
    %137 = vector.broadcast %132 : vector<1x16xf32> to vector<16x16xf32>
    %138 = arith.mulf %136, %137 : vector<16x16xf32>
    %139 = arith.addf %130, %138 : vector<16x16xf32>
    %cst_62 = arith.constant 0.000000e+00 : f32
    %140 = vector.broadcast %cst_62 : f32 to vector<16x16xf32>
    %141 = arith.cmpf oge, %139, %140 : vector<16x16xf32>
    %cst_63 = arith.constant 2.000000e-01 : f32
    %142 = vector.broadcast %cst_63 : f32 to vector<16x16xf32>
    %143 = arith.mulf %142, %139 : vector<16x16xf32>
    %144 = arith.select %141, %139, %143 : vector<16x16xi1>, vector<16x16xf32>
    %cst_64 = arith.constant dense<0.000000e+00> : vector<16xf32>
    %145 = vector.multi_reduction <add>, %144, %cst_64 [1] : vector<16x16xf32> to vector<16xf32>
    %146 = vector.shape_cast %145 : vector<16xf32> to vector<16x1xf32>
    %cst_65 = arith.constant 1.600000e+01 : f32
    %147 = vector.broadcast %cst_65 : f32 to vector<16x1xf32>
    %148 = arith.divf %146, %147 : vector<16x1xf32>
    %149 = vector.broadcast %148 : vector<16x1xf32> to vector<16x16xf32>
    %150 = arith.subf %144, %149 : vector<16x16xf32>
    %151 = vector.broadcast %148 : vector<16x1xf32> to vector<16x16xf32>
    %152 = arith.subf %144, %151 : vector<16x16xf32>
    %153 = arith.mulf %150, %152 : vector<16x16xf32>
    %cst_66 = arith.constant dense<0.000000e+00> : vector<16xf32>
    %154 = vector.multi_reduction <add>, %153, %cst_66 [1] : vector<16x16xf32> to vector<16xf32>
    %155 = vector.shape_cast %154 : vector<16xf32> to vector<16x1xf32>
    %cst_67 = arith.constant 1.600000e+01 : f32
    %156 = vector.broadcast %cst_67 : f32 to vector<16x1xf32>
    %157 = arith.divf %155, %156 : vector<16x1xf32>
    %158 = vector.broadcast %148 : vector<16x1xf32> to vector<16x16xf32>
    %159 = arith.subf %144, %158 : vector<16x16xf32>
    %cst_68 = arith.constant 9.99999974E-6 : f32
    %160 = vector.broadcast %cst_68 : f32 to vector<16x1xf32>
    %161 = arith.addf %157, %160 : vector<16x1xf32>
    %162 = math.rsqrt %161 : vector<16x1xf32>
    %163 = vector.broadcast %162 : vector<16x1xf32> to vector<16x16xf32>
    %164 = arith.mulf %159, %163 : vector<16x16xf32>
    %cst_69 = arith.constant 1.000000e+00 : f32
    %165 = vector.broadcast %cst_69 : f32 to vector<16x1xf32>
    %166 = arith.addf %165, %134 : vector<16x1xf32>
    %167 = vector.broadcast %166 : vector<16x1xf32> to vector<16x16xf32>
    %168 = arith.mulf %164, %167 : vector<16x16xf32>
    %169 = vector.broadcast %135 : vector<16x1xf32> to vector<16x16xf32>
    %170 = arith.addf %168, %169 : vector<16x16xf32>
    %171 = arith.truncf %170 : vector<16x16xf32> to vector<16x16xbf16>
    %c0_70 = arith.constant 0 : index
    %c0_71 = arith.constant 0 : index
    %172 = vector.load %arg9[%c0_70, %c0_71] : memref<16x64xbf16, #tpu.memory_space<vmem>>, vector<16x64xbf16>
    %cst_72 = arith.constant dense<0.000000e+00> : vector<16x64xf32>
    %173 = tpu.matmul %171, %172, %cst_72 {dimension_numbers = #tpu.dot_dimension_numbers<[1], [0], [0], [1], [0, 0, 1, 1], [], []>} : vector<16x16xbf16>, vector<16x64xbf16>, vector<16x64xf32> -> vector<16x64xf32>
    %c0_73 = arith.constant 0 : index
    %c0_74 = arith.constant 0 : index
    %174 = vector.load %arg6[%c0_73, %c0_74] : memref<2x64xf32, #tpu.memory_space<vmem>>, vector<2x64xf32>
    %175 = vector.extract_strided_slice %174 {offsets = [0, 0], sizes = [1, 64], strides = [1, 1]} : vector<2x64xf32> to vector<1x64xf32>
    %176 = vector.extract_strided_slice %174 {offsets = [1, 0], sizes = [1, 64], strides = [1, 1]} : vector<2x64xf32> to vector<1x64xf32>
    %cst_75 = arith.constant 0.000000e+00 : f32
    %177 = vector.broadcast %cst_75 : f32 to vector<8x64xf32>
    %cst_76 = arith.constant 0.000000e+00 : f32
    %178 = vector.broadcast %cst_76 : f32 to vector<16x9xf32>
    %179 = vector.extract_strided_slice %173 {offsets = [0, 0], sizes = [16, 55], strides = [1, 1]} : vector<16x64xf32> to vector<16x55xf32>
    %180 = tpu.concatenate %178, %179 in 1 : vector<16x9xf32>, vector<16x55xf32> -> vector<16x64xf32>
    %181 = vector.broadcast %175 : vector<1x64xf32> to vector<16x64xf32>
    %182 = arith.mulf %180, %181 : vector<16x64xf32>
    %c0_77 = arith.constant 0 : index
    %c0_78 = arith.constant 0 : index
    %c0_79 = arith.constant 0 : index
    %183 = vector.load %arg12[%c0_77, %c0_78, %c0_79] : memref<9x8x16xbf16, #tpu.memory_space<vmem>>, vector<1x8x16xbf16>
    %184 = vector.shape_cast %183 : vector<1x8x16xbf16> to vector<8x16xbf16>
    %185 = arith.truncf %182 : vector<16x64xf32> to vector<16x64xbf16>
    %cst_80 = arith.constant dense<0.000000e+00> : vector<8x64xf32>
    %186 = tpu.matmul %184, %185, %cst_80 {dimension_numbers = #tpu.dot_dimension_numbers<[1], [0], [0], [1], [0, 0, 1, 1], [], []>} : vector<8x16xbf16>, vector<16x64xbf16>, vector<8x64xf32> -> vector<8x64xf32>
    %187 = arith.addf %177, %186 : vector<8x64xf32>
    %cst_81 = arith.constant 0.000000e+00 : f32
    %188 = vector.broadcast %cst_81 : f32 to vector<16x8xf32>
    %189 = vector.extract_strided_slice %173 {offsets = [0, 0], sizes = [16, 56], strides = [1, 1]} : vector<16x64xf32> to vector<16x56xf32>
    %190 = tpu.concatenate %188, %189 in 1 : vector<16x8xf32>, vector<16x56xf32> -> vector<16x64xf32>
    %c1_82 = arith.constant 1 : index
    %c0_83 = arith.constant 0 : index
    %c0_84 = arith.constant 0 : index
    %191 = vector.load %arg12[%c1_82, %c0_83, %c0_84] : memref<9x8x16xbf16, #tpu.memory_space<vmem>>, vector<1x8x16xbf16>
    %192 = vector.shape_cast %191 : vector<1x8x16xbf16> to vector<8x16xbf16>
    %193 = arith.truncf %190 : vector<16x64xf32> to vector<16x64xbf16>
    %cst_85 = arith.constant dense<0.000000e+00> : vector<8x64xf32>
    %194 = tpu.matmul %192, %193, %cst_85 {dimension_numbers = #tpu.dot_dimension_numbers<[1], [0], [0], [1], [0, 0, 1, 1], [], []>} : vector<8x16xbf16>, vector<16x64xbf16>, vector<8x64xf32> -> vector<8x64xf32>
    %195 = arith.addf %187, %194 : vector<8x64xf32>
    %cst_86 = arith.constant 0.000000e+00 : f32
    %196 = vector.broadcast %cst_86 : f32 to vector<16x7xf32>
    %197 = vector.extract_strided_slice %173 {offsets = [0, 0], sizes = [16, 57], strides = [1, 1]} : vector<16x64xf32> to vector<16x57xf32>
    %198 = tpu.concatenate %196, %197 in 1 : vector<16x7xf32>, vector<16x57xf32> -> vector<16x64xf32>
    %199 = vector.broadcast %176 : vector<1x64xf32> to vector<16x64xf32>
    %200 = arith.mulf %198, %199 : vector<16x64xf32>
    %c2_87 = arith.constant 2 : index
    %c0_88 = arith.constant 0 : index
    %c0_89 = arith.constant 0 : index
    %201 = vector.load %arg12[%c2_87, %c0_88, %c0_89] : memref<9x8x16xbf16, #tpu.memory_space<vmem>>, vector<1x8x16xbf16>
    %202 = vector.shape_cast %201 : vector<1x8x16xbf16> to vector<8x16xbf16>
    %203 = arith.truncf %200 : vector<16x64xf32> to vector<16x64xbf16>
    %cst_90 = arith.constant dense<0.000000e+00> : vector<8x64xf32>
    %204 = tpu.matmul %202, %203, %cst_90 {dimension_numbers = #tpu.dot_dimension_numbers<[1], [0], [0], [1], [0, 0, 1, 1], [], []>} : vector<8x16xbf16>, vector<16x64xbf16>, vector<8x64xf32> -> vector<8x64xf32>
    %205 = arith.addf %195, %204 : vector<8x64xf32>
    %cst_91 = arith.constant 0.000000e+00 : f32
    %206 = vector.broadcast %cst_91 : f32 to vector<16x1xf32>
    %207 = vector.extract_strided_slice %173 {offsets = [0, 0], sizes = [16, 63], strides = [1, 1]} : vector<16x64xf32> to vector<16x63xf32>
    %208 = tpu.concatenate %206, %207 in 1 : vector<16x1xf32>, vector<16x63xf32> -> vector<16x64xf32>
    %209 = vector.broadcast %175 : vector<1x64xf32> to vector<16x64xf32>
    %210 = arith.mulf %208, %209 : vector<16x64xf32>
    %c3_92 = arith.constant 3 : index
    %c0_93 = arith.constant 0 : index
    %c0_94 = arith.constant 0 : index
    %211 = vector.load %arg12[%c3_92, %c0_93, %c0_94] : memref<9x8x16xbf16, #tpu.memory_space<vmem>>, vector<1x8x16xbf16>
    %212 = vector.shape_cast %211 : vector<1x8x16xbf16> to vector<8x16xbf16>
    %213 = arith.truncf %210 : vector<16x64xf32> to vector<16x64xbf16>
    %cst_95 = arith.constant dense<0.000000e+00> : vector<8x64xf32>
    %214 = tpu.matmul %212, %213, %cst_95 {dimension_numbers = #tpu.dot_dimension_numbers<[1], [0], [0], [1], [0, 0, 1, 1], [], []>} : vector<8x16xbf16>, vector<16x64xbf16>, vector<8x64xf32> -> vector<8x64xf32>
    %215 = arith.addf %205, %214 : vector<8x64xf32>
    %c4_96 = arith.constant 4 : index
    %c0_97 = arith.constant 0 : index
    %c0_98 = arith.constant 0 : index
    %216 = vector.load %arg12[%c4_96, %c0_97, %c0_98] : memref<9x8x16xbf16, #tpu.memory_space<vmem>>, vector<1x8x16xbf16>
    %217 = vector.shape_cast %216 : vector<1x8x16xbf16> to vector<8x16xbf16>
    %218 = arith.truncf %173 : vector<16x64xf32> to vector<16x64xbf16>
    %cst_99 = arith.constant dense<0.000000e+00> : vector<8x64xf32>
    %219 = tpu.matmul %217, %218, %cst_99 {dimension_numbers = #tpu.dot_dimension_numbers<[1], [0], [0], [1], [0, 0, 1, 1], [], []>} : vector<8x16xbf16>, vector<16x64xbf16>, vector<8x64xf32> -> vector<8x64xf32>
    %220 = arith.addf %215, %219 : vector<8x64xf32>
    %221 = vector.extract_strided_slice %173 {offsets = [0, 1], sizes = [16, 63], strides = [1, 1]} : vector<16x64xf32> to vector<16x63xf32>
    %cst_100 = arith.constant 0.000000e+00 : f32
    %222 = vector.broadcast %cst_100 : f32 to vector<16x1xf32>
    %223 = tpu.concatenate %221, %222 in 1 : vector<16x63xf32>, vector<16x1xf32> -> vector<16x64xf32>
    %224 = vector.broadcast %176 : vector<1x64xf32> to vector<16x64xf32>
    %225 = arith.mulf %223, %224 : vector<16x64xf32>
    %c5_101 = arith.constant 5 : index
    %c0_102 = arith.constant 0 : index
    %c0_103 = arith.constant 0 : index
    %226 = vector.load %arg12[%c5_101, %c0_102, %c0_103] : memref<9x8x16xbf16, #tpu.memory_space<vmem>>, vector<1x8x16xbf16>
    %227 = vector.shape_cast %226 : vector<1x8x16xbf16> to vector<8x16xbf16>
    %228 = arith.truncf %225 : vector<16x64xf32> to vector<16x64xbf16>
    %cst_104 = arith.constant dense<0.000000e+00> : vector<8x64xf32>
    %229 = tpu.matmul %227, %228, %cst_104 {dimension_numbers = #tpu.dot_dimension_numbers<[1], [0], [0], [1], [0, 0, 1, 1], [], []>} : vector<8x16xbf16>, vector<16x64xbf16>, vector<8x64xf32> -> vector<8x64xf32>
    %230 = arith.addf %220, %229 : vector<8x64xf32>
    %231 = vector.extract_strided_slice %173 {offsets = [0, 7], sizes = [16, 57], strides = [1, 1]} : vector<16x64xf32> to vector<16x57xf32>
    %cst_105 = arith.constant 0.000000e+00 : f32
    %232 = vector.broadcast %cst_105 : f32 to vector<16x7xf32>
    %233 = tpu.concatenate %231, %232 in 1 : vector<16x57xf32>, vector<16x7xf32> -> vector<16x64xf32>
    %234 = vector.broadcast %175 : vector<1x64xf32> to vector<16x64xf32>
    %235 = arith.mulf %233, %234 : vector<16x64xf32>
    %c6_106 = arith.constant 6 : index
    %c0_107 = arith.constant 0 : index
    %c0_108 = arith.constant 0 : index
    %236 = vector.load %arg12[%c6_106, %c0_107, %c0_108] : memref<9x8x16xbf16, #tpu.memory_space<vmem>>, vector<1x8x16xbf16>
    %237 = vector.shape_cast %236 : vector<1x8x16xbf16> to vector<8x16xbf16>
    %238 = arith.truncf %235 : vector<16x64xf32> to vector<16x64xbf16>
    %cst_109 = arith.constant dense<0.000000e+00> : vector<8x64xf32>
    %239 = tpu.matmul %237, %238, %cst_109 {dimension_numbers = #tpu.dot_dimension_numbers<[1], [0], [0], [1], [0, 0, 1, 1], [], []>} : vector<8x16xbf16>, vector<16x64xbf16>, vector<8x64xf32> -> vector<8x64xf32>
    %240 = arith.addf %230, %239 : vector<8x64xf32>
    %241 = vector.extract_strided_slice %173 {offsets = [0, 8], sizes = [16, 56], strides = [1, 1]} : vector<16x64xf32> to vector<16x56xf32>
    %cst_110 = arith.constant 0.000000e+00 : f32
    %242 = vector.broadcast %cst_110 : f32 to vector<16x8xf32>
    %243 = tpu.concatenate %241, %242 in 1 : vector<16x56xf32>, vector<16x8xf32> -> vector<16x64xf32>
    %c7_111 = arith.constant 7 : index
    %c0_112 = arith.constant 0 : index
    %c0_113 = arith.constant 0 : index
    %244 = vector.load %arg12[%c7_111, %c0_112, %c0_113] : memref<9x8x16xbf16, #tpu.memory_space<vmem>>, vector<1x8x16xbf16>
    %245 = vector.shape_cast %244 : vector<1x8x16xbf16> to vector<8x16xbf16>
    %246 = arith.truncf %243 : vector<16x64xf32> to vector<16x64xbf16>
    %cst_114 = arith.constant dense<0.000000e+00> : vector<8x64xf32>
    %247 = tpu.matmul %245, %246, %cst_114 {dimension_numbers = #tpu.dot_dimension_numbers<[1], [0], [0], [1], [0, 0, 1, 1], [], []>} : vector<8x16xbf16>, vector<16x64xbf16>, vector<8x64xf32> -> vector<8x64xf32>
    %248 = arith.addf %240, %247 : vector<8x64xf32>
    %249 = vector.extract_strided_slice %173 {offsets = [0, 9], sizes = [16, 55], strides = [1, 1]} : vector<16x64xf32> to vector<16x55xf32>
    %cst_115 = arith.constant 0.000000e+00 : f32
    %250 = vector.broadcast %cst_115 : f32 to vector<16x9xf32>
    %251 = tpu.concatenate %249, %250 in 1 : vector<16x55xf32>, vector<16x9xf32> -> vector<16x64xf32>
    %252 = vector.broadcast %176 : vector<1x64xf32> to vector<16x64xf32>
    %253 = arith.mulf %251, %252 : vector<16x64xf32>
    %c8_116 = arith.constant 8 : index
    %c0_117 = arith.constant 0 : index
    %c0_118 = arith.constant 0 : index
    %254 = vector.load %arg12[%c8_116, %c0_117, %c0_118] : memref<9x8x16xbf16, #tpu.memory_space<vmem>>, vector<1x8x16xbf16>
    %255 = vector.shape_cast %254 : vector<1x8x16xbf16> to vector<8x16xbf16>
    %256 = arith.truncf %253 : vector<16x64xf32> to vector<16x64xbf16>
    %cst_119 = arith.constant dense<0.000000e+00> : vector<8x64xf32>
    %257 = tpu.matmul %255, %256, %cst_119 {dimension_numbers = #tpu.dot_dimension_numbers<[1], [0], [0], [1], [0, 0, 1, 1], [], []>} : vector<8x16xbf16>, vector<16x64xbf16>, vector<8x64xf32> -> vector<8x64xf32>
    %258 = arith.addf %248, %257 : vector<8x64xf32>
    %c0_120 = arith.constant 0 : index
    %c0_121 = arith.constant 0 : index
    %259 = vector.load %arg17[%c0_120, %c0_121] : memref<8x1xf32, #tpu.memory_space<vmem>>, vector<8x1xf32>
    %260 = vector.broadcast %259 : vector<8x1xf32> to vector<8x64xf32>
    %261 = arith.addf %258, %260 : vector<8x64xf32>
    %c0_122 = arith.constant 0 : index
    %c0_123 = arith.constant 0 : index
    %c0_124 = arith.constant 0 : index
    %262 = vector.load %arg3[%c0_122, %c0_123, %c0_124] : memref<1x2x64xf32, #tpu.memory_space<vmem>>, vector<1x1x64xf32>
    %263 = vector.shape_cast %262 : vector<1x1x64xf32> to vector<1x64xf32>
    %c0_125 = arith.constant 0 : index
    %c0_126 = arith.constant 0 : index
    %264 = vector.load %arg23[%c0_125, %c0_126] : memref<8x1xf32, #tpu.memory_space<vmem>>, vector<8x1xf32>
    %265 = vector.extract_strided_slice %1 {offsets = [64, 0], sizes = [8, 1], strides = [1, 1]} : vector<128x1xf32> to vector<8x1xf32>
    %266 = vector.extract_strided_slice %1 {offsets = [72, 0], sizes = [8, 1], strides = [1, 1]} : vector<128x1xf32> to vector<8x1xf32>
    %267 = vector.broadcast %264 : vector<8x1xf32> to vector<8x64xf32>
    %268 = vector.broadcast %263 : vector<1x64xf32> to vector<8x64xf32>
    %269 = arith.mulf %267, %268 : vector<8x64xf32>
    %270 = arith.addf %261, %269 : vector<8x64xf32>
    %cst_127 = arith.constant 0.000000e+00 : f32
    %271 = vector.broadcast %cst_127 : f32 to vector<8x64xf32>
    %272 = arith.cmpf oge, %270, %271 : vector<8x64xf32>
    %cst_128 = arith.constant 2.000000e-01 : f32
    %273 = vector.broadcast %cst_128 : f32 to vector<8x64xf32>
    %274 = arith.mulf %273, %270 : vector<8x64xf32>
    %275 = arith.select %272, %270, %274 : vector<8x64xi1>, vector<8x64xf32>
    %cst_129 = arith.constant dense<0.000000e+00> : vector<8xf32>
    %276 = vector.multi_reduction <add>, %275, %cst_129 [1] : vector<8x64xf32> to vector<8xf32>
    %277 = vector.shape_cast %276 : vector<8xf32> to vector<8x1xf32>
    %cst_130 = arith.constant 6.400000e+01 : f32
    %278 = vector.broadcast %cst_130 : f32 to vector<8x1xf32>
    %279 = arith.divf %277, %278 : vector<8x1xf32>
    %280 = vector.broadcast %279 : vector<8x1xf32> to vector<8x64xf32>
    %281 = arith.subf %275, %280 : vector<8x64xf32>
    %282 = vector.broadcast %279 : vector<8x1xf32> to vector<8x64xf32>
    %283 = arith.subf %275, %282 : vector<8x64xf32>
    %284 = arith.mulf %281, %283 : vector<8x64xf32>
    %cst_131 = arith.constant dense<0.000000e+00> : vector<8xf32>
    %285 = vector.multi_reduction <add>, %284, %cst_131 [1] : vector<8x64xf32> to vector<8xf32>
    %286 = vector.shape_cast %285 : vector<8xf32> to vector<8x1xf32>
    %cst_132 = arith.constant 6.400000e+01 : f32
    %287 = vector.broadcast %cst_132 : f32 to vector<8x1xf32>
    %288 = arith.divf %286, %287 : vector<8x1xf32>
    %289 = vector.broadcast %279 : vector<8x1xf32> to vector<8x64xf32>
    %290 = arith.subf %275, %289 : vector<8x64xf32>
    %cst_133 = arith.constant 9.99999974E-6 : f32
    %291 = vector.broadcast %cst_133 : f32 to vector<8x1xf32>
    %292 = arith.addf %288, %291 : vector<8x1xf32>
    %293 = math.rsqrt %292 : vector<8x1xf32>
    %294 = vector.broadcast %293 : vector<8x1xf32> to vector<8x64xf32>
    %295 = arith.mulf %290, %294 : vector<8x64xf32>
    %cst_134 = arith.constant 1.000000e+00 : f32
    %296 = vector.broadcast %cst_134 : f32 to vector<8x1xf32>
    %297 = arith.addf %296, %265 : vector<8x1xf32>
    %298 = vector.broadcast %297 : vector<8x1xf32> to vector<8x64xf32>
    %299 = arith.mulf %295, %298 : vector<8x64xf32>
    %300 = vector.broadcast %266 : vector<8x1xf32> to vector<8x64xf32>
    %301 = arith.addf %299, %300 : vector<8x64xf32>
    %c0_135 = arith.constant 0 : index
    %c0_136 = arith.constant 0 : index
    %302 = vector.load %arg6[%c0_135, %c0_136] : memref<2x64xf32, #tpu.memory_space<vmem>>, vector<2x64xf32>
    %303 = vector.extract_strided_slice %302 {offsets = [0, 0], sizes = [1, 64], strides = [1, 1]} : vector<2x64xf32> to vector<1x64xf32>
    %304 = vector.extract_strided_slice %302 {offsets = [1, 0], sizes = [1, 64], strides = [1, 1]} : vector<2x64xf32> to vector<1x64xf32>
    %cst_137 = arith.constant 0.000000e+00 : f32
    %305 = vector.broadcast %cst_137 : f32 to vector<8x64xf32>
    %cst_138 = arith.constant 0.000000e+00 : f32
    %306 = vector.broadcast %cst_138 : f32 to vector<8x9xf32>
    %307 = vector.extract_strided_slice %301 {offsets = [0, 0], sizes = [8, 55], strides = [1, 1]} : vector<8x64xf32> to vector<8x55xf32>
    %308 = tpu.concatenate %306, %307 in 1 : vector<8x9xf32>, vector<8x55xf32> -> vector<8x64xf32>
    %309 = vector.broadcast %303 : vector<1x64xf32> to vector<8x64xf32>
    %310 = arith.mulf %308, %309 : vector<8x64xf32>
    %c0_139 = arith.constant 0 : index
    %c0_140 = arith.constant 0 : index
    %c0_141 = arith.constant 0 : index
    %311 = vector.load %arg13[%c0_139, %c0_140, %c0_141] : memref<9x8x8xbf16, #tpu.memory_space<vmem>>, vector<1x8x8xbf16>
    %312 = vector.shape_cast %311 : vector<1x8x8xbf16> to vector<8x8xbf16>
    %313 = arith.truncf %310 : vector<8x64xf32> to vector<8x64xbf16>
    %cst_142 = arith.constant dense<0.000000e+00> : vector<8x64xf32>
    %314 = tpu.matmul %312, %313, %cst_142 {dimension_numbers = #tpu.dot_dimension_numbers<[1], [0], [0], [1], [0, 0, 1, 1], [], []>} : vector<8x8xbf16>, vector<8x64xbf16>, vector<8x64xf32> -> vector<8x64xf32>
    %315 = arith.addf %305, %314 : vector<8x64xf32>
    %cst_143 = arith.constant 0.000000e+00 : f32
    %316 = vector.broadcast %cst_143 : f32 to vector<8x8xf32>
    %317 = vector.extract_strided_slice %301 {offsets = [0, 0], sizes = [8, 56], strides = [1, 1]} : vector<8x64xf32> to vector<8x56xf32>
    %318 = tpu.concatenate %316, %317 in 1 : vector<8x8xf32>, vector<8x56xf32> -> vector<8x64xf32>
    %c1_144 = arith.constant 1 : index
    %c0_145 = arith.constant 0 : index
    %c0_146 = arith.constant 0 : index
    %319 = vector.load %arg13[%c1_144, %c0_145, %c0_146] : memref<9x8x8xbf16, #tpu.memory_space<vmem>>, vector<1x8x8xbf16>
    %320 = vector.shape_cast %319 : vector<1x8x8xbf16> to vector<8x8xbf16>
    %321 = arith.truncf %318 : vector<8x64xf32> to vector<8x64xbf16>
    %cst_147 = arith.constant dense<0.000000e+00> : vector<8x64xf32>
    %322 = tpu.matmul %320, %321, %cst_147 {dimension_numbers = #tpu.dot_dimension_numbers<[1], [0], [0], [1], [0, 0, 1, 1], [], []>} : vector<8x8xbf16>, vector<8x64xbf16>, vector<8x64xf32> -> vector<8x64xf32>
    %323 = arith.addf %315, %322 : vector<8x64xf32>
    %cst_148 = arith.constant 0.000000e+00 : f32
    %324 = vector.broadcast %cst_148 : f32 to vector<8x7xf32>
    %325 = vector.extract_strided_slice %301 {offsets = [0, 0], sizes = [8, 57], strides = [1, 1]} : vector<8x64xf32> to vector<8x57xf32>
    %326 = tpu.concatenate %324, %325 in 1 : vector<8x7xf32>, vector<8x57xf32> -> vector<8x64xf32>
    %327 = vector.broadcast %304 : vector<1x64xf32> to vector<8x64xf32>
    %328 = arith.mulf %326, %327 : vector<8x64xf32>
    %c2_149 = arith.constant 2 : index
    %c0_150 = arith.constant 0 : index
    %c0_151 = arith.constant 0 : index
    %329 = vector.load %arg13[%c2_149, %c0_150, %c0_151] : memref<9x8x8xbf16, #tpu.memory_space<vmem>>, vector<1x8x8xbf16>
    %330 = vector.shape_cast %329 : vector<1x8x8xbf16> to vector<8x8xbf16>
    %331 = arith.truncf %328 : vector<8x64xf32> to vector<8x64xbf16>
    %cst_152 = arith.constant dense<0.000000e+00> : vector<8x64xf32>
    %332 = tpu.matmul %330, %331, %cst_152 {dimension_numbers = #tpu.dot_dimension_numbers<[1], [0], [0], [1], [0, 0, 1, 1], [], []>} : vector<8x8xbf16>, vector<8x64xbf16>, vector<8x64xf32> -> vector<8x64xf32>
    %333 = arith.addf %323, %332 : vector<8x64xf32>
    %cst_153 = arith.constant 0.000000e+00 : f32
    %334 = vector.broadcast %cst_153 : f32 to vector<8x1xf32>
    %335 = vector.extract_strided_slice %301 {offsets = [0, 0], sizes = [8, 63], strides = [1, 1]} : vector<8x64xf32> to vector<8x63xf32>
    %336 = tpu.concatenate %334, %335 in 1 : vector<8x1xf32>, vector<8x63xf32> -> vector<8x64xf32>
    %337 = vector.broadcast %303 : vector<1x64xf32> to vector<8x64xf32>
    %338 = arith.mulf %336, %337 : vector<8x64xf32>
    %c3_154 = arith.constant 3 : index
    %c0_155 = arith.constant 0 : index
    %c0_156 = arith.constant 0 : index
    %339 = vector.load %arg13[%c3_154, %c0_155, %c0_156] : memref<9x8x8xbf16, #tpu.memory_space<vmem>>, vector<1x8x8xbf16>
    %340 = vector.shape_cast %339 : vector<1x8x8xbf16> to vector<8x8xbf16>
    %341 = arith.truncf %338 : vector<8x64xf32> to vector<8x64xbf16>
    %cst_157 = arith.constant dense<0.000000e+00> : vector<8x64xf32>
    %342 = tpu.matmul %340, %341, %cst_157 {dimension_numbers = #tpu.dot_dimension_numbers<[1], [0], [0], [1], [0, 0, 1, 1], [], []>} : vector<8x8xbf16>, vector<8x64xbf16>, vector<8x64xf32> -> vector<8x64xf32>
    %343 = arith.addf %333, %342 : vector<8x64xf32>
    %c4_158 = arith.constant 4 : index
    %c0_159 = arith.constant 0 : index
    %c0_160 = arith.constant 0 : index
    %344 = vector.load %arg13[%c4_158, %c0_159, %c0_160] : memref<9x8x8xbf16, #tpu.memory_space<vmem>>, vector<1x8x8xbf16>
    %345 = vector.shape_cast %344 : vector<1x8x8xbf16> to vector<8x8xbf16>
    %346 = arith.truncf %301 : vector<8x64xf32> to vector<8x64xbf16>
    %cst_161 = arith.constant dense<0.000000e+00> : vector<8x64xf32>
    %347 = tpu.matmul %345, %346, %cst_161 {dimension_numbers = #tpu.dot_dimension_numbers<[1], [0], [0], [1], [0, 0, 1, 1], [], []>} : vector<8x8xbf16>, vector<8x64xbf16>, vector<8x64xf32> -> vector<8x64xf32>
    %348 = arith.addf %343, %347 : vector<8x64xf32>
    %349 = vector.extract_strided_slice %301 {offsets = [0, 1], sizes = [8, 63], strides = [1, 1]} : vector<8x64xf32> to vector<8x63xf32>
    %cst_162 = arith.constant 0.000000e+00 : f32
    %350 = vector.broadcast %cst_162 : f32 to vector<8x1xf32>
    %351 = tpu.concatenate %349, %350 in 1 : vector<8x63xf32>, vector<8x1xf32> -> vector<8x64xf32>
    %352 = vector.broadcast %304 : vector<1x64xf32> to vector<8x64xf32>
    %353 = arith.mulf %351, %352 : vector<8x64xf32>
    %c5_163 = arith.constant 5 : index
    %c0_164 = arith.constant 0 : index
    %c0_165 = arith.constant 0 : index
    %354 = vector.load %arg13[%c5_163, %c0_164, %c0_165] : memref<9x8x8xbf16, #tpu.memory_space<vmem>>, vector<1x8x8xbf16>
    %355 = vector.shape_cast %354 : vector<1x8x8xbf16> to vector<8x8xbf16>
    %356 = arith.truncf %353 : vector<8x64xf32> to vector<8x64xbf16>
    %cst_166 = arith.constant dense<0.000000e+00> : vector<8x64xf32>
    %357 = tpu.matmul %355, %356, %cst_166 {dimension_numbers = #tpu.dot_dimension_numbers<[1], [0], [0], [1], [0, 0, 1, 1], [], []>} : vector<8x8xbf16>, vector<8x64xbf16>, vector<8x64xf32> -> vector<8x64xf32>
    %358 = arith.addf %348, %357 : vector<8x64xf32>
    %359 = vector.extract_strided_slice %301 {offsets = [0, 7], sizes = [8, 57], strides = [1, 1]} : vector<8x64xf32> to vector<8x57xf32>
    %cst_167 = arith.constant 0.000000e+00 : f32
    %360 = vector.broadcast %cst_167 : f32 to vector<8x7xf32>
    %361 = tpu.concatenate %359, %360 in 1 : vector<8x57xf32>, vector<8x7xf32> -> vector<8x64xf32>
    %362 = vector.broadcast %303 : vector<1x64xf32> to vector<8x64xf32>
    %363 = arith.mulf %361, %362 : vector<8x64xf32>
    %c6_168 = arith.constant 6 : index
    %c0_169 = arith.constant 0 : index
    %c0_170 = arith.constant 0 : index
    %364 = vector.load %arg13[%c6_168, %c0_169, %c0_170] : memref<9x8x8xbf16, #tpu.memory_space<vmem>>, vector<1x8x8xbf16>
    %365 = vector.shape_cast %364 : vector<1x8x8xbf16> to vector<8x8xbf16>
    %366 = arith.truncf %363 : vector<8x64xf32> to vector<8x64xbf16>
    %cst_171 = arith.constant dense<0.000000e+00> : vector<8x64xf32>
    %367 = tpu.matmul %365, %366, %cst_171 {dimension_numbers = #tpu.dot_dimension_numbers<[1], [0], [0], [1], [0, 0, 1, 1], [], []>} : vector<8x8xbf16>, vector<8x64xbf16>, vector<8x64xf32> -> vector<8x64xf32>
    %368 = arith.addf %358, %367 : vector<8x64xf32>
    %369 = vector.extract_strided_slice %301 {offsets = [0, 8], sizes = [8, 56], strides = [1, 1]} : vector<8x64xf32> to vector<8x56xf32>
    %cst_172 = arith.constant 0.000000e+00 : f32
    %370 = vector.broadcast %cst_172 : f32 to vector<8x8xf32>
    %371 = tpu.concatenate %369, %370 in 1 : vector<8x56xf32>, vector<8x8xf32> -> vector<8x64xf32>
    %c7_173 = arith.constant 7 : index
    %c0_174 = arith.constant 0 : index
    %c0_175 = arith.constant 0 : index
    %372 = vector.load %arg13[%c7_173, %c0_174, %c0_175] : memref<9x8x8xbf16, #tpu.memory_space<vmem>>, vector<1x8x8xbf16>
    %373 = vector.shape_cast %372 : vector<1x8x8xbf16> to vector<8x8xbf16>
    %374 = arith.truncf %371 : vector<8x64xf32> to vector<8x64xbf16>
    %cst_176 = arith.constant dense<0.000000e+00> : vector<8x64xf32>
    %375 = tpu.matmul %373, %374, %cst_176 {dimension_numbers = #tpu.dot_dimension_numbers<[1], [0], [0], [1], [0, 0, 1, 1], [], []>} : vector<8x8xbf16>, vector<8x64xbf16>, vector<8x64xf32> -> vector<8x64xf32>
    %376 = arith.addf %368, %375 : vector<8x64xf32>
    %377 = vector.extract_strided_slice %301 {offsets = [0, 9], sizes = [8, 55], strides = [1, 1]} : vector<8x64xf32> to vector<8x55xf32>
    %cst_177 = arith.constant 0.000000e+00 : f32
    %378 = vector.broadcast %cst_177 : f32 to vector<8x9xf32>
    %379 = tpu.concatenate %377, %378 in 1 : vector<8x55xf32>, vector<8x9xf32> -> vector<8x64xf32>
    %380 = vector.broadcast %304 : vector<1x64xf32> to vector<8x64xf32>
    %381 = arith.mulf %379, %380 : vector<8x64xf32>
    %c8_178 = arith.constant 8 : index
    %c0_179 = arith.constant 0 : index
    %c0_180 = arith.constant 0 : index
    %382 = vector.load %arg13[%c8_178, %c0_179, %c0_180] : memref<9x8x8xbf16, #tpu.memory_space<vmem>>, vector<1x8x8xbf16>
    %383 = vector.shape_cast %382 : vector<1x8x8xbf16> to vector<8x8xbf16>
    %384 = arith.truncf %381 : vector<8x64xf32> to vector<8x64xbf16>
    %cst_181 = arith.constant dense<0.000000e+00> : vector<8x64xf32>
    %385 = tpu.matmul %383, %384, %cst_181 {dimension_numbers = #tpu.dot_dimension_numbers<[1], [0], [0], [1], [0, 0, 1, 1], [], []>} : vector<8x8xbf16>, vector<8x64xbf16>, vector<8x64xf32> -> vector<8x64xf32>
    %386 = arith.addf %376, %385 : vector<8x64xf32>
    %c0_182 = arith.constant 0 : index
    %c0_183 = arith.constant 0 : index
    %387 = vector.load %arg18[%c0_182, %c0_183] : memref<8x1xf32, #tpu.memory_space<vmem>>, vector<8x1xf32>
    %388 = vector.broadcast %387 : vector<8x1xf32> to vector<8x64xf32>
    %389 = arith.addf %386, %388 : vector<8x64xf32>
    %c0_184 = arith.constant 0 : index
    %c1_185 = arith.constant 1 : index
    %c0_186 = arith.constant 0 : index
    %390 = vector.load %arg3[%c0_184, %c1_185, %c0_186] : memref<1x2x64xf32, #tpu.memory_space<vmem>>, vector<1x1x64xf32>
    %391 = vector.shape_cast %390 : vector<1x1x64xf32> to vector<1x64xf32>
    %c0_187 = arith.constant 0 : index
    %c0_188 = arith.constant 0 : index
    %392 = vector.load %arg24[%c0_187, %c0_188] : memref<8x1xf32, #tpu.memory_space<vmem>>, vector<8x1xf32>
    %393 = vector.extract_strided_slice %1 {offsets = [80, 0], sizes = [8, 1], strides = [1, 1]} : vector<128x1xf32> to vector<8x1xf32>
    %394 = vector.extract_strided_slice %1 {offsets = [88, 0], sizes = [8, 1], strides = [1, 1]} : vector<128x1xf32> to vector<8x1xf32>
    %395 = vector.broadcast %392 : vector<8x1xf32> to vector<8x64xf32>
    %396 = vector.broadcast %391 : vector<1x64xf32> to vector<8x64xf32>
    %397 = arith.mulf %395, %396 : vector<8x64xf32>
    %398 = arith.addf %389, %397 : vector<8x64xf32>
    %cst_189 = arith.constant 0.000000e+00 : f32
    %399 = vector.broadcast %cst_189 : f32 to vector<8x64xf32>
    %400 = arith.cmpf oge, %398, %399 : vector<8x64xf32>
    %cst_190 = arith.constant 2.000000e-01 : f32
    %401 = vector.broadcast %cst_190 : f32 to vector<8x64xf32>
    %402 = arith.mulf %401, %398 : vector<8x64xf32>
    %403 = arith.select %400, %398, %402 : vector<8x64xi1>, vector<8x64xf32>
    %cst_191 = arith.constant dense<0.000000e+00> : vector<8xf32>
    %404 = vector.multi_reduction <add>, %403, %cst_191 [1] : vector<8x64xf32> to vector<8xf32>
    %405 = vector.shape_cast %404 : vector<8xf32> to vector<8x1xf32>
    %cst_192 = arith.constant 6.400000e+01 : f32
    %406 = vector.broadcast %cst_192 : f32 to vector<8x1xf32>
    %407 = arith.divf %405, %406 : vector<8x1xf32>
    %408 = vector.broadcast %407 : vector<8x1xf32> to vector<8x64xf32>
    %409 = arith.subf %403, %408 : vector<8x64xf32>
    %410 = vector.broadcast %407 : vector<8x1xf32> to vector<8x64xf32>
    %411 = arith.subf %403, %410 : vector<8x64xf32>
    %412 = arith.mulf %409, %411 : vector<8x64xf32>
    %cst_193 = arith.constant dense<0.000000e+00> : vector<8xf32>
    %413 = vector.multi_reduction <add>, %412, %cst_193 [1] : vector<8x64xf32> to vector<8xf32>
    %414 = vector.shape_cast %413 : vector<8xf32> to vector<8x1xf32>
    %cst_194 = arith.constant 6.400000e+01 : f32
    %415 = vector.broadcast %cst_194 : f32 to vector<8x1xf32>
    %416 = arith.divf %414, %415 : vector<8x1xf32>
    %417 = vector.broadcast %407 : vector<8x1xf32> to vector<8x64xf32>
    %418 = arith.subf %403, %417 : vector<8x64xf32>
    %cst_195 = arith.constant 9.99999974E-6 : f32
    %419 = vector.broadcast %cst_195 : f32 to vector<8x1xf32>
    %420 = arith.addf %416, %419 : vector<8x1xf32>
    %421 = math.rsqrt %420 : vector<8x1xf32>
    %422 = vector.broadcast %421 : vector<8x1xf32> to vector<8x64xf32>
    %423 = arith.mulf %418, %422 : vector<8x64xf32>
    %cst_196 = arith.constant 1.000000e+00 : f32
    %424 = vector.broadcast %cst_196 : f32 to vector<8x1xf32>
    %425 = arith.addf %424, %393 : vector<8x1xf32>
    %426 = vector.broadcast %425 : vector<8x1xf32> to vector<8x64xf32>
    %427 = arith.mulf %423, %426 : vector<8x64xf32>
    %428 = vector.broadcast %394 : vector<8x1xf32> to vector<8x64xf32>
    %429 = arith.addf %427, %428 : vector<8x64xf32>
    %430 = arith.truncf %429 : vector<8x64xf32> to vector<8x64xbf16>
    %c0_197 = arith.constant 0 : index
    %c0_198 = arith.constant 0 : index
    %431 = vector.load %arg10[%c0_197, %c0_198] : memref<64x256xbf16, #tpu.memory_space<vmem>>, vector<64x256xbf16>
    %cst_199 = arith.constant dense<0.000000e+00> : vector<8x256xf32>
    %432 = tpu.matmul %430, %431, %cst_199 {dimension_numbers = #tpu.dot_dimension_numbers<[1], [0], [0], [1], [0, 0, 1, 1], [], []>} : vector<8x64xbf16>, vector<64x256xbf16>, vector<8x256xf32> -> vector<8x256xf32>
    %c0_200 = arith.constant 0 : index
    %c0_201 = arith.constant 0 : index
    %433 = vector.load %arg7[%c0_200, %c0_201] : memref<2x256xf32, #tpu.memory_space<vmem>>, vector<2x256xf32>
    %434 = vector.extract_strided_slice %433 {offsets = [0, 0], sizes = [1, 256], strides = [1, 1]} : vector<2x256xf32> to vector<1x256xf32>
    %435 = vector.extract_strided_slice %433 {offsets = [1, 0], sizes = [1, 256], strides = [1, 1]} : vector<2x256xf32> to vector<1x256xf32>
    %cst_202 = arith.constant 0.000000e+00 : f32
    %436 = vector.broadcast %cst_202 : f32 to vector<4x256xf32>
    %cst_203 = arith.constant 0.000000e+00 : f32
    %437 = vector.broadcast %cst_203 : f32 to vector<8x17xf32>
    %438 = vector.extract_strided_slice %432 {offsets = [0, 0], sizes = [8, 239], strides = [1, 1]} : vector<8x256xf32> to vector<8x239xf32>
    %439 = tpu.concatenate %437, %438 in 1 : vector<8x17xf32>, vector<8x239xf32> -> vector<8x256xf32>
    %440 = vector.broadcast %434 : vector<1x256xf32> to vector<8x256xf32>
    %441 = arith.mulf %439, %440 : vector<8x256xf32>
    %c0_204 = arith.constant 0 : index
    %c0_205 = arith.constant 0 : index
    %c0_206 = arith.constant 0 : index
    %442 = vector.load %arg14[%c0_204, %c0_205, %c0_206] : memref<9x4x8xbf16, #tpu.memory_space<vmem>>, vector<1x4x8xbf16>
    %443 = vector.shape_cast %442 : vector<1x4x8xbf16> to vector<4x8xbf16>
    %444 = arith.truncf %441 : vector<8x256xf32> to vector<8x256xbf16>
    %cst_207 = arith.constant dense<0.000000e+00> : vector<4x256xf32>
    %445 = tpu.matmul %443, %444, %cst_207 {dimension_numbers = #tpu.dot_dimension_numbers<[1], [0], [0], [1], [0, 0, 1, 1], [], []>} : vector<4x8xbf16>, vector<8x256xbf16>, vector<4x256xf32> -> vector<4x256xf32>
    %446 = arith.addf %436, %445 : vector<4x256xf32>
    %cst_208 = arith.constant 0.000000e+00 : f32
    %447 = vector.broadcast %cst_208 : f32 to vector<8x16xf32>
    %448 = vector.extract_strided_slice %432 {offsets = [0, 0], sizes = [8, 240], strides = [1, 1]} : vector<8x256xf32> to vector<8x240xf32>
    %449 = tpu.concatenate %447, %448 in 1 : vector<8x16xf32>, vector<8x240xf32> -> vector<8x256xf32>
    %c1_209 = arith.constant 1 : index
    %c0_210 = arith.constant 0 : index
    %c0_211 = arith.constant 0 : index
    %450 = vector.load %arg14[%c1_209, %c0_210, %c0_211] : memref<9x4x8xbf16, #tpu.memory_space<vmem>>, vector<1x4x8xbf16>
    %451 = vector.shape_cast %450 : vector<1x4x8xbf16> to vector<4x8xbf16>
    %452 = arith.truncf %449 : vector<8x256xf32> to vector<8x256xbf16>
    %cst_212 = arith.constant dense<0.000000e+00> : vector<4x256xf32>
    %453 = tpu.matmul %451, %452, %cst_212 {dimension_numbers = #tpu.dot_dimension_numbers<[1], [0], [0], [1], [0, 0, 1, 1], [], []>} : vector<4x8xbf16>, vector<8x256xbf16>, vector<4x256xf32> -> vector<4x256xf32>
    %454 = arith.addf %446, %453 : vector<4x256xf32>
    %cst_213 = arith.constant 0.000000e+00 : f32
    %455 = vector.broadcast %cst_213 : f32 to vector<8x15xf32>
    %456 = vector.extract_strided_slice %432 {offsets = [0, 0], sizes = [8, 241], strides = [1, 1]} : vector<8x256xf32> to vector<8x241xf32>
    %457 = tpu.concatenate %455, %456 in 1 : vector<8x15xf32>, vector<8x241xf32> -> vector<8x256xf32>
    %458 = vector.broadcast %435 : vector<1x256xf32> to vector<8x256xf32>
    %459 = arith.mulf %457, %458 : vector<8x256xf32>
    %c2_214 = arith.constant 2 : index
    %c0_215 = arith.constant 0 : index
    %c0_216 = arith.constant 0 : index
    %460 = vector.load %arg14[%c2_214, %c0_215, %c0_216] : memref<9x4x8xbf16, #tpu.memory_space<vmem>>, vector<1x4x8xbf16>
    %461 = vector.shape_cast %460 : vector<1x4x8xbf16> to vector<4x8xbf16>
    %462 = arith.truncf %459 : vector<8x256xf32> to vector<8x256xbf16>
    %cst_217 = arith.constant dense<0.000000e+00> : vector<4x256xf32>
    %463 = tpu.matmul %461, %462, %cst_217 {dimension_numbers = #tpu.dot_dimension_numbers<[1], [0], [0], [1], [0, 0, 1, 1], [], []>} : vector<4x8xbf16>, vector<8x256xbf16>, vector<4x256xf32> -> vector<4x256xf32>
    %464 = arith.addf %454, %463 : vector<4x256xf32>
    %cst_218 = arith.constant 0.000000e+00 : f32
    %465 = vector.broadcast %cst_218 : f32 to vector<8x1xf32>
    %466 = vector.extract_strided_slice %432 {offsets = [0, 0], sizes = [8, 255], strides = [1, 1]} : vector<8x256xf32> to vector<8x255xf32>
    %467 = tpu.concatenate %465, %466 in 1 : vector<8x1xf32>, vector<8x255xf32> -> vector<8x256xf32>
    %468 = vector.broadcast %434 : vector<1x256xf32> to vector<8x256xf32>
    %469 = arith.mulf %467, %468 : vector<8x256xf32>
    %c3_219 = arith.constant 3 : index
    %c0_220 = arith.constant 0 : index
    %c0_221 = arith.constant 0 : index
    %470 = vector.load %arg14[%c3_219, %c0_220, %c0_221] : memref<9x4x8xbf16, #tpu.memory_space<vmem>>, vector<1x4x8xbf16>
    %471 = vector.shape_cast %470 : vector<1x4x8xbf16> to vector<4x8xbf16>
    %472 = arith.truncf %469 : vector<8x256xf32> to vector<8x256xbf16>
    %cst_222 = arith.constant dense<0.000000e+00> : vector<4x256xf32>
    %473 = tpu.matmul %471, %472, %cst_222 {dimension_numbers = #tpu.dot_dimension_numbers<[1], [0], [0], [1], [0, 0, 1, 1], [], []>} : vector<4x8xbf16>, vector<8x256xbf16>, vector<4x256xf32> -> vector<4x256xf32>
    %474 = arith.addf %464, %473 : vector<4x256xf32>
    %c4_223 = arith.constant 4 : index
    %c0_224 = arith.constant 0 : index
    %c0_225 = arith.constant 0 : index
    %475 = vector.load %arg14[%c4_223, %c0_224, %c0_225] : memref<9x4x8xbf16, #tpu.memory_space<vmem>>, vector<1x4x8xbf16>
    %476 = vector.shape_cast %475 : vector<1x4x8xbf16> to vector<4x8xbf16>
    %477 = arith.truncf %432 : vector<8x256xf32> to vector<8x256xbf16>
    %cst_226 = arith.constant dense<0.000000e+00> : vector<4x256xf32>
    %478 = tpu.matmul %476, %477, %cst_226 {dimension_numbers = #tpu.dot_dimension_numbers<[1], [0], [0], [1], [0, 0, 1, 1], [], []>} : vector<4x8xbf16>, vector<8x256xbf16>, vector<4x256xf32> -> vector<4x256xf32>
    %479 = arith.addf %474, %478 : vector<4x256xf32>
    %480 = vector.extract_strided_slice %432 {offsets = [0, 1], sizes = [8, 255], strides = [1, 1]} : vector<8x256xf32> to vector<8x255xf32>
    %cst_227 = arith.constant 0.000000e+00 : f32
    %481 = vector.broadcast %cst_227 : f32 to vector<8x1xf32>
    %482 = tpu.concatenate %480, %481 in 1 : vector<8x255xf32>, vector<8x1xf32> -> vector<8x256xf32>
    %483 = vector.broadcast %435 : vector<1x256xf32> to vector<8x256xf32>
    %484 = arith.mulf %482, %483 : vector<8x256xf32>
    %c5_228 = arith.constant 5 : index
    %c0_229 = arith.constant 0 : index
    %c0_230 = arith.constant 0 : index
    %485 = vector.load %arg14[%c5_228, %c0_229, %c0_230] : memref<9x4x8xbf16, #tpu.memory_space<vmem>>, vector<1x4x8xbf16>
    %486 = vector.shape_cast %485 : vector<1x4x8xbf16> to vector<4x8xbf16>
    %487 = arith.truncf %484 : vector<8x256xf32> to vector<8x256xbf16>
    %cst_231 = arith.constant dense<0.000000e+00> : vector<4x256xf32>
    %488 = tpu.matmul %486, %487, %cst_231 {dimension_numbers = #tpu.dot_dimension_numbers<[1], [0], [0], [1], [0, 0, 1, 1], [], []>} : vector<4x8xbf16>, vector<8x256xbf16>, vector<4x256xf32> -> vector<4x256xf32>
    %489 = arith.addf %479, %488 : vector<4x256xf32>
    %490 = vector.extract_strided_slice %432 {offsets = [0, 15], sizes = [8, 241], strides = [1, 1]} : vector<8x256xf32> to vector<8x241xf32>
    %cst_232 = arith.constant 0.000000e+00 : f32
    %491 = vector.broadcast %cst_232 : f32 to vector<8x15xf32>
    %492 = tpu.concatenate %490, %491 in 1 : vector<8x241xf32>, vector<8x15xf32> -> vector<8x256xf32>
    %493 = vector.broadcast %434 : vector<1x256xf32> to vector<8x256xf32>
    %494 = arith.mulf %492, %493 : vector<8x256xf32>
    %c6_233 = arith.constant 6 : index
    %c0_234 = arith.constant 0 : index
    %c0_235 = arith.constant 0 : index
    %495 = vector.load %arg14[%c6_233, %c0_234, %c0_235] : memref<9x4x8xbf16, #tpu.memory_space<vmem>>, vector<1x4x8xbf16>
    %496 = vector.shape_cast %495 : vector<1x4x8xbf16> to vector<4x8xbf16>
    %497 = arith.truncf %494 : vector<8x256xf32> to vector<8x256xbf16>
    %cst_236 = arith.constant dense<0.000000e+00> : vector<4x256xf32>
    %498 = tpu.matmul %496, %497, %cst_236 {dimension_numbers = #tpu.dot_dimension_numbers<[1], [0], [0], [1], [0, 0, 1, 1], [], []>} : vector<4x8xbf16>, vector<8x256xbf16>, vector<4x256xf32> -> vector<4x256xf32>
    %499 = arith.addf %489, %498 : vector<4x256xf32>
    %500 = vector.extract_strided_slice %432 {offsets = [0, 16], sizes = [8, 240], strides = [1, 1]} : vector<8x256xf32> to vector<8x240xf32>
    %cst_237 = arith.constant 0.000000e+00 : f32
    %501 = vector.broadcast %cst_237 : f32 to vector<8x16xf32>
    %502 = tpu.concatenate %500, %501 in 1 : vector<8x240xf32>, vector<8x16xf32> -> vector<8x256xf32>
    %c7_238 = arith.constant 7 : index
    %c0_239 = arith.constant 0 : index
    %c0_240 = arith.constant 0 : index
    %503 = vector.load %arg14[%c7_238, %c0_239, %c0_240] : memref<9x4x8xbf16, #tpu.memory_space<vmem>>, vector<1x4x8xbf16>
    %504 = vector.shape_cast %503 : vector<1x4x8xbf16> to vector<4x8xbf16>
    %505 = arith.truncf %502 : vector<8x256xf32> to vector<8x256xbf16>
    %cst_241 = arith.constant dense<0.000000e+00> : vector<4x256xf32>
    %506 = tpu.matmul %504, %505, %cst_241 {dimension_numbers = #tpu.dot_dimension_numbers<[1], [0], [0], [1], [0, 0, 1, 1], [], []>} : vector<4x8xbf16>, vector<8x256xbf16>, vector<4x256xf32> -> vector<4x256xf32>
    %507 = arith.addf %499, %506 : vector<4x256xf32>
    %508 = vector.extract_strided_slice %432 {offsets = [0, 17], sizes = [8, 239], strides = [1, 1]} : vector<8x256xf32> to vector<8x239xf32>
    %cst_242 = arith.constant 0.000000e+00 : f32
    %509 = vector.broadcast %cst_242 : f32 to vector<8x17xf32>
    %510 = tpu.concatenate %508, %509 in 1 : vector<8x239xf32>, vector<8x17xf32> -> vector<8x256xf32>
    %511 = vector.broadcast %435 : vector<1x256xf32> to vector<8x256xf32>
    %512 = arith.mulf %510, %511 : vector<8x256xf32>
    %c8_243 = arith.constant 8 : index
    %c0_244 = arith.constant 0 : index
    %c0_245 = arith.constant 0 : index
    %513 = vector.load %arg14[%c8_243, %c0_244, %c0_245] : memref<9x4x8xbf16, #tpu.memory_space<vmem>>, vector<1x4x8xbf16>
    %514 = vector.shape_cast %513 : vector<1x4x8xbf16> to vector<4x8xbf16>
    %515 = arith.truncf %512 : vector<8x256xf32> to vector<8x256xbf16>
    %cst_246 = arith.constant dense<0.000000e+00> : vector<4x256xf32>
    %516 = tpu.matmul %514, %515, %cst_246 {dimension_numbers = #tpu.dot_dimension_numbers<[1], [0], [0], [1], [0, 0, 1, 1], [], []>} : vector<4x8xbf16>, vector<8x256xbf16>, vector<4x256xf32> -> vector<4x256xf32>
    %517 = arith.addf %507, %516 : vector<4x256xf32>
    %c0_247 = arith.constant 0 : index
    %c0_248 = arith.constant 0 : index
    %518 = vector.load %arg19[%c0_247, %c0_248] : memref<4x1xf32, #tpu.memory_space<vmem>>, vector<4x1xf32>
    %519 = vector.broadcast %518 : vector<4x1xf32> to vector<4x256xf32>
    %520 = arith.addf %517, %519 : vector<4x256xf32>
    %c0_249 = arith.constant 0 : index
    %c0_250 = arith.constant 0 : index
    %c0_251 = arith.constant 0 : index
    %521 = vector.load %arg4[%c0_249, %c0_250, %c0_251] : memref<1x2x256xf32, #tpu.memory_space<vmem>>, vector<1x1x256xf32>
    %522 = vector.shape_cast %521 : vector<1x1x256xf32> to vector<1x256xf32>
    %c0_252 = arith.constant 0 : index
    %c0_253 = arith.constant 0 : index
    %523 = vector.load %arg25[%c0_252, %c0_253] : memref<4x1xf32, #tpu.memory_space<vmem>>, vector<4x1xf32>
    %524 = vector.extract_strided_slice %1 {offsets = [96, 0], sizes = [4, 1], strides = [1, 1]} : vector<128x1xf32> to vector<4x1xf32>
    %525 = vector.extract_strided_slice %1 {offsets = [104, 0], sizes = [4, 1], strides = [1, 1]} : vector<128x1xf32> to vector<4x1xf32>
    %526 = vector.broadcast %523 : vector<4x1xf32> to vector<4x256xf32>
    %527 = vector.broadcast %522 : vector<1x256xf32> to vector<4x256xf32>
    %528 = arith.mulf %526, %527 : vector<4x256xf32>
    %529 = arith.addf %520, %528 : vector<4x256xf32>
    %cst_254 = arith.constant 0.000000e+00 : f32
    %530 = vector.broadcast %cst_254 : f32 to vector<4x256xf32>
    %531 = arith.cmpf oge, %529, %530 : vector<4x256xf32>
    %cst_255 = arith.constant 2.000000e-01 : f32
    %532 = vector.broadcast %cst_255 : f32 to vector<4x256xf32>
    %533 = arith.mulf %532, %529 : vector<4x256xf32>
    %534 = arith.select %531, %529, %533 : vector<4x256xi1>, vector<4x256xf32>
    %cst_256 = arith.constant dense<0.000000e+00> : vector<4xf32>
    %535 = vector.multi_reduction <add>, %534, %cst_256 [1] : vector<4x256xf32> to vector<4xf32>
    %536 = vector.shape_cast %535 : vector<4xf32> to vector<4x1xf32>
    %cst_257 = arith.constant 2.560000e+02 : f32
    %537 = vector.broadcast %cst_257 : f32 to vector<4x1xf32>
    %538 = arith.divf %536, %537 : vector<4x1xf32>
    %539 = vector.broadcast %538 : vector<4x1xf32> to vector<4x256xf32>
    %540 = arith.subf %534, %539 : vector<4x256xf32>
    %541 = vector.broadcast %538 : vector<4x1xf32> to vector<4x256xf32>
    %542 = arith.subf %534, %541 : vector<4x256xf32>
    %543 = arith.mulf %540, %542 : vector<4x256xf32>
    %cst_258 = arith.constant dense<0.000000e+00> : vector<4xf32>
    %544 = vector.multi_reduction <add>, %543, %cst_258 [1] : vector<4x256xf32> to vector<4xf32>
    %545 = vector.shape_cast %544 : vector<4xf32> to vector<4x1xf32>
    %cst_259 = arith.constant 2.560000e+02 : f32
    %546 = vector.broadcast %cst_259 : f32 to vector<4x1xf32>
    %547 = arith.divf %545, %546 : vector<4x1xf32>
    %548 = vector.broadcast %538 : vector<4x1xf32> to vector<4x256xf32>
    %549 = arith.subf %534, %548 : vector<4x256xf32>
    %cst_260 = arith.constant 9.99999974E-6 : f32
    %550 = vector.broadcast %cst_260 : f32 to vector<4x1xf32>
    %551 = arith.addf %547, %550 : vector<4x1xf32>
    %552 = math.rsqrt %551 : vector<4x1xf32>
    %553 = vector.broadcast %552 : vector<4x1xf32> to vector<4x256xf32>
    %554 = arith.mulf %549, %553 : vector<4x256xf32>
    %cst_261 = arith.constant 1.000000e+00 : f32
    %555 = vector.broadcast %cst_261 : f32 to vector<4x1xf32>
    %556 = arith.addf %555, %524 : vector<4x1xf32>
    %557 = vector.broadcast %556 : vector<4x1xf32> to vector<4x256xf32>
    %558 = arith.mulf %554, %557 : vector<4x256xf32>
    %559 = vector.broadcast %525 : vector<4x1xf32> to vector<4x256xf32>
    %560 = arith.addf %558, %559 : vector<4x256xf32>
    %c0_262 = arith.constant 0 : index
    %c0_263 = arith.constant 0 : index
    %561 = vector.load %arg7[%c0_262, %c0_263] : memref<2x256xf32, #tpu.memory_space<vmem>>, vector<2x256xf32>
    %562 = vector.extract_strided_slice %561 {offsets = [0, 0], sizes = [1, 256], strides = [1, 1]} : vector<2x256xf32> to vector<1x256xf32>
    %563 = vector.extract_strided_slice %561 {offsets = [1, 0], sizes = [1, 256], strides = [1, 1]} : vector<2x256xf32> to vector<1x256xf32>
    %cst_264 = arith.constant 0.000000e+00 : f32
    %564 = vector.broadcast %cst_264 : f32 to vector<4x256xf32>
    %cst_265 = arith.constant 0.000000e+00 : f32
    %565 = vector.broadcast %cst_265 : f32 to vector<4x17xf32>
    %566 = vector.extract_strided_slice %560 {offsets = [0, 0], sizes = [4, 239], strides = [1, 1]} : vector<4x256xf32> to vector<4x239xf32>
    %567 = tpu.concatenate %565, %566 in 1 : vector<4x17xf32>, vector<4x239xf32> -> vector<4x256xf32>
    %568 = vector.broadcast %562 : vector<1x256xf32> to vector<4x256xf32>
    %569 = arith.mulf %567, %568 : vector<4x256xf32>
    %c0_266 = arith.constant 0 : index
    %c0_267 = arith.constant 0 : index
    %c0_268 = arith.constant 0 : index
    %570 = vector.load %arg15[%c0_266, %c0_267, %c0_268] : memref<9x4x4xbf16, #tpu.memory_space<vmem>>, vector<1x4x4xbf16>
    %571 = vector.shape_cast %570 : vector<1x4x4xbf16> to vector<4x4xbf16>
    %572 = arith.truncf %569 : vector<4x256xf32> to vector<4x256xbf16>
    %cst_269 = arith.constant dense<0.000000e+00> : vector<4x256xf32>
    %573 = tpu.matmul %571, %572, %cst_269 {dimension_numbers = #tpu.dot_dimension_numbers<[1], [0], [0], [1], [0, 0, 1, 1], [], []>} : vector<4x4xbf16>, vector<4x256xbf16>, vector<4x256xf32> -> vector<4x256xf32>
    %574 = arith.addf %564, %573 : vector<4x256xf32>
    %cst_270 = arith.constant 0.000000e+00 : f32
    %575 = vector.broadcast %cst_270 : f32 to vector<4x16xf32>
    %576 = vector.extract_strided_slice %560 {offsets = [0, 0], sizes = [4, 240], strides = [1, 1]} : vector<4x256xf32> to vector<4x240xf32>
    %577 = tpu.concatenate %575, %576 in 1 : vector<4x16xf32>, vector<4x240xf32> -> vector<4x256xf32>
    %c1_271 = arith.constant 1 : index
    %c0_272 = arith.constant 0 : index
    %c0_273 = arith.constant 0 : index
    %578 = vector.load %arg15[%c1_271, %c0_272, %c0_273] : memref<9x4x4xbf16, #tpu.memory_space<vmem>>, vector<1x4x4xbf16>
    %579 = vector.shape_cast %578 : vector<1x4x4xbf16> to vector<4x4xbf16>
    %580 = arith.truncf %577 : vector<4x256xf32> to vector<4x256xbf16>
    %cst_274 = arith.constant dense<0.000000e+00> : vector<4x256xf32>
    %581 = tpu.matmul %579, %580, %cst_274 {dimension_numbers = #tpu.dot_dimension_numbers<[1], [0], [0], [1], [0, 0, 1, 1], [], []>} : vector<4x4xbf16>, vector<4x256xbf16>, vector<4x256xf32> -> vector<4x256xf32>
    %582 = arith.addf %574, %581 : vector<4x256xf32>
    %cst_275 = arith.constant 0.000000e+00 : f32
    %583 = vector.broadcast %cst_275 : f32 to vector<4x15xf32>
    %584 = vector.extract_strided_slice %560 {offsets = [0, 0], sizes = [4, 241], strides = [1, 1]} : vector<4x256xf32> to vector<4x241xf32>
    %585 = tpu.concatenate %583, %584 in 1 : vector<4x15xf32>, vector<4x241xf32> -> vector<4x256xf32>
    %586 = vector.broadcast %563 : vector<1x256xf32> to vector<4x256xf32>
    %587 = arith.mulf %585, %586 : vector<4x256xf32>
    %c2_276 = arith.constant 2 : index
    %c0_277 = arith.constant 0 : index
    %c0_278 = arith.constant 0 : index
    %588 = vector.load %arg15[%c2_276, %c0_277, %c0_278] : memref<9x4x4xbf16, #tpu.memory_space<vmem>>, vector<1x4x4xbf16>
    %589 = vector.shape_cast %588 : vector<1x4x4xbf16> to vector<4x4xbf16>
    %590 = arith.truncf %587 : vector<4x256xf32> to vector<4x256xbf16>
    %cst_279 = arith.constant dense<0.000000e+00> : vector<4x256xf32>
    %591 = tpu.matmul %589, %590, %cst_279 {dimension_numbers = #tpu.dot_dimension_numbers<[1], [0], [0], [1], [0, 0, 1, 1], [], []>} : vector<4x4xbf16>, vector<4x256xbf16>, vector<4x256xf32> -> vector<4x256xf32>
    %592 = arith.addf %582, %591 : vector<4x256xf32>
    %cst_280 = arith.constant 0.000000e+00 : f32
    %593 = vector.broadcast %cst_280 : f32 to vector<4x1xf32>
    %594 = vector.extract_strided_slice %560 {offsets = [0, 0], sizes = [4, 255], strides = [1, 1]} : vector<4x256xf32> to vector<4x255xf32>
    %595 = tpu.concatenate %593, %594 in 1 : vector<4x1xf32>, vector<4x255xf32> -> vector<4x256xf32>
    %596 = vector.broadcast %562 : vector<1x256xf32> to vector<4x256xf32>
    %597 = arith.mulf %595, %596 : vector<4x256xf32>
    %c3_281 = arith.constant 3 : index
    %c0_282 = arith.constant 0 : index
    %c0_283 = arith.constant 0 : index
    %598 = vector.load %arg15[%c3_281, %c0_282, %c0_283] : memref<9x4x4xbf16, #tpu.memory_space<vmem>>, vector<1x4x4xbf16>
    %599 = vector.shape_cast %598 : vector<1x4x4xbf16> to vector<4x4xbf16>
    %600 = arith.truncf %597 : vector<4x256xf32> to vector<4x256xbf16>
    %cst_284 = arith.constant dense<0.000000e+00> : vector<4x256xf32>
    %601 = tpu.matmul %599, %600, %cst_284 {dimension_numbers = #tpu.dot_dimension_numbers<[1], [0], [0], [1], [0, 0, 1, 1], [], []>} : vector<4x4xbf16>, vector<4x256xbf16>, vector<4x256xf32> -> vector<4x256xf32>
    %602 = arith.addf %592, %601 : vector<4x256xf32>
    %c4_285 = arith.constant 4 : index
    %c0_286 = arith.constant 0 : index
    %c0_287 = arith.constant 0 : index
    %603 = vector.load %arg15[%c4_285, %c0_286, %c0_287] : memref<9x4x4xbf16, #tpu.memory_space<vmem>>, vector<1x4x4xbf16>
    %604 = vector.shape_cast %603 : vector<1x4x4xbf16> to vector<4x4xbf16>
    %605 = arith.truncf %560 : vector<4x256xf32> to vector<4x256xbf16>
    %cst_288 = arith.constant dense<0.000000e+00> : vector<4x256xf32>
    %606 = tpu.matmul %604, %605, %cst_288 {dimension_numbers = #tpu.dot_dimension_numbers<[1], [0], [0], [1], [0, 0, 1, 1], [], []>} : vector<4x4xbf16>, vector<4x256xbf16>, vector<4x256xf32> -> vector<4x256xf32>
    %607 = arith.addf %602, %606 : vector<4x256xf32>
    %608 = vector.extract_strided_slice %560 {offsets = [0, 1], sizes = [4, 255], strides = [1, 1]} : vector<4x256xf32> to vector<4x255xf32>
    %cst_289 = arith.constant 0.000000e+00 : f32
    %609 = vector.broadcast %cst_289 : f32 to vector<4x1xf32>
    %610 = tpu.concatenate %608, %609 in 1 : vector<4x255xf32>, vector<4x1xf32> -> vector<4x256xf32>
    %611 = vector.broadcast %563 : vector<1x256xf32> to vector<4x256xf32>
    %612 = arith.mulf %610, %611 : vector<4x256xf32>
    %c5_290 = arith.constant 5 : index
    %c0_291 = arith.constant 0 : index
    %c0_292 = arith.constant 0 : index
    %613 = vector.load %arg15[%c5_290, %c0_291, %c0_292] : memref<9x4x4xbf16, #tpu.memory_space<vmem>>, vector<1x4x4xbf16>
    %614 = vector.shape_cast %613 : vector<1x4x4xbf16> to vector<4x4xbf16>
    %615 = arith.truncf %612 : vector<4x256xf32> to vector<4x256xbf16>
    %cst_293 = arith.constant dense<0.000000e+00> : vector<4x256xf32>
    %616 = tpu.matmul %614, %615, %cst_293 {dimension_numbers = #tpu.dot_dimension_numbers<[1], [0], [0], [1], [0, 0, 1, 1], [], []>} : vector<4x4xbf16>, vector<4x256xbf16>, vector<4x256xf32> -> vector<4x256xf32>
    %617 = arith.addf %607, %616 : vector<4x256xf32>
    %618 = vector.extract_strided_slice %560 {offsets = [0, 15], sizes = [4, 241], strides = [1, 1]} : vector<4x256xf32> to vector<4x241xf32>
    %cst_294 = arith.constant 0.000000e+00 : f32
    %619 = vector.broadcast %cst_294 : f32 to vector<4x15xf32>
    %620 = tpu.concatenate %618, %619 in 1 : vector<4x241xf32>, vector<4x15xf32> -> vector<4x256xf32>
    %621 = vector.broadcast %562 : vector<1x256xf32> to vector<4x256xf32>
    %622 = arith.mulf %620, %621 : vector<4x256xf32>
    %c6_295 = arith.constant 6 : index
    %c0_296 = arith.constant 0 : index
    %c0_297 = arith.constant 0 : index
    %623 = vector.load %arg15[%c6_295, %c0_296, %c0_297] : memref<9x4x4xbf16, #tpu.memory_space<vmem>>, vector<1x4x4xbf16>
    %624 = vector.shape_cast %623 : vector<1x4x4xbf16> to vector<4x4xbf16>
    %625 = arith.truncf %622 : vector<4x256xf32> to vector<4x256xbf16>
    %cst_298 = arith.constant dense<0.000000e+00> : vector<4x256xf32>
    %626 = tpu.matmul %624, %625, %cst_298 {dimension_numbers = #tpu.dot_dimension_numbers<[1], [0], [0], [1], [0, 0, 1, 1], [], []>} : vector<4x4xbf16>, vector<4x256xbf16>, vector<4x256xf32> -> vector<4x256xf32>
    %627 = arith.addf %617, %626 : vector<4x256xf32>
    %628 = vector.extract_strided_slice %560 {offsets = [0, 16], sizes = [4, 240], strides = [1, 1]} : vector<4x256xf32> to vector<4x240xf32>
    %cst_299 = arith.constant 0.000000e+00 : f32
    %629 = vector.broadcast %cst_299 : f32 to vector<4x16xf32>
    %630 = tpu.concatenate %628, %629 in 1 : vector<4x240xf32>, vector<4x16xf32> -> vector<4x256xf32>
    %c7_300 = arith.constant 7 : index
    %c0_301 = arith.constant 0 : index
    %c0_302 = arith.constant 0 : index
    %631 = vector.load %arg15[%c7_300, %c0_301, %c0_302] : memref<9x4x4xbf16, #tpu.memory_space<vmem>>, vector<1x4x4xbf16>
    %632 = vector.shape_cast %631 : vector<1x4x4xbf16> to vector<4x4xbf16>
    %633 = arith.truncf %630 : vector<4x256xf32> to vector<4x256xbf16>
    %cst_303 = arith.constant dense<0.000000e+00> : vector<4x256xf32>
    %634 = tpu.matmul %632, %633, %cst_303 {dimension_numbers = #tpu.dot_dimension_numbers<[1], [0], [0], [1], [0, 0, 1, 1], [], []>} : vector<4x4xbf16>, vector<4x256xbf16>, vector<4x256xf32> -> vector<4x256xf32>
    %635 = arith.addf %627, %634 : vector<4x256xf32>
    %636 = vector.extract_strided_slice %560 {offsets = [0, 17], sizes = [4, 239], strides = [1, 1]} : vector<4x256xf32> to vector<4x239xf32>
    %cst_304 = arith.constant 0.000000e+00 : f32
    %637 = vector.broadcast %cst_304 : f32 to vector<4x17xf32>
    %638 = tpu.concatenate %636, %637 in 1 : vector<4x239xf32>, vector<4x17xf32> -> vector<4x256xf32>
    %639 = vector.broadcast %563 : vector<1x256xf32> to vector<4x256xf32>
    %640 = arith.mulf %638, %639 : vector<4x256xf32>
    %c8_305 = arith.constant 8 : index
    %c0_306 = arith.constant 0 : index
    %c0_307 = arith.constant 0 : index
    %641 = vector.load %arg15[%c8_305, %c0_306, %c0_307] : memref<9x4x4xbf16, #tpu.memory_space<vmem>>, vector<1x4x4xbf16>
    %642 = vector.shape_cast %641 : vector<1x4x4xbf16> to vector<4x4xbf16>
    %643 = arith.truncf %640 : vector<4x256xf32> to vector<4x256xbf16>
    %cst_308 = arith.constant dense<0.000000e+00> : vector<4x256xf32>
    %644 = tpu.matmul %642, %643, %cst_308 {dimension_numbers = #tpu.dot_dimension_numbers<[1], [0], [0], [1], [0, 0, 1, 1], [], []>} : vector<4x4xbf16>, vector<4x256xbf16>, vector<4x256xf32> -> vector<4x256xf32>
    %645 = arith.addf %635, %644 : vector<4x256xf32>
    %c0_309 = arith.constant 0 : index
    %c0_310 = arith.constant 0 : index
    %646 = vector.load %arg20[%c0_309, %c0_310] : memref<4x1xf32, #tpu.memory_space<vmem>>, vector<4x1xf32>
    %647 = vector.broadcast %646 : vector<4x1xf32> to vector<4x256xf32>
    %648 = arith.addf %645, %647 : vector<4x256xf32>
    %c0_311 = arith.constant 0 : index
    %c1_312 = arith.constant 1 : index
    %c0_313 = arith.constant 0 : index
    %649 = vector.load %arg4[%c0_311, %c1_312, %c0_313] : memref<1x2x256xf32, #tpu.memory_space<vmem>>, vector<1x1x256xf32>
    %650 = vector.shape_cast %649 : vector<1x1x256xf32> to vector<1x256xf32>
    %c0_314 = arith.constant 0 : index
    %c0_315 = arith.constant 0 : index
    %651 = vector.load %arg26[%c0_314, %c0_315] : memref<4x1xf32, #tpu.memory_space<vmem>>, vector<4x1xf32>
    %652 = vector.extract_strided_slice %1 {offsets = [112, 0], sizes = [4, 1], strides = [1, 1]} : vector<128x1xf32> to vector<4x1xf32>
    %653 = vector.extract_strided_slice %1 {offsets = [120, 0], sizes = [4, 1], strides = [1, 1]} : vector<128x1xf32> to vector<4x1xf32>
    %654 = vector.broadcast %651 : vector<4x1xf32> to vector<4x256xf32>
    %655 = vector.broadcast %650 : vector<1x256xf32> to vector<4x256xf32>
    %656 = arith.mulf %654, %655 : vector<4x256xf32>
    %657 = arith.addf %648, %656 : vector<4x256xf32>
    %cst_316 = arith.constant 0.000000e+00 : f32
    %658 = vector.broadcast %cst_316 : f32 to vector<4x256xf32>
    %659 = arith.cmpf oge, %657, %658 : vector<4x256xf32>
    %cst_317 = arith.constant 2.000000e-01 : f32
    %660 = vector.broadcast %cst_317 : f32 to vector<4x256xf32>
    %661 = arith.mulf %660, %657 : vector<4x256xf32>
    %662 = arith.select %659, %657, %661 : vector<4x256xi1>, vector<4x256xf32>
    %cst_318 = arith.constant dense<0.000000e+00> : vector<4xf32>
    %663 = vector.multi_reduction <add>, %662, %cst_318 [1] : vector<4x256xf32> to vector<4xf32>
    %664 = vector.shape_cast %663 : vector<4xf32> to vector<4x1xf32>
    %cst_319 = arith.constant 2.560000e+02 : f32
    %665 = vector.broadcast %cst_319 : f32 to vector<4x1xf32>
    %666 = arith.divf %664, %665 : vector<4x1xf32>
    %667 = vector.broadcast %666 : vector<4x1xf32> to vector<4x256xf32>
    %668 = arith.subf %662, %667 : vector<4x256xf32>
    %669 = vector.broadcast %666 : vector<4x1xf32> to vector<4x256xf32>
    %670 = arith.subf %662, %669 : vector<4x256xf32>
    %671 = arith.mulf %668, %670 : vector<4x256xf32>
    %cst_320 = arith.constant dense<0.000000e+00> : vector<4xf32>
    %672 = vector.multi_reduction <add>, %671, %cst_320 [1] : vector<4x256xf32> to vector<4xf32>
    %673 = vector.shape_cast %672 : vector<4xf32> to vector<4x1xf32>
    %cst_321 = arith.constant 2.560000e+02 : f32
    %674 = vector.broadcast %cst_321 : f32 to vector<4x1xf32>
    %675 = arith.divf %673, %674 : vector<4x1xf32>
    %676 = vector.broadcast %666 : vector<4x1xf32> to vector<4x256xf32>
    %677 = arith.subf %662, %676 : vector<4x256xf32>
    %cst_322 = arith.constant 9.99999974E-6 : f32
    %678 = vector.broadcast %cst_322 : f32 to vector<4x1xf32>
    %679 = arith.addf %675, %678 : vector<4x1xf32>
    %680 = math.rsqrt %679 : vector<4x1xf32>
    %681 = vector.broadcast %680 : vector<4x1xf32> to vector<4x256xf32>
    %682 = arith.mulf %677, %681 : vector<4x256xf32>
    %cst_323 = arith.constant 1.000000e+00 : f32
    %683 = vector.broadcast %cst_323 : f32 to vector<4x1xf32>
    %684 = arith.addf %683, %652 : vector<4x1xf32>
    %685 = vector.broadcast %684 : vector<4x1xf32> to vector<4x256xf32>
    %686 = arith.mulf %682, %685 : vector<4x256xf32>
    %687 = vector.broadcast %653 : vector<4x1xf32> to vector<4x256xf32>
    %688 = arith.addf %686, %687 : vector<4x256xf32>
    %c0_324 = arith.constant 0 : index
    %c0_325 = arith.constant 0 : index
    %689 = vector.load %arg27[%c0_324, %c0_325] : memref<4x1xf32, #tpu.memory_space<vmem>>, vector<4x1xf32>
    %690 = vector.broadcast %689 : vector<4x1xf32> to vector<4x256xf32>
    %691 = arith.mulf %690, %688 : vector<4x256xf32>
    %cst_326 = arith.constant dense<0.000000e+00> : vector<256xf32>
    %692 = vector.multi_reduction <add>, %691, %cst_326 [0] : vector<4x256xf32> to vector<256xf32>
    %693 = vector.shape_cast %692 : vector<256xf32> to vector<1x256xf32>
    %c0_327 = arith.constant 0 : index
    %c0_328 = arith.constant 0 : index
    %694 = vector.load %arg28[%c0_327, %c0_328] : memref<1x1xf32, #tpu.memory_space<vmem>>, vector<1x1xf32>
    %695 = vector.broadcast %694 : vector<1x1xf32> to vector<1x256xf32>
    %696 = arith.addf %693, %695 : vector<1x256xf32>
    %697 = math.tanh %696 : vector<1x256xf32>
    %c0_329 = arith.constant 0 : index
    %c0_330 = arith.constant 0 : index
    %c0_331 = arith.constant 0 : index
    %698 = vector.load %arg29[%c0_329, %c0_330, %c0_331] : memref<1x1x256xf32, #tpu.memory_space<vmem>>, vector<1x1x256xf32>
    %699 = vector.shape_cast %698 : vector<1x1x256xf32> to vector<1x256xf32>
    %700 = vector.shape_cast %697 : vector<1x256xf32> to vector<1x1x256xf32>
    tpu.vector_store %arg29[%c0_329, %c0_330, %c0_331], %700 {strides = array<i32>} : memref<1x1x256xf32, #tpu.memory_space<vmem>>, vector<1x1x256xf32>,
    return
  }
  func.func @transform_0(%arg0: i32) -> (i32, i32, i32) {
    %c0_i32 = arith.constant 0 : i32
    %c0_i32_0 = arith.constant 0 : i32
    %c0_i32_1 = arith.constant 0 : i32
    return %arg0, %c0_i32, %c0_i32_0 : i32, i32, i32
  }
  func.func @transform_1(%arg0: i32) -> (i32, i32, i32) {
    %c0_i32 = arith.constant 0 : i32
    %c0_i32_0 = arith.constant 0 : i32
    %c0_i32_1 = arith.constant 0 : i32
    return %arg0, %c0_i32, %c0_i32_0 : i32, i32, i32
  }
  func.func @transform_2(%arg0: i32) -> (i32, i32, i32) {
    %c0_i32 = arith.constant 0 : i32
    %c0_i32_0 = arith.constant 0 : i32
    %c0_i32_1 = arith.constant 0 : i32
    return %arg0, %c0_i32, %c0_i32_0 : i32, i32, i32
  }
  func.func @transform_3(%arg0: i32) -> (i32, i32, i32) {
    %c0_i32 = arith.constant 0 : i32
    %c0_i32_0 = arith.constant 0 : i32
    %c0_i32_1 = arith.constant 0 : i32
    return %arg0, %c0_i32, %c0_i32_0 : i32, i32, i32
  }
  func.func @transform_4(%arg0: i32) -> (i32, i32) {
    %c0_i32 = arith.constant 0 : i32
    %c0_i32_0 = arith.constant 0 : i32
    %c0_i32_1 = arith.constant 0 : i32
    return %c0_i32, %c0_i32_0 : i32, i32
  }
  func.func @transform_5(%arg0: i32) -> (i32, i32) {
    %c0_i32 = arith.constant 0 : i32
    %c0_i32_0 = arith.constant 0 : i32
    %c0_i32_1 = arith.constant 0 : i32
    return %c0_i32, %c0_i32_0 : i32, i32
  }
  func.func @transform_6(%arg0: i32) -> (i32, i32) {
    %c0_i32 = arith.constant 0 : i32
    %c0_i32_0 = arith.constant 0 : i32
    %c0_i32_1 = arith.constant 0 : i32
    return %c0_i32, %c0_i32_0 : i32, i32
  }
  func.func @transform_7(%arg0: i32) -> (i32, i32) {
    %c0_i32 = arith.constant 0 : i32
    %c0_i32_0 = arith.constant 0 : i32
    %c0_i32_1 = arith.constant 0 : i32
    return %c0_i32, %c0_i32_0 : i32, i32
  }
  func.func @transform_8(%arg0: i32) -> (i32, i32) {
    %c0_i32 = arith.constant 0 : i32
    %c0_i32_0 = arith.constant 0 : i32
    %c0_i32_1 = arith.constant 0 : i32
    return %c0_i32, %c0_i32_0 : i32, i32
  }
  func.func @transform_9(%arg0: i32) -> (i32, i32) {
    %c0_i32 = arith.constant 0 : i32
    %c0_i32_0 = arith.constant 0 : i32
    %c0_i32_1 = arith.constant 0 : i32
    return %c0_i32, %c0_i32_0 : i32, i32
  }
  func.func @transform_10(%arg0: i32) -> (i32, i32, i32) {
    %c0_i32 = arith.constant 0 : i32
    %c0_i32_0 = arith.constant 0 : i32
    %c0_i32_1 = arith.constant 0 : i32
    %c0_i32_2 = arith.constant 0 : i32
    return %c0_i32, %c0_i32_0, %c0_i32_1 : i32, i32, i32
  }
  func.func @transform_11(%arg0: i32) -> (i32, i32, i32) {
    %c0_i32 = arith.constant 0 : i32
    %c0_i32_0 = arith.constant 0 : i32
    %c0_i32_1 = arith.constant 0 : i32
    %c0_i32_2 = arith.constant 0 : i32
    return %c0_i32, %c0_i32_0, %c0_i32_1 : i32, i32, i32
  }
  func.func @transform_12(%arg0: i32) -> (i32, i32, i32) {
    %c0_i32 = arith.constant 0 : i32
    %c0_i32_0 = arith.constant 0 : i32
    %c0_i32_1 = arith.constant 0 : i32
    %c0_i32_2 = arith.constant 0 : i32
    return %c0_i32, %c0_i32_0, %c0_i32_1 : i32, i32, i32
  }
  func.func @transform_13(%arg0: i32) -> (i32, i32, i32) {
    %c0_i32 = arith.constant 0 : i32
    %c0_i32_0 = arith.constant 0 : i32
    %c0_i32_1 = arith.constant 0 : i32
    %c0_i32_2 = arith.constant 0 : i32
    return %c0_i32, %c0_i32_0, %c0_i32_1 : i32, i32, i32
  }
  func.func @transform_14(%arg0: i32) -> (i32, i32, i32) {
    %c0_i32 = arith.constant 0 : i32
    %c0_i32_0 = arith.constant 0 : i32
    %c0_i32_1 = arith.constant 0 : i32
    %c0_i32_2 = arith.constant 0 : i32
    return %c0_i32, %c0_i32_0, %c0_i32_1 : i32, i32, i32
  }
  func.func @transform_15(%arg0: i32) -> (i32, i32) {
    %c0_i32 = arith.constant 0 : i32
    %c0_i32_0 = arith.constant 0 : i32
    %c0_i32_1 = arith.constant 0 : i32
    return %c0_i32, %c0_i32_0 : i32, i32
  }
  func.func @transform_16(%arg0: i32) -> (i32, i32) {
    %c0_i32 = arith.constant 0 : i32
    %c0_i32_0 = arith.constant 0 : i32
    %c0_i32_1 = arith.constant 0 : i32
    return %c0_i32, %c0_i32_0 : i32, i32
  }
  func.func @transform_17(%arg0: i32) -> (i32, i32) {
    %c0_i32 = arith.constant 0 : i32
    %c0_i32_0 = arith.constant 0 : i32
    %c0_i32_1 = arith.constant 0 : i32
    return %c0_i32, %c0_i32_0 : i32, i32
  }
  func.func @transform_18(%arg0: i32) -> (i32, i32) {
    %c0_i32 = arith.constant 0 : i32
    %c0_i32_0 = arith.constant 0 : i32
    %c0_i32_1 = arith.constant 0 : i32
    return %c0_i32, %c0_i32_0 : i32, i32
  }
  func.func @transform_19(%arg0: i32) -> (i32, i32) {
    %c0_i32 = arith.constant 0 : i32
    %c0_i32_0 = arith.constant 0 : i32
    %c0_i32_1 = arith.constant 0 : i32
    return %c0_i32, %c0_i32_0 : i32, i32
  }
  func.func @transform_20(%arg0: i32) -> (i32, i32) {
    %c0_i32 = arith.constant 0 : i32
    %c0_i32_0 = arith.constant 0 : i32
    %c0_i32_1 = arith.constant 0 : i32
    return %c0_i32, %c0_i32_0 : i32, i32
  }
  func.func @transform_21(%arg0: i32) -> (i32, i32) {
    %c0_i32 = arith.constant 0 : i32
    %c0_i32_0 = arith.constant 0 : i32
    %c0_i32_1 = arith.constant 0 : i32
    return %c0_i32, %c0_i32_0 : i32, i32
  }
  func.func @transform_22(%arg0: i32) -> (i32, i32) {
    %c0_i32 = arith.constant 0 : i32
    %c0_i32_0 = arith.constant 0 : i32
    %c0_i32_1 = arith.constant 0 : i32
    return %c0_i32, %c0_i32_0 : i32, i32
  }
  func.func @transform_23(%arg0: i32) -> (i32, i32) {
    %c0_i32 = arith.constant 0 : i32
    %c0_i32_0 = arith.constant 0 : i32
    %c0_i32_1 = arith.constant 0 : i32
    return %c0_i32, %c0_i32_0 : i32, i32
  }
  func.func @transform_24(%arg0: i32) -> (i32, i32) {
    %c0_i32 = arith.constant 0 : i32
    %c0_i32_0 = arith.constant 0 : i32
    %c0_i32_1 = arith.constant 0 : i32
    return %c0_i32, %c0_i32_0 : i32, i32
  }
  func.func @transform_25(%arg0: i32) -> (i32, i32) {
    %c0_i32 = arith.constant 0 : i32
    %c0_i32_0 = arith.constant 0 : i32
    %c0_i32_1 = arith.constant 0 : i32
    return %c0_i32, %c0_i32_0 : i32, i32
  }
  func.func @transform_26(%arg0: i32) -> (i32, i32) {
    %c0_i32 = arith.constant 0 : i32
    %c0_i32_0 = arith.constant 0 : i32
    %c0_i32_1 = arith.constant 0 : i32
    return %c0_i32, %c0_i32_0 : i32, i32
  }
  func.func @transform_27(%arg0: i32) -> (i32, i32) {
    %c0_i32 = arith.constant 0 : i32
    %c0_i32_0 = arith.constant 0 : i32
    %c0_i32_1 = arith.constant 0 : i32
    return %c0_i32, %c0_i32_0 : i32, i32
  }
  func.func @transform_28(%arg0: i32) -> (i32, i32, i32) {
    %c0_i32 = arith.constant 0 : i32
    %c0_i32_0 = arith.constant 0 : i32
    %c0_i32_1 = arith.constant 0 : i32
    return %arg0, %c0_i32, %c0_i32_0 : i32, i32, i32
  }
}

</mosaic_0001>

<llo_original>
// kernel: style_generator_forward.1
$region0: #{style_generator_forward.1}
  #allocation0 [shape = 'u32[]', space=smem, size = 0x4, offset = 0x4, fixed_abs, tag = 'smem constant byte address 0x4 - core index']
  #allocation1 [shape = 'u32[72,128]{1,0:T(1,128)}', space=vmem, size = 0x9000, scoped, tag = 'internal scratch']
  #allocation2 [shape = 'f32[1,1]{1,0:T(1,128)S(1)}', space=vmem, size = 0x200, scoped, tag = 'scoped memory for style_generator_forward.1']
  %s0 = inlined_call_operand.vmem [shape: f32[2,128,1], index: 0, kind: input, shape index: {}]
  %s1 = inlined_call_operand.vmem [shape: f32[2,2,16], index: 1, kind: input, shape index: {}]
  %s2 = inlined_call_operand.vmem [shape: f32[2,2,64], index: 2, kind: input, shape index: {}]
  %s3 = inlined_call_operand.vmem [shape: f32[2,2,256], index: 3, kind: input, shape index: {}]
  %s4 = inlined_call_operand.vmem [shape: f32[2,16], index: 4, kind: input, shape index: {}]
  %s5 = inlined_call_operand.vmem [shape: f32[2,64], index: 5, kind: input, shape index: {}]
  %s6 = inlined_call_operand.vmem [shape: f32[2,256], index: 6, kind: input, shape index: {}]
  %s7 = inlined_call_operand.vmem [shape: f32[16,16], index: 7, kind: input, shape index: {}]
  %s8 = inlined_call_operand.vmem [shape: bf16[16,64], index: 8, kind: input, shape index: {}]
  %s9 = inlined_call_operand.vmem [shape: bf16[64,256], index: 9, kind: input, shape index: {}]
  %s10 = inlined_call_operand.vmem [shape: bf16[9,16,16], index: 10, kind: input, shape index: {}]
  %s11 = inlined_call_operand.vmem [shape: bf16[9,8,16], index: 11, kind: input, shape index: {}]
  %s12 = inlined_call_operand.vmem [shape: bf16[9,8,8], index: 12, kind: input, shape index: {}]
  %s13 = inlined_call_operand.vmem [shape: bf16[9,4,8], index: 13, kind: input, shape index: {}]
  %s14 = inlined_call_operand.vmem [shape: bf16[9,4,4], index: 14, kind: input, shape index: {}]
  %s15 = inlined_call_operand.vmem [shape: f32[16,1], index: 15, kind: input, shape index: {}]
  %s16 = inlined_call_operand.vmem [shape: f32[8,1], index: 16, kind: input, shape index: {}]
  %s17 = inlined_call_operand.vmem [shape: f32[8,1], index: 17, kind: input, shape index: {}]
  %s18 = inlined_call_operand.vmem [shape: f32[4,1], index: 18, kind: input, shape index: {}]
  %s19 = inlined_call_operand.vmem [shape: f32[4,1], index: 19, kind: input, shape index: {}]
  %s20 = inlined_call_operand.vmem [shape: f32[16,1], index: 20, kind: input, shape index: {}]
  %s21 = inlined_call_operand.vmem [shape: f32[16,1], index: 21, kind: input, shape index: {}]
  %s22 = inlined_call_operand.vmem [shape: f32[8,1], index: 22, kind: input, shape index: {}]
  %s23 = inlined_call_operand.vmem [shape: f32[8,1], index: 23, kind: input, shape index: {}]
  %s24 = inlined_call_operand.vmem [shape: f32[4,1], index: 24, kind: input, shape index: {}]
  %s25 = inlined_call_operand.vmem [shape: f32[4,1], index: 25, kind: input, shape index: {}]
  %s26 = inlined_call_operand.vmem [shape: f32[4,1], index: 26, kind: input, shape index: {}]
  %s27 = inlined_call_operand.<no memory space> [shape: f32[1,1], index: 27, kind: input, shape index: {}]
  %s28 = inlined_call_operand.vmem [shape: f32[2,1,256], index: 28, kind: output, shape index: {}]
  %s29 = sld [smem:[#allocation0]]
  $region145: #{style_generator_forward.1} parent=0
    _
  %s31 = ssub.s32 1, %s29
  %s32 = scalar_select 0, %s31, %s29
  %v33 = vstv %s27
  %34 = vst [vmem:[#allocation2] sm:$0x1] %v33
  loop: start=0, step=1, limit=4
  $region2: #{style_generator_forward.1} parent=0 // loop_pre_header
    _
  $region3: #{style_generator_forward.1} parent=0 // loop_header
    %s36 = sphi 0, %s40
    %p37 = scmp.ge.s32.totalorder %s36, 4
    %s46 = sphi 0, %s48
    %s49 = sphi 0, %s46
    %s50 = sphi 0, %s49
    %s66 = sphi 0, %s50
    %s72 = sphi 0, %s74
    %s75 = sphi 0, %s72
    %s76 = sphi 0, %s75
    %s92 = sphi 0, %s76
    %s98 = sphi 0, %s100
    %s101 = sphi 0, %s98
    %s102 = sphi 0, %s101
    %s118 = sphi 0, %s102
    %s124 = sphi 0, %s126
    %s127 = sphi 0, %s124
    %s128 = sphi 0, %s127
    %s144 = sphi 0, %s128
    %s148 = sphi 0, %s148
    %s150 = sphi 0, %s148
    %s151 = sphi 0, %s150
    %s165 = sphi 0, %s151
    %s169 = sphi 0, %s169
    %s171 = sphi 0, %s169
    %s172 = sphi 0, %s171
    %s186 = sphi 0, %s172
    %s190 = sphi 0, %s190
    %s192 = sphi 0, %s190
    %s193 = sphi 0, %s192
    %s207 = sphi 0, %s193
    %s211 = sphi 0, %s211
    %s213 = sphi 0, %s211
    %s214 = sphi 0, %s213
    %s228 = sphi 0, %s214
    %s232 = sphi 0, %s232
    %s234 = sphi 0, %s232
    %s235 = sphi 0, %s234
    %s249 = sphi 0, %s235
    %s253 = sphi 0, %s253
    %s255 = sphi 0, %s253
    %s256 = sphi 0, %s255
    %s270 = sphi 0, %s256
    %s274 = sphi 0, %s274
    %s276 = sphi 0, %s274
    %s277 = sphi 0, %s276
    %s291 = sphi 0, %s277
    %s295 = sphi 0, %s295
    %s297 = sphi 0, %s295
    %s298 = sphi 0, %s297
    %s312 = sphi 0, %s298
    %s316 = sphi 0, %s316
    %s318 = sphi 0, %s316
    %s319 = sphi 0, %s318
    %s333 = sphi 0, %s319
    %s337 = sphi 0, %s337
    %s339 = sphi 0, %s337
    %s340 = sphi 0, %s339
    %s354 = sphi 0, %s340
    %s358 = sphi 0, %s358
    %s360 = sphi 0, %s358
    %s361 = sphi 0, %s360
    %s375 = sphi 0, %s361
    %s379 = sphi 0, %s379
    %s381 = sphi 0, %s379
    %s382 = sphi 0, %s381
    %s396 = sphi 0, %s382
    %s400 = sphi 0, %s400
    %s402 = sphi 0, %s400
    %s403 = sphi 0, %s402
    %s417 = sphi 0, %s403
    %s421 = sphi 0, %s421
    %s423 = sphi 0, %s421
    %s424 = sphi 0, %s423
    %s438 = sphi 0, %s424
    %s442 = sphi 0, %s442
    %s444 = sphi 0, %s442
    %s445 = sphi 0, %s444
    %s459 = sphi 0, %s445
    %s463 = sphi 0, %s463
    %s465 = sphi 0, %s463
    %s466 = sphi 0, %s465
    %s480 = sphi 0, %s466
    %s484 = sphi 0, %s484
    %s486 = sphi 0, %s484
    %s487 = sphi 0, %s486
    %s501 = sphi 0, %s487
    %s505 = sphi 0, %s505
    %s507 = sphi 0, %s505
    %s508 = sphi 0, %s507
    %s522 = sphi 0, %s508
    %s526 = sphi 0, %s526
    %s528 = sphi 0, %s526
    %s529 = sphi 0, %s528
    %s543 = sphi 0, %s529
    %s547 = sphi 0, %s547
    %s549 = sphi 0, %s547
    %s550 = sphi 0, %s549
    %s564 = sphi 0, %s550
    %s568 = sphi 0, %s568
    %s570 = sphi 0, %s568
    %s571 = sphi 0, %s570
    %s585 = sphi 0, %s571
    %s589 = sphi 0, %s589
    %s591 = sphi 0, %s589
    %s592 = sphi 0, %s591
    %s606 = sphi 0, %s592
    %s610 = sphi 0, %s610
    %s612 = sphi 0, %s610
    %s613 = sphi 0, %s612
    %s627 = sphi 0, %s613
    %s631 = sphi 0, %s631
    %s633 = sphi 0, %s631
    %s634 = sphi 0, %s633
    %s648 = sphi 0, %s634
    %s654 = sphi 0, %s656
    %s657 = sphi 0, %s654
    %s658 = sphi 0, %s657
    %s674 = sphi 0, %s658
  $region4: #{style_generator_forward.1} parent=0 // loop_header_branch
    %39 = sbr.rel (%p37) target = $region8
  $region5: #{style_generator_forward.1} parent=0 // loop_body
    %s41 = ssub.s32 %s36, 1
    %s42 = ssub.s32 %s36, 2
    %s43 = sadd.s32 %s36, 1
    %s44 = ssub.s32 %s36, %s43
    %p45 = scmp.eq.s32.totalorder %s44, 0
    %s47 = sadd.s32 %s46, 1
    %s48 = scalar_select %p45, %s46, %s47
    %p51 = pneg %p45
    %p52 = scmp.eq.s32.totalorder %s36, 1
    %p53 = por %p51, %p52
    %p54 = scmp.ne.s32.totalorder %s46, %s49
    %p55 = scmp.eq.s32.totalorder %s36, 0
    %p56 = por %p54, %p55
    %p57 = scmp.ne.s32.totalorder %s46, %s49
    %p58 = scmp.eq.s32.totalorder %s41, 1
    %p59 = por %p57, %p58
    %p60 = scmp.ne.s32.totalorder %s49, %s50
    %p61 = scmp.eq.s32.totalorder %s41, 0
    %p62 = por %p60, %p61
    %p63 = scmp.ne.s32.totalorder %s49, %s50
    %p64 = scmp.eq.s32.totalorder %s42, 1
    %p65 = por %p63, %p64
    %p67 = scmp.ne.s32.totalorder %s50, %s66
    %p68 = scmp.eq.s32.totalorder %s42, 0
    %p69 = por %p67, %p68
    %s70 = ssub.s32 %s36, %s43
    %p71 = scmp.eq.s32.totalorder %s70, 0
    %s73 = sadd.s32 %s72, 1
    %s74 = scalar_select %p71, %s72, %s73
    %p77 = pneg %p71
    %p78 = scmp.eq.s32.totalorder %s36, 1
    %p79 = por %p77, %p78
    %p80 = scmp.ne.s32.totalorder %s72, %s75
    %p81 = scmp.eq.s32.totalorder %s36, 0
    %p82 = por %p80, %p81
    %p83 = scmp.ne.s32.totalorder %s72, %s75
    %p84 = scmp.eq.s32.totalorder %s41, 1
    %p85 = por %p83, %p84
    %p86 = scmp.ne.s32.totalorder %s75, %s76
    %p87 = scmp.eq.s32.totalorder %s41, 0
    %p88 = por %p86, %p87
    %p89 = scmp.ne.s32.totalorder %s75, %s76
    %p90 = scmp.eq.s32.totalorder %s42, 1
    %p91 = por %p89, %p90
    %p93 = scmp.ne.s32.totalorder %s76, %s92
    %p94 = scmp.eq.s32.totalorder %s42, 0
    %p95 = por %p93, %p94
    %s96 = ssub.s32 %s36, %s43
    %p97 = scmp.eq.s32.totalorder %s96, 0
    %s99 = sadd.s32 %s98, 1
    %s100 = scalar_select %p97, %s98, %s99
    %p103 = pneg %p97
    %p104 = scmp.eq.s32.totalorder %s36, 1
    %p105 = por %p103, %p104
    %p106 = scmp.ne.s32.totalorder %s98, %s101
    %p107 = scmp.eq.s32.totalorder %s36, 0
    %p108 = por %p106, %p107
    %p109 = scmp.ne.s32.totalorder %s98, %s101
    %p110 = scmp.eq.s32.totalorder %s41, 1
    %p111 = por %p109, %p110
    %p112 = scmp.ne.s32.totalorder %s101, %s102
    %p113 = scmp.eq.s32.totalorder %s41, 0
    %p114 = por %p112, %p113
    %p115 = scmp.ne.s32.totalorder %s101, %s102
    %p116 = scmp.eq.s32.totalorder %s42, 1
    %p117 = por %p115, %p116
    %p119 = scmp.ne.s32.totalorder %s102, %s118
    %p120 = scmp.eq.s32.totalorder %s42, 0
    %p121 = por %p119, %p120
    %s122 = ssub.s32 %s36, %s43
    %p123 = scmp.eq.s32.totalorder %s122, 0
    %s125 = sadd.s32 %s124, 1
    %s126 = scalar_select %p123, %s124, %s125
    %p129 = pneg %p123
    %p130 = scmp.eq.s32.totalorder %s36, 1
    %p131 = por %p129, %p130
    %p132 = scmp.ne.s32.totalorder %s124, %s127
    %p133 = scmp.eq.s32.totalorder %s36, 0
    %p134 = por %p132, %p133
    %p135 = scmp.ne.s32.totalorder %s124, %s127
    %p136 = scmp.eq.s32.totalorder %s41, 1
    %p137 = por %p135, %p136
    %p138 = scmp.ne.s32.totalorder %s127, %s128
    %p139 = scmp.eq.s32.totalorder %s41, 0
    %p140 = por %p138, %p139
    %p141 = scmp.ne.s32.totalorder %s127, %s128
    %p142 = scmp.eq.s32.totalorder %s42, 1
    %p143 = por %p141, %p142
    %p145 = scmp.ne.s32.totalorder %s128, %s144
    %p146 = scmp.eq.s32.totalorder %s42, 0
    %p147 = por %p145, %p146
    %s149 = sadd.s32 %s148, 1
    %p152 = scmp.eq.s32.totalorder %s36, 1
    %p153 = scmp.ne.s32.totalorder %s148, %s150
    %p154 = scmp.eq.s32.totalorder %s36, 0
    %p155 = por %p153, %p154
    %p156 = scmp.ne.s32.totalorder %s148, %s150
    %p157 = scmp.eq.s32.totalorder %s41, 1
    %p158 = por %p156, %p157
    %p159 = scmp.ne.s32.totalorder %s150, %s151
    %p160 = scmp.eq.s32.totalorder %s41, 0
    %p161 = por %p159, %p160
    %p162 = scmp.ne.s32.totalorder %s150, %s151
    %p163 = scmp.eq.s32.totalorder %s42, 1
    %p164 = por %p162, %p163
    %p166 = scmp.ne.s32.totalorder %s151, %s165
    %p167 = scmp.eq.s32.totalorder %s42, 0
    %p168 = por %p166, %p167
    %s170 = sadd.s32 %s169, 1
    %p173 = scmp.eq.s32.totalorder %s36, 1
    %p174 = scmp.ne.s32.totalorder %s169, %s171
    %p175 = scmp.eq.s32.totalorder %s36, 0
    %p176 = por %p174, %p175
    %p177 = scmp.ne.s32.totalorder %s169, %s171
    %p178 = scmp.eq.s32.totalorder %s41, 1
    %p179 = por %p177, %p178
    %p180 = scmp.ne.s32.totalorder %s171, %s172
    %p181 = scmp.eq.s32.totalorder %s41, 0
    %p182 = por %p180, %p181
    %p183 = scmp.ne.s32.totalorder %s171, %s172
    %p184 = scmp.eq.s32.totalorder %s42, 1
    %p185 = por %p183, %p184
    %p187 = scmp.ne.s32.totalorder %s172, %s186
    %p188 = scmp.eq.s32.totalorder %s42, 0
    %p189 = por %p187, %p188
    %s191 = sadd.s32 %s190, 1
    %p194 = scmp.eq.s32.totalorder %s36, 1
    %p195 = scmp.ne.s32.totalorder %s190, %s192
    %p196 = scmp.eq.s32.totalorder %s36, 0
    %p197 = por %p195, %p196
    %p198 = scmp.ne.s32.totalorder %s190, %s192
    %p199 = scmp.eq.s32.totalorder %s41, 1
    %p200 = por %p198, %p199
    %p201 = scmp.ne.s32.totalorder %s192, %s193
    %p202 = scmp.eq.s32.totalorder %s41, 0
    %p203 = por %p201, %p202
    %p204 = scmp.ne.s32.totalorder %s192, %s193
    %p205 = scmp.eq.s32.totalorder %s42, 1
    %p206 = por %p204, %p205
    %p208 = scmp.ne.s32.totalorder %s193, %s207
    %p209 = scmp.eq.s32.totalorder %s42, 0
    %p210 = por %p208, %p209
    %s212 = sadd.s32 %s211, 1
    %p215 = scmp.eq.s32.totalorder %s36, 1
    %p216 = scmp.ne.s32.totalorder %s211, %s213
    %p217 = scmp.eq.s32.totalorder %s36, 0
    %p218 = por %p216, %p217
    %p219 = scmp.ne.s32.totalorder %s211, %s213
    %p220 = scmp.eq.s32.totalorder %s41, 1
    %p221 = por %p219, %p220
    %p222 = scmp.ne.s32.totalorder %s213, %s214
    %p223 = scmp.eq.s32.totalorder %s41, 0
    %p224 = por %p222, %p223
    %p225 = scmp.ne.s32.totalorder %s213, %s214
    %p226 = scmp.eq.s32.totalorder %s42, 1
    %p227 = por %p225, %p226
    %p229 = scmp.ne.s32.totalorder %s214, %s228
    %p230 = scmp.eq.s32.totalorder %s42, 0
    %p231 = por %p229, %p230
    %s233 = sadd.s32 %s232, 1
    %p236 = scmp.eq.s32.totalorder %s36, 1
    %p237 = scmp.ne.s32.totalorder %s232, %s234
    %p238 = scmp.eq.s32.totalorder %s36, 0
    %p239 = por %p237, %p238
    %p240 = scmp.ne.s32.totalorder %s232, %s234
    %p241 = scmp.eq.s32.totalorder %s41, 1
    %p242 = por %p240, %p241
    %p243 = scmp.ne.s32.totalorder %s234, %s235
    %p244 = scmp.eq.s32.totalorder %s41, 0
    %p245 = por %p243, %p244
    %p246 = scmp.ne.s32.totalorder %s234, %s235
    %p247 = scmp.eq.s32.totalorder %s42, 1
    %p248 = por %p246, %p247
    %p250 = scmp.ne.s32.totalorder %s235, %s249
    %p251 = scmp.eq.s32.totalorder %s42, 0
    %p252 = por %p250, %p251
    %s254 = sadd.s32 %s253, 1
    %p257 = scmp.eq.s32.totalorder %s36, 1
    %p258 = scmp.ne.s32.totalorder %s253, %s255
    %p259 = scmp.eq.s32.totalorder %s36, 0
    %p260 = por %p258, %p259
    %p261 = scmp.ne.s32.totalorder %s253, %s255
    %p262 = scmp.eq.s32.totalorder %s41, 1
    %p263 = por %p261, %p262
    %p264 = scmp.ne.s32.totalorder %s255, %s256
    %p265 = scmp.eq.s32.totalorder %s41, 0
    %p266 = por %p264, %p265
    %p267 = scmp.ne.s32.totalorder %s255, %s256
    %p268 = scmp.eq.s32.totalorder %s42, 1
    %p269 = por %p267, %p268
    %p271 = scmp.ne.s32.totalorder %s256, %s270
    %p272 = scmp.eq.s32.totalorder %s42, 0
    %p273 = por %p271, %p272
    %s275 = sadd.s32 %s274, 1
    %p278 = scmp.eq.s32.totalorder %s36, 1
    %p279 = scmp.ne.s32.totalorder %s274, %s276
    %p280 = scmp.eq.s32.totalorder %s36, 0
    %p281 = por %p279, %p280
    %p282 = scmp.ne.s32.totalorder %s274, %s276
    %p283 = scmp.eq.s32.totalorder %s41, 1
    %p284 = por %p282, %p283
    %p285 = scmp.ne.s32.totalorder %s276, %s277
    %p286 = scmp.eq.s32.totalorder %s41, 0
    %p287 = por %p285, %p286
    %p288 = scmp.ne.s32.totalorder %s276, %s277
    %p289 = scmp.eq.s32.totalorder %s42, 1
    %p290 = por %p288, %p289
    %p292 = scmp.ne.s32.totalorder %s277, %s291
    %p293 = scmp.eq.s32.totalorder %s42, 0
    %p294 = por %p292, %p293
    %s296 = sadd.s32 %s295, 1
    %p299 = scmp.eq.s32.totalorder %s36, 1
    %p300 = scmp.ne.s32.totalorder %s295, %s297
    %p301 = scmp.eq.s32.totalorder %s36, 0
    %p302 = por %p300, %p301
    %p303 = scmp.ne.s32.totalorder %s295, %s297
    %p304 = scmp.eq.s32.totalorder %s41, 1
    %p305 = por %p303, %p304
    %p306 = scmp.ne.s32.totalorder %s297, %s298
    %p307 = scmp.eq.s32.totalorder %s41, 0
    %p308 = por %p306, %p307
    %p309 = scmp.ne.s32.totalorder %s297, %s298
    %p310 = scmp.eq.s32.totalorder %s42, 1
    %p311 = por %p309, %p310
    %p313 = scmp.ne.s32.totalorder %s298, %s312
    %p314 = scmp.eq.s32.totalorder %s42, 0
    %p315 = por %p313, %p314
    %s317 = sadd.s32 %s316, 1
    %p320 = scmp.eq.s32.totalorder %s36, 1
    %p321 = scmp.ne.s32.totalorder %s316, %s318
    %p322 = scmp.eq.s32.totalorder %s36, 0
    %p323 = por %p321, %p322
    %p324 = scmp.ne.s32.totalorder %s316, %s318
    %p325 = scmp.eq.s32.totalorder %s41, 1
    %p326 = por %p324, %p325
    %p327 = scmp.ne.s32.totalorder %s318, %s319
    %p328 = scmp.eq.s32.totalorder %s41, 0
    %p329 = por %p327, %p328
    %p330 = scmp.ne.s32.totalorder %s318, %s319
    %p331 = scmp.eq.s32.totalorder %s42, 1
    %p332 = por %p330, %p331
    %p334 = scmp.ne.s32.totalorder %s319, %s333
    %p335 = scmp.eq.s32.totalorder %s42, 0
    %p336 = por %p334, %p335
    %s338 = sadd.s32 %s337, 1
    %p341 = scmp.eq.s32.totalorder %s36, 1
    %p342 = scmp.ne.s32.totalorder %s337, %s339
    %p343 = scmp.eq.s32.totalorder %s36, 0
    %p344 = por %p342, %p343
    %p345 = scmp.ne.s32.totalorder %s337, %s339
    %p346 = scmp.eq.s32.totalorder %s41, 1
    %p347 = por %p345, %p346
    %p348 = scmp.ne.s32.totalorder %s339, %s340
    %p349 = scmp.eq.s32.totalorder %s41, 0
    %p350 = por %p348, %p349
    %p351 = scmp.ne.s32.totalorder %s339, %s340
    %p352 = scmp.eq.s32.totalorder %s42, 1
    %p353 = por %p351, %p352
    %p355 = scmp.ne.s32.totalorder %s340, %s354
    %p356 = scmp.eq.s32.totalorder %s42, 0
    %p357 = por %p355, %p356
    %s359 = sadd.s32 %s358, 1
    %p362 = scmp.eq.s32.totalorder %s36, 1
    %p363 = scmp.ne.s32.totalorder %s358, %s360
    %p364 = scmp.eq.s32.totalorder %s36, 0
    %p365 = por %p363, %p364
    %p366 = scmp.ne.s32.totalorder %s358, %s360
    %p367 = scmp.eq.s32.totalorder %s41, 1
    %p368 = por %p366, %p367
    %p369 = scmp.ne.s32.totalorder %s360, %s361
    %p370 = scmp.eq.s32.totalorder %s41, 0
    %p371 = por %p369, %p370
    %p372 = scmp.ne.s32.totalorder %s360, %s361
    %p373 = scmp.eq.s32.totalorder %s42, 1
    %p374 = por %p372, %p373
    %p376 = scmp.ne.s32.totalorder %s361, %s375
    %p377 = scmp.eq.s32.totalorder %s42, 0
    %p378 = por %p376, %p377
    %s380 = sadd.s32 %s379, 1
    %p383 = scmp.eq.s32.totalorder %s36, 1
    %p384 = scmp.ne.s32.totalorder %s379, %s381
    %p385 = scmp.eq.s32.totalorder %s36, 0
    %p386 = por %p384, %p385
    %p387 = scmp.ne.s32.totalorder %s379, %s381
    %p388 = scmp.eq.s32.totalorder %s41, 1
    %p389 = por %p387, %p388
    %p390 = scmp.ne.s32.totalorder %s381, %s382
    %p391 = scmp.eq.s32.totalorder %s41, 0
    %p392 = por %p390, %p391
    %p393 = scmp.ne.s32.totalorder %s381, %s382
    %p394 = scmp.eq.s32.totalorder %s42, 1
    %p395 = por %p393, %p394
    %p397 = scmp.ne.s32.totalorder %s382, %s396
    %p398 = scmp.eq.s32.totalorder %s42, 0
    %p399 = por %p397, %p398
    %s401 = sadd.s32 %s400, 1
    %p404 = scmp.eq.s32.totalorder %s36, 1
    %p405 = scmp.ne.s32.totalorder %s400, %s402
    %p406 = scmp.eq.s32.totalorder %s36, 0
    %p407 = por %p405, %p406
    %p408 = scmp.ne.s32.totalorder %s400, %s402
    %p409 = scmp.eq.s32.totalorder %s41, 1
    %p410 = por %p408, %p409
    %p411 = scmp.ne.s32.totalorder %s402, %s403
    %p412 = scmp.eq.s32.totalorder %s41, 0
    %p413 = por %p411, %p412
    %p414 = scmp.ne.s32.totalorder %s402, %s403
    %p415 = scmp.eq.s32.totalorder %s42, 1
    %p416 = por %p414, %p415
    %p418 = scmp.ne.s32.totalorder %s403, %s417
    %p419 = scmp.eq.s32.totalorder %s42, 0
    %p420 = por %p418, %p419
    %s422 = sadd.s32 %s421, 1
    %p425 = scmp.eq.s32.totalorder %s36, 1
    %p426 = scmp.ne.s32.totalorder %s421, %s423
    %p427 = scmp.eq.s32.totalorder %s36, 0
    %p428 = por %p426, %p427
    %p429 = scmp.ne.s32.totalorder %s421, %s423
    %p430 = scmp.eq.s32.totalorder %s41, 1
    %p431 = por %p429, %p430
    %p432 = scmp.ne.s32.totalorder %s423, %s424
    %p433 = scmp.eq.s32.totalorder %s41, 0
    %p434 = por %p432, %p433
    %p435 = scmp.ne.s32.totalorder %s423, %s424
    %p436 = scmp.eq.s32.totalorder %s42, 1
    %p437 = por %p435, %p436
    %p439 = scmp.ne.s32.totalorder %s424, %s438
    %p440 = scmp.eq.s32.totalorder %s42, 0
    %p441 = por %p439, %p440
    %s443 = sadd.s32 %s442, 1
    %p446 = scmp.eq.s32.totalorder %s36, 1
    %p447 = scmp.ne.s32.totalorder %s442, %s444
    %p448 = scmp.eq.s32.totalorder %s36, 0
    %p449 = por %p447, %p448
    %p450 = scmp.ne.s32.totalorder %s442, %s444
    %p451 = scmp.eq.s32.totalorder %s41, 1
    %p452 = por %p450, %p451
    %p453 = scmp.ne.s32.totalorder %s444, %s445
    %p454 = scmp.eq.s32.totalorder %s41, 0
    %p455 = por %p453, %p454
    %p456 = scmp.ne.s32.totalorder %s444, %s445
    %p457 = scmp.eq.s32.totalorder %s42, 1
    %p458 = por %p456, %p457
    %p460 = scmp.ne.s32.totalorder %s445, %s459
    %p461 = scmp.eq.s32.totalorder %s42, 0
    %p462 = por %p460, %p461
    %s464 = sadd.s32 %s463, 1
    %p467 = scmp.eq.s32.totalorder %s36, 1
    %p468 = scmp.ne.s32.totalorder %s463, %s465
    %p469 = scmp.eq.s32.totalorder %s36, 0
    %p470 = por %p468, %p469
    %p471 = scmp.ne.s32.totalorder %s463, %s465
    %p472 = scmp.eq.s32.totalorder %s41, 1
    %p473 = por %p471, %p472
    %p474 = scmp.ne.s32.totalorder %s465, %s466
    %p475 = scmp.eq.s32.totalorder %s41, 0
    %p476 = por %p474, %p475
    %p477 = scmp.ne.s32.totalorder %s465, %s466
    %p478 = scmp.eq.s32.totalorder %s42, 1
    %p479 = por %p477, %p478
    %p481 = scmp.ne.s32.totalorder %s466, %s480
    %p482 = scmp.eq.s32.totalorder %s42, 0
    %p483 = por %p481, %p482
    %s485 = sadd.s32 %s484, 1
    %p488 = scmp.eq.s32.totalorder %s36, 1
    %p489 = scmp.ne.s32.totalorder %s484, %s486
    %p490 = scmp.eq.s32.totalorder %s36, 0
    %p491 = por %p489, %p490
    %p492 = scmp.ne.s32.totalorder %s484, %s486
    %p493 = scmp.eq.s32.totalorder %s41, 1
    %p494 = por %p492, %p493
    %p495 = scmp.ne.s32.totalorder %s486, %s487
    %p496 = scmp.eq.s32.totalorder %s41, 0
    %p497 = por %p495, %p496
    %p498 = scmp.ne.s32.totalorder %s486, %s487
    %p499 = scmp.eq.s32.totalorder %s42, 1
    %p500 = por %p498, %p499
    %p502 = scmp.ne.s32.totalorder %s487, %s501
    %p503 = scmp.eq.s32.totalorder %s42, 0
    %p504 = por %p502, %p503
    %s506 = sadd.s32 %s505, 1
    %p509 = scmp.eq.s32.totalorder %s36, 1
    %p510 = scmp.ne.s32.totalorder %s505, %s507
    %p511 = scmp.eq.s32.totalorder %s36, 0
    %p512 = por %p510, %p511
    %p513 = scmp.ne.s32.totalorder %s505, %s507
    %p514 = scmp.eq.s32.totalorder %s41, 1
    %p515 = por %p513, %p514
    %p516 = scmp.ne.s32.totalorder %s507, %s508
    %p517 = scmp.eq.s32.totalorder %s41, 0
    %p518 = por %p516, %p517
    %p519 = scmp.ne.s32.totalorder %s507, %s508
    %p520 = scmp.eq.s32.totalorder %s42, 1
    %p521 = por %p519, %p520
    %p523 = scmp.ne.s32.totalorder %s508, %s522
    %p524 = scmp.eq.s32.totalorder %s42, 0
    %p525 = por %p523, %p524
    %s527 = sadd.s32 %s526, 1
    %p530 = scmp.eq.s32.totalorder %s36, 1
    %p531 = scmp.ne.s32.totalorder %s526, %s528
    %p532 = scmp.eq.s32.totalorder %s36, 0
    %p533 = por %p531, %p532
    %p534 = scmp.ne.s32.totalorder %s526, %s528
    %p535 = scmp.eq.s32.totalorder %s41, 1
    %p536 = por %p534, %p535
    %p537 = scmp.ne.s32.totalorder %s528, %s529
    %p538 = scmp.eq.s32.totalorder %s41, 0
    %p539 = por %p537, %p538
    %p540 = scmp.ne.s32.totalorder %s528, %s529
    %p541 = scmp.eq.s32.totalorder %s42, 1
    %p542 = por %p540, %p541
    %p544 = scmp.ne.s32.totalorder %s529, %s543
    %p545 = scmp.eq.s32.totalorder %s42, 0
    %p546 = por %p544, %p545
    %s548 = sadd.s32 %s547, 1
    %p551 = scmp.eq.s32.totalorder %s36, 1
    %p552 = scmp.ne.s32.totalorder %s547, %s549
    %p553 = scmp.eq.s32.totalorder %s36, 0
    %p554 = por %p552, %p553
    %p555 = scmp.ne.s32.totalorder %s547, %s549
    %p556 = scmp.eq.s32.totalorder %s41, 1
    %p557 = por %p555, %p556
    %p558 = scmp.ne.s32.totalorder %s549, %s550
    %p559 = scmp.eq.s32.totalorder %s41, 0
    %p560 = por %p558, %p559
    %p561 = scmp.ne.s32.totalorder %s549, %s550
    %p562 = scmp.eq.s32.totalorder %s42, 1
    %p563 = por %p561, %p562
    %p565 = scmp.ne.s32.totalorder %s550, %s564
    %p566 = scmp.eq.s32.totalorder %s42, 0
    %p567 = por %p565, %p566
    %s569 = sadd.s32 %s568, 1
    %p572 = scmp.eq.s32.totalorder %s36, 1
    %p573 = scmp.ne.s32.totalorder %s568, %s570
    %p574 = scmp.eq.s32.totalorder %s36, 0
    %p575 = por %p573, %p574
    %p576 = scmp.ne.s32.totalorder %s568, %s570
    %p577 = scmp.eq.s32.totalorder %s41, 1
    %p578 = por %p576, %p577
    %p579 = scmp.ne.s32.totalorder %s570, %s571
    %p580 = scmp.eq.s32.totalorder %s41, 0
    %p581 = por %p579, %p580
    %p582 = scmp.ne.s32.totalorder %s570, %s571
    %p583 = scmp.eq.s32.totalorder %s42, 1
    %p584 = por %p582, %p583
    %p586 = scmp.ne.s32.totalorder %s571, %s585
    %p587 = scmp.eq.s32.totalorder %s42, 0
    %p588 = por %p586, %p587
    %s590 = sadd.s32 %s589, 1
    %p593 = scmp.eq.s32.totalorder %s36, 1
    %p594 = scmp.ne.s32.totalorder %s589, %s591
    %p595 = scmp.eq.s32.totalorder %s36, 0
    %p596 = por %p594, %p595
    %p597 = scmp.ne.s32.totalorder %s589, %s591
    %p598 = scmp.eq.s32.totalorder %s41, 1
    %p599 = por %p597, %p598
    %p600 = scmp.ne.s32.totalorder %s591, %s592
    %p601 = scmp.eq.s32.totalorder %s41, 0
    %p602 = por %p600, %p601
    %p603 = scmp.ne.s32.totalorder %s591, %s592
    %p604 = scmp.eq.s32.totalorder %s42, 1
    %p605 = por %p603, %p604
    %p607 = scmp.ne.s32.totalorder %s592, %s606
    %p608 = scmp.eq.s32.totalorder %s42, 0
    %p609 = por %p607, %p608
    %s611 = sadd.s32 %s610, 1
    %p614 = scmp.eq.s32.totalorder %s36, 1
    %p615 = scmp.ne.s32.totalorder %s610, %s612
    %p616 = scmp.eq.s32.totalorder %s36, 0
    %p617 = por %p615, %p616
    %p618 = scmp.ne.s32.totalorder %s610, %s612
    %p619 = scmp.eq.s32.totalorder %s41, 1
    %p620 = por %p618, %p619
    %p621 = scmp.ne.s32.totalorder %s612, %s613
    %p622 = scmp.eq.s32.totalorder %s41, 0
    %p623 = por %p621, %p622
    %p624 = scmp.ne.s32.totalorder %s612, %s613
    %p625 = scmp.eq.s32.totalorder %s42, 1
    %p626 = por %p624, %p625
    %p628 = scmp.ne.s32.totalorder %s613, %s627
    %p629 = scmp.eq.s32.totalorder %s42, 0
    %p630 = por %p628, %p629
    %s632 = sadd.s32 %s631, 1
    %p635 = scmp.eq.s32.totalorder %s36, 1
    %p636 = scmp.ne.s32.totalorder %s631, %s633
    %p637 = scmp.eq.s32.totalorder %s36, 0
    %p638 = por %p636, %p637
    %p639 = scmp.ne.s32.totalorder %s631, %s633
    %p640 = scmp.eq.s32.totalorder %s41, 1
    %p641 = por %p639, %p640
    %p642 = scmp.ne.s32.totalorder %s633, %s634
    %p643 = scmp.eq.s32.totalorder %s41, 0
    %p644 = por %p642, %p643
    %p645 = scmp.ne.s32.totalorder %s633, %s634
    %p646 = scmp.eq.s32.totalorder %s42, 1
    %p647 = por %p645, %p646
    %p649 = scmp.ne.s32.totalorder %s634, %s648
    %p650 = scmp.eq.s32.totalorder %s42, 0
    %p651 = por %p649, %p650
    %s652 = ssub.s32 %s36, %s43
    %p653 = scmp.eq.s32.totalorder %s652, 0
    %s655 = sadd.s32 %s654, 1
    %s656 = scalar_select %p653, %s654, %s655
    %p659 = pneg %p653
    %p660 = scmp.eq.s32.totalorder %s36, 1
    %p661 = por %p659, %p660
    %p662 = scmp.ne.s32.totalorder %s654, %s657
    %p663 = scmp.eq.s32.totalorder %s36, 0
    %p664 = por %p662, %p663
    %p665 = scmp.ne.s32.totalorder %s654, %s657
    %p666 = scmp.eq.s32.totalorder %s41, 1
    %p667 = por %p665, %p666
    %p668 = scmp.ne.s32.totalorder %s657, %s658
    %p669 = scmp.eq.s32.totalorder %s41, 0
    %p670 = por %p668, %p669
    %p671 = scmp.ne.s32.totalorder %s657, %s658
    %p672 = scmp.eq.s32.totalorder %s42, 1
    %p673 = por %p671, %p672
    %p675 = scmp.ne.s32.totalorder %s658, %s674
    %p676 = scmp.eq.s32.totalorder %s42, 0
    %p677 = por %p675, %p676
    %p678 = scmp.le.s32.totalorder 1, %s36
    %p679 = scmp.lt.s32.totalorder %s36, 3
    %p680 = pnand %p678, %p679
    %p681 = pneg %p680
    // Predicated region
    $region9: #{style_generator_forward.1} parent=5 // pred_check
      _
    $region10: #{style_generator_forward.1} parent=5 // pred_check_branch
      %683 = sbr.rel (%p680) target = $region12
    $region11: #{style_generator_forward.1} parent=5 // pred_region
      %s684 = ssub.s32 %s36, 1
      // Predicated region
      $region13: #{style_generator_forward.1} parent=11 // pred_check
        %p685 = pneg %p161
      $region14: #{style_generator_forward.1} parent=11 // pred_check_branch
        %687 = sbr.rel (%p685) target = $region16
      $region15: #{style_generator_forward.1} parent=11 // pred_region
        _
      $region16: #{style_generator_forward.1} parent=11 // pred_fallthru
        _
      // Predicated region
      $region17: #{style_generator_forward.1} parent=11 // pred_check
        %p688 = pneg %p182
      $region18: #{style_generator_forward.1} parent=11 // pred_check_branch
        %690 = sbr.rel (%p688) target = $region20
      $region19: #{style_generator_forward.1} parent=11 // pred_region
        _
      $region20: #{style_generator_forward.1} parent=11 // pred_fallthru
        _
      // Predicated region
      $region21: #{style_generator_forward.1} parent=11 // pred_check
        %p691 = pneg %p203
      $region22: #{style_generator_forward.1} parent=11 // pred_check_branch
        %693 = sbr.rel (%p691) target = $region24
      $region23: #{style_generator_forward.1} parent=11 // pred_region
        _
      $region24: #{style_generator_forward.1} parent=11 // pred_fallthru
        _
      // Predicated region
      $region25: #{style_generator_forward.1} parent=11 // pred_check
        %p694 = pneg %p224
      $region26: #{style_generator_forward.1} parent=11 // pred_check_branch
        %696 = sbr.rel (%p694) target = $region28
      $region27: #{style_generator_forward.1} parent=11 // pred_region
        _
      $region28: #{style_generator_forward.1} parent=11 // pred_fallthru
        _
      // Predicated region
      $region29: #{style_generator_forward.1} parent=11 // pred_check
        %p697 = pneg %p245
      $region30: #{style_generator_forward.1} parent=11 // pred_check_branch
        %699 = sbr.rel (%p697) target = $region32
      $region31: #{style_generator_forward.1} parent=11 // pred_region
        _
      $region32: #{style_generator_forward.1} parent=11 // pred_fallthru
        _
      // Predicated region
      $region33: #{style_generator_forward.1} parent=11 // pred_check
        %p700 = pneg %p266
      $region34: #{style_generator_forward.1} parent=11 // pred_check_branch
        %702 = sbr.rel (%p700) target = $region36
      $region35: #{style_generator_forward.1} parent=11 // pred_region
        _
      $region36: #{style_generator_forward.1} parent=11 // pred_fallthru
        _
      // Predicated region
      $region37: #{style_generator_forward.1} parent=11 // pred_check
        %p703 = pneg %p287
      $region38: #{style_generator_forward.1} parent=11 // pred_check_branch
        %705 = sbr.rel (%p703) target = $region40
      $region39: #{style_generator_forward.1} parent=11 // pred_region
        _
      $region40: #{style_generator_forward.1} parent=11 // pred_fallthru
        _
      // Predicated region
      $region41: #{style_generator_forward.1} parent=11 // pred_check
        %p706 = pneg %p308
      $region42: #{style_generator_forward.1} parent=11 // pred_check_branch
        %708 = sbr.rel (%p706) target = $region44
      $region43: #{style_generator_forward.1} parent=11 // pred_region
        _
      $region44: #{style_generator_forward.1} parent=11 // pred_fallthru
        _
      // Predicated region
      $region45: #{style_generator_forward.1} parent=11 // pred_check
        %p709 = pneg %p329
      $region46: #{style_generator_forward.1} parent=11 // pred_check_branch
        %711 = sbr.rel (%p709) target = $region48
      $region47: #{style_generator_forward.1} parent=11 // pred_region
        _
      $region48: #{style_generator_forward.1} parent=11 // pred_fallthru
        _
      // Predicated region
      $region49: #{style_generator_forward.1} parent=11 // pred_check
        %p712 = pneg %p350
      $region50: #{style_generator_forward.1} parent=11 // pred_check_branch
        %714 = sbr.rel (%p712) target = $region52
      $region51: #{style_generator_forward.1} parent=11 // pred_region
        _
      $region52: #{style_generator_forward.1} parent=11 // pred_fallthru
        _
      // Predicated region
      $region53: #{style_generator_forward.1} parent=11 // pred_check
        %p715 = pneg %p371
      $region54: #{style_generator_forward.1} parent=11 // pred_check_branch
        %717 = sbr.rel (%p715) target = $region56
      $region55: #{style_generator_forward.1} parent=11 // pred_region
        _
      $region56: #{style_generator_forward.1} parent=11 // pred_fallthru
        _
      // Predicated region
      $region57: #{style_generator_forward.1} parent=11 // pred_check
        %p718 = pneg %p392
      $region58: #{style_generator_forward.1} parent=11 // pred_check_branch
        %720 = sbr.rel (%p718) target = $region60
      $region59: #{style_generator_forward.1} parent=11 // pred_region
        _
      $region60: #{style_generator_forward.1} parent=11 // pred_fallthru
        _
      // Predicated region
      $region61: #{style_generator_forward.1} parent=11 // pred_check
        %p721 = pneg %p413
      $region62: #{style_generator_forward.1} parent=11 // pred_check_branch
        %723 = sbr.rel (%p721) target = $region64
      $region63: #{style_generator_forward.1} parent=11 // pred_region
        _
      $region64: #{style_generator_forward.1} parent=11 // pred_fallthru
        _
      // Predicated region
      $region65: #{style_generator_forward.1} parent=11 // pred_check
        %p724 = pneg %p434
      $region66: #{style_generator_forward.1} parent=11 // pred_check_branch
        %726 = sbr.rel (%p724) target = $region68
      $region67: #{style_generator_forward.1} parent=11 // pred_region
        _
      $region68: #{style_generator_forward.1} parent=11 // pred_fallthru
        _
      // Predicated region
      $region69: #{style_generator_forward.1} parent=11 // pred_check
        %p727 = pneg %p455
      $region70: #{style_generator_forward.1} parent=11 // pred_check_branch
        %729 = sbr.rel (%p727) target = $region72
      $region71: #{style_generator_forward.1} parent=11 // pred_region
        _
      $region72: #{style_generator_forward.1} parent=11 // pred_fallthru
        _
      // Predicated region
      $region73: #{style_generator_forward.1} parent=11 // pred_check
        %p730 = pneg %p476
      $region74: #{style_generator_forward.1} parent=11 // pred_check_branch
        %732 = sbr.rel (%p730) target = $region76
      $region75: #{style_generator_forward.1} parent=11 // pred_region
        _
      $region76: #{style_generator_forward.1} parent=11 // pred_fallthru
        _
      // Predicated region
      $region77: #{style_generator_forward.1} parent=11 // pred_check
        %p733 = pneg %p497
      $region78: #{style_generator_forward.1} parent=11 // pred_check_branch
        %735 = sbr.rel (%p733) target = $region80
      $region79: #{style_generator_forward.1} parent=11 // pred_region
        _
      $region80: #{style_generator_forward.1} parent=11 // pred_fallthru
        _
      // Predicated region
      $region81: #{style_generator_forward.1} parent=11 // pred_check
        %p736 = pneg %p518
      $region82: #{style_generator_forward.1} parent=11 // pred_check_branch
        %738 = sbr.rel (%p736) target = $region84
      $region83: #{style_generator_forward.1} parent=11 // pred_region
        _
      $region84: #{style_generator_forward.1} parent=11 // pred_fallthru
        _
      // Predicated region
      $region85: #{style_generator_forward.1} parent=11 // pred_check
        %p739 = pneg %p539
      $region86: #{style_generator_forward.1} parent=11 // pred_check_branch
        %741 = sbr.rel (%p739) target = $region88
      $region87: #{style_generator_forward.1} parent=11 // pred_region
        _
      $region88: #{style_generator_forward.1} parent=11 // pred_fallthru
        _
      // Predicated region
      $region89: #{style_generator_forward.1} parent=11 // pred_check
        %p742 = pneg %p560
      $region90: #{style_generator_forward.1} parent=11 // pred_check_branch
        %744 = sbr.rel (%p742) target = $region92
      $region91: #{style_generator_forward.1} parent=11 // pred_region
        _
      $region92: #{style_generator_forward.1} parent=11 // pred_fallthru
        _
      // Predicated region
      $region93: #{style_generator_forward.1} parent=11 // pred_check
        %p745 = pneg %p581
      $region94: #{style_generator_forward.1} parent=11 // pred_check_branch
        %747 = sbr.rel (%p745) target = $region96
      $region95: #{style_generator_forward.1} parent=11 // pred_region
        _
      $region96: #{style_generator_forward.1} parent=11 // pred_fallthru
        _
      // Predicated region
      $region97: #{style_generator_forward.1} parent=11 // pred_check
        %p748 = pneg %p602
      $region98: #{style_generator_forward.1} parent=11 // pred_check_branch
        %750 = sbr.rel (%p748) target = $region100
      $region99: #{style_generator_forward.1} parent=11 // pred_region
        _
      $region100: #{style_generator_forward.1} parent=11 // pred_fallthru
        _
      // Predicated region
      $region101: #{style_generator_forward.1} parent=11 // pred_check
        %p751 = pneg %p623
      $region102: #{style_generator_forward.1} parent=11 // pred_check_branch
        %753 = sbr.rel (%p751) target = $region104
      $region103: #{style_generator_forward.1} parent=11 // pred_region
        _
      $region104: #{style_generator_forward.1} parent=11 // pred_fallthru
        _
      // Predicated region
      $region105: #{style_generator_forward.1} parent=11 // pred_check
        %p754 = pneg %p644
      $region106: #{style_generator_forward.1} parent=11 // pred_check_branch
        %756 = sbr.rel (%p754) target = $region108
      $region107: #{style_generator_forward.1} parent=11 // pred_region
        _
      $region108: #{style_generator_forward.1} parent=11 // pred_fallthru
        _
    $region12: #{style_generator_forward.1} parent=5 // pred_fallthru
      _
    %p757 = scmp.lt.s32.totalorder %s36, 2
    // Predicated region
    $region109: #{style_generator_forward.1} parent=5 // pred_check
      %p758 = pneg %p757
    $region110: #{style_generator_forward.1} parent=5 // pred_check_branch
      %760 = sbr.rel (%p758) target = $region112
    $region111: #{style_generator_forward.1} parent=5 // pred_region
      // Predicated region
      $region113: #{style_generator_forward.1} parent=111 // pred_check
        %p761 = pneg %p56
      $region114: #{style_generator_forward.1} parent=111 // pred_check_branch
        %763 = sbr.rel (%p761) target = $region116
      $region115: #{style_generator_forward.1} parent=111 // pred_region
        %p764 = scmp.lt.s32.totalorder %s36, 1
        %s765 = scalar_select %p764, %s36, 1
        %s766 = smul.addr %s765, 16
        %s767 = smul.addr %s766, 8
        %s768 = scalar_lea.vmem %s0, %s767
      $region116: #{style_generator_forward.1} parent=111 // pred_fallthru
        _
      // Predicated region
      $region117: #{style_generator_forward.1} parent=111 // pred_check
        %p769 = pneg %p82
      $region118: #{style_generator_forward.1} parent=111 // pred_check_branch
        %771 = sbr.rel (%p769) target = $region120
      $region119: #{style_generator_forward.1} parent=111 // pred_region
        %p772 = scmp.lt.s32.totalorder %s36, 1
        %s773 = scalar_select %p772, %s36, 1
        %s774 = smul.addr %s773, 2
        %s775 = scalar_lea.vmem %s1, %s774
      $region120: #{style_generator_forward.1} parent=111 // pred_fallthru
        _
      // Predicated region
      $region121: #{style_generator_forward.1} parent=111 // pred_check
        %p776 = pneg %p108
      $region122: #{style_generator_forward.1} parent=111 // pred_check_branch
        %778 = sbr.rel (%p776) target = $region124
      $region123: #{style_generator_forward.1} parent=111 // pred_region
        %p779 = scmp.lt.s32.totalorder %s36, 1
        %s780 = scalar_select %p779, %s36, 1
        %s781 = smul.addr %s780, 2
        %s782 = scalar_lea.vmem %s2, %s781
      $region124: #{style_generator_forward.1} parent=111 // pred_fallthru
        _
      // Predicated region
      $region125: #{style_generator_forward.1} parent=111 // pred_check
        %p783 = pneg %p134
      $region126: #{style_generator_forward.1} parent=111 // pred_check_branch
        %785 = sbr.rel (%p783) target = $region128
      $region127: #{style_generator_forward.1} parent=111 // pred_region
        %p786 = scmp.lt.s32.totalorder %s36, 1
        %s787 = scalar_select %p786, %s36, 1
        %s788 = smul.addr %s787, 2
        %s789 = smul.addr %s788, 2
        %s790 = scalar_lea.vmem %s3, %s789
      $region128: #{style_generator_forward.1} parent=111 // pred_fallthru
        _
    $region112: #{style_generator_forward.1} parent=5 // pred_fallthru
      _
    %p791 = scmp.le.s32.totalorder 1, %s36
    %p792 = scmp.lt.s32.totalorder %s36, 3
    %p793 = pnand %p791, %p792
    %p794 = pneg %p793
    // Predicated region
    $region129: #{style_generator_forward.1} parent=5 // pred_check
      _
    $region130: #{style_generator_forward.1} parent=5 // pred_check_branch
      %796 = sbr.rel (%p793) target = $region132
    $region131: #{style_generator_forward.1} parent=5 // pred_region
      %s797 = ssub.s32 %s36, 1
      %p798 = scmp.lt.s32.totalorder %s41, 1
      %s799 = scalar_select %p798, %s41, 1
      %s800 = smul.addr %s799, 16
      %s801 = smul.addr %s800, 8
      %s802 = scalar_lea.vmem %s0, %s801
      %p803 = pneg %p62
      %p804 = pneg %p59
      %p805 = scmp.lt.s32.totalorder %s41, 1
      %s806 = scalar_select %p805, %s41, 1
      %s807 = smul.addr %s806, 2
      %s808 = scalar_lea.vmem %s1, %s807
      %p809 = pneg %p88
      %p810 = pneg %p85
      %p811 = scmp.lt.s32.totalorder %s41, 1
      %s812 = scalar_select %p811, %s41, 1
      %s813 = smul.addr %s812, 2
      %s814 = scalar_lea.vmem %s2, %s813
      %p815 = pneg %p114
      %p816 = pneg %p111
      %p817 = scmp.lt.s32.totalorder %s41, 1
      %s818 = scalar_select %p817, %s41, 1
      %s819 = smul.addr %s818, 2
      %s820 = smul.addr %s819, 2
      %s821 = scalar_lea.vmem %s3, %s820
      %p822 = pneg %p140
      %p823 = pneg %p137
      %p824 = pneg %p161
      %p825 = pneg %p158
      %p826 = pneg %p182
      %p827 = pneg %p179
      %p828 = pneg %p203
      %p829 = pneg %p200
      %p830 = pneg %p224
      %p831 = pneg %p221
      %p832 = pneg %p245
      %p833 = pneg %p242
      %p834 = pneg %p266
      %p835 = pneg %p263
      %p836 = pneg %p287
      %p837 = pneg %p284
      %p838 = pneg %p308
      %p839 = pneg %p305
      %p840 = pneg %p329
      %p841 = pneg %p326
      %p842 = pneg %p350
      %p843 = pneg %p347
      %p844 = pneg %p371
      %p845 = pneg %p368
      %p846 = pneg %p392
      %p847 = pneg %p389
      %p848 = pneg %p413
      %p849 = pneg %p410
      %p850 = pneg %p434
      %p851 = pneg %p431
      %p852 = pneg %p455
      %p853 = pneg %p452
      %p854 = pneg %p476
      %p855 = pneg %p473
      %p856 = pneg %p497
      %p857 = pneg %p494
      %p858 = pneg %p518
      %p859 = pneg %p515
      %p860 = pneg %p539
      %p861 = pneg %p536
      %p862 = pneg %p560
      %p863 = pneg %p557
      %p864 = pneg %p581
      %p865 = pneg %p578
      %p866 = pneg %p602
      %p867 = pneg %p599
      %p868 = pneg %p623
      %p869 = pneg %p620
      %p870 = pneg %p644
      %p871 = pneg %p641
      %p872 = pneg %p670
      %p873 = pneg %p667
      %p874 = scmp.lt.s32.totalorder %s41, 1
      %s875 = scalar_select %p874, %s41, 1
      %s876 = smul.addr %s875, 2
      %s877 = scalar_lea.vmem %s28, %s876
      %p878 = scmp.lt.s32.totalorder %s41, 1
      %s879 = scalar_select %p878, %s41, 1
      %s880 = smul.addr %s879, 16
      %s881 = smul.addr %s880, 8
      %s882 = scalar_lea.vmem %s0, %s881
      %p883 = scmp.lt.s32.totalorder %s41, 1
      %s884 = scalar_select %p883, %s41, 1
      %s885 = smul.addr %s884, 2
      %s886 = scalar_lea.vmem %s1, %s885
      %p887 = scmp.lt.s32.totalorder %s41, 1
      %s888 = scalar_select %p887, %s41, 1
      %s889 = smul.addr %s888, 2
      %s890 = scalar_lea.vmem %s2, %s889
      %p891 = scmp.lt.s32.totalorder %s41, 1
      %s892 = scalar_select %p891, %s41, 1
      %s893 = smul.addr %s892, 2
      %s894 = smul.addr %s893, 2
      %s895 = scalar_lea.vmem %s3, %s894
      %p896 = scmp.lt.s32.totalorder %s41, 1
      %s897 = scalar_select %p896, %s41, 1
      %s898 = smul.addr %s897, 2
      %s899 = scalar_lea.vmem %s28, %s898
      %v901 = vld [vmem:[%s882] sm:$0xff]
      %v902 = vld [vmem:[%s882 + $0x8] sm:$0xff]
      %v903 = vld [vmem:[%s882 + $0x10] sm:$0xff]
      %v904 = vld [vmem:[%s882 + $0x18] sm:$0xff]
      %v905 = vld [vmem:[%s882 + $0x20] sm:$0xff]
      %v906 = vld [vmem:[%s882 + $0x28] sm:$0xff]
      %v907 = vld [vmem:[%s882 + $0x30] sm:$0xff]
      %v908 = vld [vmem:[%s882 + $0x38] sm:$0xff]
      %v909 = vld [vmem:[%s882 + $0x40] sm:$0xff]
      %v910 = vld [vmem:[%s882 + $0x48] sm:$0xff]
      %v911 = vld [vmem:[%s882 + $0x50] sm:$0xff]
      %v912 = vld [vmem:[%s882 + $0x58] sm:$0xff]
      %v913 = vld [vmem:[%s882 + $0x60] sm:$0xff]
      %v914 = vld [vmem:[%s882 + $0x68] sm:$0xff]
      %v915 = vld [vmem:[%s882 + $0x70] sm:$0xff]
      %v916 = vld [vmem:[%s882 + $0x78] sm:$0xff]
      %v917 = vld [vmem:[%s7] sm:$0xff]
      %v918 = vld [vmem:[%s7 + $0x8] sm:$0xff]
      %v919 = vld [vmem:[%s886] sm:$0x1]
      %v920 = vld [vmem:[%s20] sm:$0xff]
      %v921 = vld [vmem:[%s20 + $0x8] sm:$0xff]
      %923 = vset.pattern.permute.xlu0 0
      %924 = vperm.xlu0 %923, %v920
      %v925 = vpop.permute.xlu0 %924
      %928 = vset.pattern.permute.xlu0 0
      %929 = vperm.xlu0 %928, %v921
      %v930 = vpop.permute.xlu0 %929
      %v932 = vperm.slane %v919, 0
      %v933 = vmul.f32 %v925, %v932
      %v934 = vmul.f32 %v930, %v932
      %v935 = vadd.f32 %v917, %v933
      %v936 = vadd.f32 %v918, %v934
      %vm937 = vcmp.ge.f32.partialorder %v935, 0.0
      %vm938 = vcmp.ge.f32.partialorder %v936, 0.0
      %v939 = vmul.f32 %v935, 0.2
      %v940 = vmul.f32 %v936, 0.2
      %v941 = vsel %vm937, %v935, %v939
      %v942 = vsel %vm938, %v936, %v940
      %vm943 = vcmask 130048
      %v944 = vsel %vm943, %v941, 0.0
      %945 = vadd.xlane.f32.xlu0 %v944
      %v946 = vpop.xlane.xlu0 %945
      %v947 = vsel %vm943, %v942, 0.0
      %948 = vadd.xlane.f32.xlu0 %v947
      %v949 = vpop.xlane.xlu0 %948
      %v950 = vrcp.pop 16.0
      %v951 = vmul.f32 16.0, %v950
      %v952 = vsub.f32 1.0, %v951
      %v953 = vmul.f32 %v950, %v952
      %v954 = vadd.f32 %v950, %v953
      %vm955 = vweird.f32 %v950
      %v956 = vsel %vm955, %v950, %v954
      %v957 = vmul.f32 %v946, %v956
      %v958 = vmul.f32 %v949, %v956
      %v959 = vsub.f32 %v941, %v957
      %v960 = vsub.f32 %v942, %v958
      %v961 = vmul.f32 %v959, %v959
      %v962 = vmul.f32 %v960, %v960
      %v963 = vsel %vm943, %v961, 0.0
      %964 = vadd.xlane.f32.xlu0 %v963
      %v965 = vpop.xlane.xlu0 %964
      %v966 = vsel %vm943, %v962, 0.0
      %967 = vadd.xlane.f32.xlu0 %v966
      %v968 = vpop.xlane.xlu0 %967
      %v969 = vmul.f32 %v965, %v956
      %v970 = vmul.f32 %v968, %v956
      %v971 = vadd.f32 %v969, 1e-05
      %v972 = vadd.f32 %v970, 1e-05
      %v973 = vrsqrt.pop %v971
      %v974 = vmul.f32 %v973, %v971
      %v975 = vmul.f32 %v974, %v973
      %v976 = vmul.f32 0.5, %v975
      %v977 = vsub.f32 1.5, %v976
      %v978 = vmul.f32 %v973, %v977
      %vm979 = vweird.f32 %v971
      %vm980 = vweird.f32 %v973
      %vm981 = vmor %vm979, %vm980
      %v982 = vsel %vm981, %v973, %v978
      %v983 = vrsqrt.pop %v972
      %v984 = vmul.f32 %v983, %v972
      %v985 = vmul.f32 %v984, %v983
      %v986 = vmul.f32 0.5, %v985
      %v987 = vsub.f32 1.5, %v986
      %v988 = vmul.f32 %v983, %v987
      %vm989 = vweird.f32 %v972
      %vm990 = vweird.f32 %v983
      %vm991 = vmor %vm989, %vm990
      %v992 = vsel %vm991, %v983, %v988
      %v993 = vmul.f32 %v959, %v982
      %v994 = vmul.f32 %v960, %v992
      %v995 = vadd.f32 %v901, 1.0
      %v996 = vadd.f32 %v902, 1.0
      %998 = vset.pattern.permute.xlu0 0
      %999 = vperm.xlu0 %998, %v995
      %v1000 = vpop.permute.xlu0 %999
      %1003 = vset.pattern.permute.xlu0 0
      %1004 = vperm.xlu0 %1003, %v996
      %v1005 = vpop.permute.xlu0 %1004
      %v1007 = vmul.f32 %v993, %v1000
      %v1008 = vmul.f32 %v994, %v1005
      %1010 = vset.pattern.permute.xlu0 0
      %1011 = vperm.xlu0 %1010, %v903
      %v1012 = vpop.permute.xlu0 %1011
      %1015 = vset.pattern.permute.xlu0 0
      %1016 = vperm.xlu0 %1015, %v904
      %v1017 = vpop.permute.xlu0 %1016
      %v1019 = vadd.f32 %v1007, %v1012
      %v1020 = vadd.f32 %v1008, %v1017
      %v1021 = vld [vmem:[%s4] sm:$0x3]
      %1024 = vrot.lane.b32.xlu0 %v1019, 5
      %v1025 = vpop.permute.xlu0 %1024
      %1026 = vrot.lane.b32.xlu0 %v1020, 5
      %v1027 = vpop.permute.xlu0 %1026
      %vm1030 = vcmask 39936
      %v1031 = vsel %vm1030, 0.0, %v1025
      %v1032 = vsel %vm1030, 0.0, %v1027
      %v1033 = vperm.slane %v1021, 0
      %v1034 = vmul.f32 %v1031, %v1033
      %v1035 = vmul.f32 %v1032, %v1033
      %v1036 = vld [vmem:[%s10] sm:$0xf]
      %v1037 = vld [vmem:[%s10 + $0x4] sm:$0xf]
      %v1038 = vpack.c.bf16 %v1035, %v1034
      %1039 = vrot.lane.b32.xlu0 %v1019, 4
      %v1040 = vpop.permute.xlu0 %1039
      %1041 = vrot.lane.b32.xlu0 %v1020, 4
      %v1042 = vpop.permute.xlu0 %1041
      %vm1045 = vcmask 31744
      %v1046 = vsel %vm1045, 0.0, %v1040
      %v1047 = vsel %vm1045, 0.0, %v1042
      %s1048 = scalar_lea.vmem %s10, 8
      %v1049 = vld [vmem:[%s1048] sm:$0xf]
      %v1050 = vld [vmem:[%s1048 + $0x4] sm:$0xf]
      %v1051 = vpack.c.bf16 %v1047, %v1046
      %v1054 = vunpack.c.l.b16 %v1049
      %v1055 = vunpack.c.l.b16 %v1050
      %v1056 = vpack.c.b16 %v1055, %v1054
      %v1058 = vsel %vm943, %v1056, 0
      %1060 = vmatpush.bf16.msra.mxu0 0
      %1061 = vmatpush.bf16.msra.mxu0 0
      %1062 = vmatpush.bf16.msra.mxu0 0
      %1063 = vmatpush.bf16.msra.mxu0 0
      %1064 = vmatpush.bf16.msra.mxu0 0
      %1065 = vmatpush.bf16.msra.mxu0 0
      %1066 = vmatpush.bf16.msra.mxu0 0
      %1067 = vmatpush.bf16.msra.mxu0 %v1051
      %1068 = vmatmul.bf16.gmra.mxu0 %v1058
      %v1069 = vpop.f32.mrf.mxu0
      %v1070 = vadd.f32 0.0, %v1069
      %v1071 = vpop.f32.mrf.mxu0
      %v1072 = vadd.f32 0.0, %v1071
      %1073 = vdwg.mxu0
      %v1076 = vunpack.c.l.b16 %v1036
      %v1077 = vunpack.c.l.b16 %v1037
      %v1078 = vpack.c.b16 %v1077, %v1076
      %v1080 = vsel %vm943, %v1078, 0
      %1082 = vmatpush.bf16.msra.mxu0 0
      %1083 = vmatpush.bf16.msra.mxu0 0
      %1084 = vmatpush.bf16.msra.mxu0 0
      %1085 = vmatpush.bf16.msra.mxu0 0
      %1086 = vmatpush.bf16.msra.mxu0 0
      %1087 = vmatpush.bf16.msra.mxu0 0
      %1088 = vmatpush.bf16.msra.mxu0 0
      %1089 = vmatpush.bf16.msra.mxu0 %v1038
      %1090 = vmatmul.bf16.gmra.mxu0 %v1080
      %v1091 = vpop.f32.mrf.mxu0
      %v1092 = vadd.f32 %v1070, %v1091
      %v1093 = vpop.f32.mrf.mxu0
      %v1094 = vadd.f32 %v1072, %v1093
      %1095 = vdwg.mxu0
      %1096 = vrot.lane.b32.xlu0 %v1019, 3
      %v1097 = vpop.permute.xlu0 %1096
      %1098 = vrot.lane.b32.xlu0 %v1020, 3
      %v1099 = vpop.permute.xlu0 %1098
      %vm1102 = vcmask 23552
      %v1103 = vsel %vm1102, 0.0, %v1097
      %v1104 = vsel %vm1102, 0.0, %v1099
      %v1105 = vperm.slane %v1021, 1
      %v1106 = vmul.f32 %v1103, %v1105
      %v1107 = vmul.f32 %v1104, %v1105
      %s1108 = scalar_lea.vmem %s10, 16
      %v1109 = vld [vmem:[%s1108] sm:$0xf]
      %v1110 = vld [vmem:[%s1108 + $0x4] sm:$0xf]
      %v1111 = vpack.c.bf16 %v1107, %v1106
      %v1114 = vunpack.c.l.b16 %v1109
      %v1115 = vunpack.c.l.b16 %v1110
      %v1116 = vpack.c.b16 %v1115, %v1114
      %v1118 = vsel %vm943, %v1116, 0
      %1120 = vmatpush.bf16.msra.mxu0 0
      %1121 = vmatpush.bf16.msra.mxu0 0
      %1122 = vmatpush.bf16.msra.mxu0 0
      %1123 = vmatpush.bf16.msra.mxu0 0
      %1124 = vmatpush.bf16.msra.mxu0 0
      %1125 = vmatpush.bf16.msra.mxu0 0
      %1126 = vmatpush.bf16.msra.mxu0 0
      %1127 = vmatpush.bf16.msra.mxu0 %v1111
      %1128 = vmatmul.bf16.gmra.mxu0 %v1118
      %v1129 = vpop.f32.mrf.mxu0
      %v1130 = vadd.f32 0.0, %v1129
      %v1131 = vpop.f32.mrf.mxu0
      %v1132 = vadd.f32 0.0, %v1131
      %1133 = vdwg.mxu0
      %v1134 = vadd.f32 %v1092, %v1130
      %v1135 = vadd.f32 %v1094, %v1132
      %1136 = vrot.lane.b32.xlu0 %v1019, 1
      %v1137 = vpop.permute.xlu0 %1136
      %1138 = vrot.lane.b32.xlu0 %v1020, 1
      %v1139 = vpop.permute.xlu0 %1138
      %vm1142 = vcmask 7168
      %v1143 = vsel %vm1142, 0.0, %v1137
      %v1144 = vsel %vm1142, 0.0, %v1139
      %v1145 = vmul.f32 %v1143, %v1033
      %v1146 = vmul.f32 %v1144, %v1033
      %s1147 = scalar_lea.vmem %s10, 24
      %v1148 = vld [vmem:[%s1147] sm:$0xf]
      %v1149 = vld [vmem:[%s1147 + $0x4] sm:$0xf]
      %v1150 = vpack.c.bf16 %v1146, %v1145
      %v1153 = vunpack.c.l.b16 %v1148
      %v1154 = vunpack.c.l.b16 %v1149
      %v1155 = vpack.c.b16 %v1154, %v1153
      %v1157 = vsel %vm943, %v1155, 0
      %1159 = vmatpush.bf16.msra.mxu0 0
      %1160 = vmatpush.bf16.msra.mxu0 0
      %1161 = vmatpush.bf16.msra.mxu0 0
      %1162 = vmatpush.bf16.msra.mxu0 0
      %1163 = vmatpush.bf16.msra.mxu0 0
      %1164 = vmatpush.bf16.msra.mxu0 0
      %1165 = vmatpush.bf16.msra.mxu0 0
      %1166 = vmatpush.bf16.msra.mxu0 %v1150
      %1167 = vmatmul.bf16.gmra.mxu0 %v1157
      %v1168 = vpop.f32.mrf.mxu0
      %v1169 = vadd.f32 0.0, %v1168
      %v1170 = vpop.f32.mrf.mxu0
      %v1171 = vadd.f32 0.0, %v1170
      %1172 = vdwg.mxu0
      %v1173 = vadd.f32 %v1134, %v1169
      %v1174 = vadd.f32 %v1135, %v1171
      %s1175 = scalar_lea.vmem %s10, 32
      %v1176 = vld [vmem:[%s1175] sm:$0xf]
      %v1177 = vld [vmem:[%s1175 + $0x4] sm:$0xf]
      %v1178 = vpack.c.bf16 %v1020, %v1019
      %v1181 = vunpack.c.l.b16 %v1176
      %v1182 = vunpack.c.l.b16 %v1177
      %v1183 = vpack.c.b16 %v1182, %v1181
      %v1185 = vsel %vm943, %v1183, 0
      %1187 = vmatpush.bf16.msra.mxu0 0
      %1188 = vmatpush.bf16.msra.mxu0 0
      %1189 = vmatpush.bf16.msra.mxu0 0
      %1190 = vmatpush.bf16.msra.mxu0 0
      %1191 = vmatpush.bf16.msra.mxu0 0
      %1192 = vmatpush.bf16.msra.mxu0 0
      %1193 = vmatpush.bf16.msra.mxu0 0
      %1194 = vmatpush.bf16.msra.mxu0 %v1178
      %1195 = vmatmul.bf16.gmra.mxu0 %v1185
      %v1196 = vpop.f32.mrf.mxu0
      %v1197 = vadd.f32 0.0, %v1196
      %v1198 = vpop.f32.mrf.mxu0
      %v1199 = vadd.f32 0.0, %v1198
      %1200 = vdwg.mxu0
      %v1201 = vadd.f32 %v1173, %v1197
      %v1202 = vadd.f32 %v1174, %v1199
      %1203 = vrot.lane.b32.xlu0 %v1019, 127
      %v1204 = vpop.permute.xlu0 %1203
      %1205 = vrot.lane.b32.xlu0 %v1020, 127
      %v1206 = vpop.permute.xlu0 %1205
      %vm1209 = vcmask 121856
      %v1210 = vsel %vm1209, %v1204, 0.0
      %v1211 = vsel %vm1209, %v1206, 0.0
      %v1212 = vmul.f32 %v1210, %v1105
      %v1213 = vmul.f32 %v1211, %v1105
      %s1214 = scalar_lea.vmem %s10, 40
      %v1215 = vld [vmem:[%s1214] sm:$0xf]
      %v1216 = vld [vmem:[%s1214 + $0x4] sm:$0xf]
      %v1217 = vpack.c.bf16 %v1213, %v1212
      %v1220 = vunpack.c.l.b16 %v1215
      %v1221 = vunpack.c.l.b16 %v1216
      %v1222 = vpack.c.b16 %v1221, %v1220
      %v1224 = vsel %vm943, %v1222, 0
      %1226 = vmatpush.bf16.msra.mxu0 0
      %1227 = vmatpush.bf16.msra.mxu0 0
      %1228 = vmatpush.bf16.msra.mxu0 0
      %1229 = vmatpush.bf16.msra.mxu0 0
      %1230 = vmatpush.bf16.msra.mxu0 0
      %1231 = vmatpush.bf16.msra.mxu0 0
      %1232 = vmatpush.bf16.msra.mxu0 0
      %1233 = vmatpush.bf16.msra.mxu0 %v1217
      %1234 = vmatmul.bf16.gmra.mxu0 %v1224
      %v1235 = vpop.f32.mrf.mxu0
      %v1236 = vadd.f32 0.0, %v1235
      %v1237 = vpop.f32.mrf.mxu0
      %v1238 = vadd.f32 0.0, %v1237
      %1239 = vdwg.mxu0
      %v1240 = vadd.f32 %v1201, %v1236
      %v1241 = vadd.f32 %v1202, %v1238
      %1242 = vrot.lane.b32.xlu0 %v1019, 125
      %v1243 = vpop.permute.xlu0 %1242
      %1244 = vrot.lane.b32.xlu0 %v1020, 125
      %v1245 = vpop.permute.xlu0 %1244
      %vm1248 = vcmask 105472
      %v1249 = vsel %vm1248, %v1243, 0.0
      %v1250 = vsel %vm1248, %v1245, 0.0
      %v1251 = vmul.f32 %v1249, %v1033
      %v1252 = vmul.f32 %v1250, %v1033
      %s1253 = scalar_lea.vmem %s10, 48
      %v1254 = vld [vmem:[%s1253] sm:$0xf]
      %v1255 = vld [vmem:[%s1253 + $0x4] sm:$0xf]
      %v1256 = vpack.c.bf16 %v1252, %v1251
      %v1259 = vunpack.c.l.b16 %v1254
      %v1260 = vunpack.c.l.b16 %v1255
      %v1261 = vpack.c.b16 %v1260, %v1259
      %v1263 = vsel %vm943, %v1261, 0
      %1265 = vmatpush.bf16.msra.mxu0 0
      %1266 = vmatpush.bf16.msra.mxu0 0
      %1267 = vmatpush.bf16.msra.mxu0 0
      %1268 = vmatpush.bf16.msra.mxu0 0
      %1269 = vmatpush.bf16.msra.mxu0 0
      %1270 = vmatpush.bf16.msra.mxu0 0
      %1271 = vmatpush.bf16.msra.mxu0 0
      %1272 = vmatpush.bf16.msra.mxu0 %v1256
      %1273 = vmatmul.bf16.gmra.mxu0 %v1263
      %v1274 = vpop.f32.mrf.mxu0
      %v1275 = vadd.f32 0.0, %v1274
      %v1276 = vpop.f32.mrf.mxu0
      %v1277 = vadd.f32 0.0, %v1276
      %1278 = vdwg.mxu0
      %v1279 = vadd.f32 %v1240, %v1275
      %v1280 = vadd.f32 %v1241, %v1277
      %1281 = vrot.lane.b32.xlu0 %v1019, 124
      %v1282 = vpop.permute.xlu0 %1281
      %1283 = vrot.lane.b32.xlu0 %v1020, 124
      %v1284 = vpop.permute.xlu0 %1283
      %vm1287 = vcmask 97280
      %v1288 = vsel %vm1287, %v1282, 0.0
      %v1289 = vsel %vm1287, %v1284, 0.0
      %s1290 = scalar_lea.vmem %s10, 56
      %v1291 = vld [vmem:[%s1290] sm:$0xf]
      %v1292 = vld [vmem:[%s1290 + $0x4] sm:$0xf]
      %v1293 = vpack.c.bf16 %v1289, %v1288
      %v1296 = vunpack.c.l.b16 %v1291
      %v1297 = vunpack.c.l.b16 %v1292
      %v1298 = vpack.c.b16 %v1297, %v1296
      %v1300 = vsel %vm943, %v1298, 0
      %1302 = vmatpush.bf16.msra.mxu0 0
      %1303 = vmatpush.bf16.msra.mxu0 0
      %1304 = vmatpush.bf16.msra.mxu0 0
      %1305 = vmatpush.bf16.msra.mxu0 0
      %1306 = vmatpush.bf16.msra.mxu0 0
      %1307 = vmatpush.bf16.msra.mxu0 0
      %1308 = vmatpush.bf16.msra.mxu0 0
      %1309 = vmatpush.bf16.msra.mxu0 %v1293
      %1310 = vmatmul.bf16.gmra.mxu0 %v1300
      %v1311 = vpop.f32.mrf.mxu0
      %v1312 = vadd.f32 0.0, %v1311
      %v1313 = vpop.f32.mrf.mxu0
      %v1314 = vadd.f32 0.0, %v1313
      %1315 = vdwg.mxu0
      %v1316 = vadd.f32 %v1279, %v1312
      %v1317 = vadd.f32 %v1280, %v1314
      %1318 = vrot.lane.b32.xlu0 %v1019, 123
      %v1319 = vpop.permute.xlu0 %1318
      %1320 = vrot.lane.b32.xlu0 %v1020, 123
      %v1321 = vpop.permute.xlu0 %1320
      %vm1324 = vcmask 89088
      %v1325 = vsel %vm1324, %v1319, 0.0
      %v1326 = vsel %vm1324, %v1321, 0.0
      %v1327 = vmul.f32 %v1325, %v1105
      %v1328 = vmul.f32 %v1326, %v1105
      %s1329 = scalar_lea.vmem %s10, 64
      %v1330 = vld [vmem:[%s1329] sm:$0xf]
      %v1331 = vld [vmem:[%s1329 + $0x4] sm:$0xf]
      %v1332 = vpack.c.bf16 %v1328, %v1327
      %v1335 = vunpack.c.l.b16 %v1330
      %v1336 = vunpack.c.l.b16 %v1331
      %v1337 = vpack.c.b16 %v1336, %v1335
      %v1339 = vsel %vm943, %v1337, 0
      %1341 = vmatpush.bf16.msra.mxu0 0
      %1342 = vmatpush.bf16.msra.mxu0 0
      %1343 = vmatpush.bf16.msra.mxu0 0
      %1344 = vmatpush.bf16.msra.mxu0 0
      %1345 = vmatpush.bf16.msra.mxu0 0
      %1346 = vmatpush.bf16.msra.mxu0 0
      %1347 = vmatpush.bf16.msra.mxu0 0
      %1348 = vmatpush.bf16.msra.mxu0 %v1332
      %1349 = vmatmul.bf16.gmra.mxu0 %v1339
      %v1350 = vpop.f32.mrf.mxu0
      %v1351 = vadd.f32 0.0, %v1350
      %v1352 = vpop.f32.mrf.mxu0
      %v1353 = vadd.f32 0.0, %v1352
      %1354 = vdwg.mxu0
      %v1355 = vadd.f32 %v1316, %v1351
      %v1356 = vadd.f32 %v1317, %v1353
      %v1357 = vld [vmem:[%s15] sm:$0xff]
      %v1358 = vld [vmem:[%s15 + $0x8] sm:$0xff]
      %1360 = vset.pattern.permute.xlu0 0
      %1361 = vperm.xlu0 %1360, %v1357
      %v1362 = vpop.permute.xlu0 %1361
      %1365 = vset.pattern.permute.xlu0 0
      %1366 = vperm.xlu0 %1365, %v1358
      %v1367 = vpop.permute.xlu0 %1366
      %v1369 = vadd.f32 %v1355, %v1362
      %v1370 = vadd.f32 %v1356, %v1367
      %v1371 = vld [vmem:[%s886 + $0x1] sm:$0x1]
      %v1372 = vld [vmem:[%s21] sm:$0xff]
      %v1373 = vld [vmem:[%s21 + $0x8] sm:$0xff]
      %1375 = vset.pattern.permute.xlu0 0
      %1376 = vperm.xlu0 %1375, %v1372
      %v1377 = vpop.permute.xlu0 %1376
      %1380 = vset.pattern.permute.xlu0 0
      %1381 = vperm.xlu0 %1380, %v1373
      %v1382 = vpop.permute.xlu0 %1381
      %v1384 = vperm.slane %v1371, 0
      %v1385 = vmul.f32 %v1377, %v1384
      %v1386 = vmul.f32 %v1382, %v1384
      %v1387 = vadd.f32 %v1369, %v1385
      %v1388 = vadd.f32 %v1370, %v1386
      %vm1389 = vcmp.ge.f32.partialorder %v1387, 0.0
      %vm1390 = vcmp.ge.f32.partialorder %v1388, 0.0
      %v1391 = vmul.f32 %v1387, 0.2
      %v1392 = vmul.f32 %v1388, 0.2
      %v1393 = vsel %vm1389, %v1387, %v1391
      %v1394 = vsel %vm1390, %v1388, %v1392
      %v1395 = vsel %vm943, %v1393, 0.0
      %1396 = vadd.xlane.f32.xlu0 %v1395
      %v1397 = vpop.xlane.xlu0 %1396
      %v1398 = vsel %vm943, %v1394, 0.0
      %1399 = vadd.xlane.f32.xlu0 %v1398
      %v1400 = vpop.xlane.xlu0 %1399
      %v1401 = vmul.f32 %v1397, %v956
      %v1402 = vmul.f32 %v1400, %v956
      %v1403 = vsub.f32 %v1393, %v1401
      %v1404 = vsub.f32 %v1394, %v1402
      %v1405 = vmul.f32 %v1403, %v1403
      %v1406 = vmul.f32 %v1404, %v1404
      %v1407 = vsel %vm943, %v1405, 0.0
      %1408 = vadd.xlane.f32.xlu0 %v1407
      %v1409 = vpop.xlane.xlu0 %1408
      %v1410 = vsel %vm943, %v1406, 0.0
      %1411 = vadd.xlane.f32.xlu0 %v1410
      %v1412 = vpop.xlane.xlu0 %1411
      %v1413 = vmul.f32 %v1409, %v956
      %v1414 = vmul.f32 %v1412, %v956
      %v1415 = vadd.f32 %v1413, 1e-05
      %v1416 = vadd.f32 %v1414, 1e-05
      %v1417 = vrsqrt.pop %v1415
      %v1418 = vmul.f32 %v1417, %v1415
      %v1419 = vmul.f32 %v1418, %v1417
      %v1420 = vmul.f32 0.5, %v1419
      %v1421 = vsub.f32 1.5, %v1420
      %v1422 = vmul.f32 %v1417, %v1421
      %vm1423 = vweird.f32 %v1415
      %vm1424 = vweird.f32 %v1417
      %vm1425 = vmor %vm1423, %vm1424
      %v1426 = vsel %vm1425, %v1417, %v1422
      %v1427 = vrsqrt.pop %v1416
      %v1428 = vmul.f32 %v1427, %v1416
      %v1429 = vmul.f32 %v1428, %v1427
      %v1430 = vmul.f32 0.5, %v1429
      %v1431 = vsub.f32 1.5, %v1430
      %v1432 = vmul.f32 %v1427, %v1431
      %vm1433 = vweird.f32 %v1416
      %vm1434 = vweird.f32 %v1427
      %vm1435 = vmor %vm1433, %vm1434
      %v1436 = vsel %vm1435, %v1427, %v1432
      %v1437 = vmul.f32 %v1403, %v1426
      %v1438 = vmul.f32 %v1404, %v1436
      %v1439 = vadd.f32 %v905, 1.0
      %v1440 = vadd.f32 %v906, 1.0
      %1442 = vset.pattern.permute.xlu0 0
      %1443 = vperm.xlu0 %1442, %v1439
      %v1444 = vpop.permute.xlu0 %1443
      %1447 = vset.pattern.permute.xlu0 0
      %1448 = vperm.xlu0 %1447, %v1440
      %v1449 = vpop.permute.xlu0 %1448
      %v1451 = vmul.f32 %v1437, %v1444
      %v1452 = vmul.f32 %v1438, %v1449
      %1454 = vset.pattern.permute.xlu0 0
      %1455 = vperm.xlu0 %1454, %v907
      %v1456 = vpop.permute.xlu0 %1455
      %1459 = vset.pattern.permute.xlu0 0
      %1460 = vperm.xlu0 %1459, %v908
      %v1461 = vpop.permute.xlu0 %1460
      %v1463 = vadd.f32 %v1451, %v1456
      %v1464 = vadd.f32 %v1452, %v1461
      %v1465 = vpack.c.bf16 %v1464, %v1463
      %v1466 = vld [vmem:[%s8] sm:$0xf]
      %v1467 = vld [vmem:[%s8 + $0x4] sm:$0xf]
      %v1470 = vunpack.c.l.b16 %v1466
      %v1471 = vunpack.c.l.b16 %v1467
      %v1472 = vpack.c.b16 %v1471, %v1470
      %v1475 = vsel %vm943, %v1465, 0
      %1477 = vmatpush.bf16.msra.mxu0 0
      %1478 = vmatpush.bf16.msra.mxu0 0
      %1479 = vmatpush.bf16.msra.mxu0 0
      %1480 = vmatpush.bf16.msra.mxu0 0
      %1481 = vmatpush.bf16.msra.mxu0 0
      %1482 = vmatpush.bf16.msra.mxu0 0
      %1483 = vmatpush.bf16.msra.mxu0 0
      %1484 = vmatpush.bf16.msra.mxu0 %v1472
      %1485 = vmatmul.bf16.gmra.mxu0 %v1475
      %v1486 = vpop.f32.mrf.mxu0
      %v1487 = vadd.f32 0.0, %v1486
      %v1488 = vpop.f32.mrf.mxu0
      %v1489 = vadd.f32 0.0, %v1488
      %1490 = vdwg.mxu0
      %v1491 = vld [vmem:[%s5] sm:$0x3]
      %1494 = vrot.lane.b32.xlu0 %v1487, 9
      %v1495 = vpop.permute.xlu0 %1494
      %1496 = vrot.lane.b32.xlu0 %v1489, 9
      %v1497 = vpop.permute.xlu0 %1496
      %vm1500 = vcmask 72704
      %v1501 = vsel %vm1500, 0.0, %v1495
      %v1502 = vsel %vm1500, 0.0, %v1497
      %v1503 = vperm.slane %v1491, 0
      %v1504 = vmul.f32 %v1501, %v1503
      %v1505 = vmul.f32 %v1502, %v1503
      %v1506 = vld [vmem:[%s11] sm:$0xf]
      %v1507 = vpack.c.bf16 %v1505, %v1504
      %1508 = vrot.lane.b32.xlu0 %v1487, 8
      %v1509 = vpop.permute.xlu0 %1508
      %1510 = vrot.lane.b32.xlu0 %v1489, 8
      %v1511 = vpop.permute.xlu0 %1510
      %vm1514 = vcmask 64512
      %v1515 = vsel %vm1514, 0.0, %v1509
      %v1516 = vsel %vm1514, 0.0, %v1511
      %s1517 = scalar_lea.vmem %s11, 4
      %v1518 = vld [vmem:[%s1517] sm:$0xf]
      %v1519 = vpack.c.bf16 %v1516, %v1515
      %v1521 = vsel %vm943, %v1518, 0
      %1523 = vmatpush.bf16.msra.mxu0 0
      %1524 = vmatpush.bf16.msra.mxu0 0
      %1525 = vmatpush.bf16.msra.mxu0 0
      %1526 = vmatpush.bf16.msra.mxu0 0
      %1527 = vmatpush.bf16.msra.mxu0 0
      %1528 = vmatpush.bf16.msra.mxu0 0
      %1529 = vmatpush.bf16.msra.mxu0 0
      %1530 = vmatpush.bf16.msra.mxu0 %v1519
      %1531 = vmatmul.bf16.gmra.mxu0 %v1521
      %v1532 = vpop.f32.mrf.mxu0
      %v1533 = vadd.f32 0.0, %v1532
      %v1534 = vpop.f32.mrf.mxu0
      %1535 = vdwg.mxu0
      %v1537 = vsel %vm943, %v1506, 0
      %1539 = vmatpush.bf16.msra.mxu0 0
      %1540 = vmatpush.bf16.msra.mxu0 0
      %1541 = vmatpush.bf16.msra.mxu0 0
      %1542 = vmatpush.bf16.msra.mxu0 0
      %1543 = vmatpush.bf16.msra.mxu0 0
      %1544 = vmatpush.bf16.msra.mxu0 0
      %1545 = vmatpush.bf16.msra.mxu0 0
      %1546 = vmatpush.bf16.msra.mxu0 %v1507
      %1547 = vmatmul.bf16.gmra.mxu0 %v1537
      %v1548 = vpop.f32.mrf.mxu0
      %v1549 = vadd.f32 %v1533, %v1548
      %v1550 = vpop.f32.mrf.mxu0
      %1551 = vdwg.mxu0
      %1552 = vrot.lane.b32.xlu0 %v1487, 7
      %v1553 = vpop.permute.xlu0 %1552
      %1554 = vrot.lane.b32.xlu0 %v1489, 7
      %v1555 = vpop.permute.xlu0 %1554
      %vm1558 = vcmask 56320
      %v1559 = vsel %vm1558, 0.0, %v1553
      %v1560 = vsel %vm1558, 0.0, %v1555
      %v1561 = vperm.slane %v1491, 1
      %v1562 = vmul.f32 %v1559, %v1561
      %v1563 = vmul.f32 %v1560, %v1561
      %s1564 = scalar_lea.vmem %s11, 8
      %v1565 = vld [vmem:[%s1564] sm:$0xf]
      %v1566 = vpack.c.bf16 %v1563, %v1562
      %v1568 = vsel %vm943, %v1565, 0
      %1570 = vmatpush.bf16.msra.mxu0 0
      %1571 = vmatpush.bf16.msra.mxu0 0
      %1572 = vmatpush.bf16.msra.mxu0 0
      %1573 = vmatpush.bf16.msra.mxu0 0
      %1574 = vmatpush.bf16.msra.mxu0 0
      %1575 = vmatpush.bf16.msra.mxu0 0
      %1576 = vmatpush.bf16.msra.mxu0 0
      %1577 = vmatpush.bf16.msra.mxu0 %v1566
      %1578 = vmatmul.bf16.gmra.mxu0 %v1568
      %v1579 = vpop.f32.mrf.mxu0
      %v1580 = vadd.f32 0.0, %v1579
      %v1581 = vpop.f32.mrf.mxu0
      %1582 = vdwg.mxu0
      %v1583 = vadd.f32 %v1549, %v1580
      %1584 = vrot.lane.b32.xlu0 %v1487, 1
      %v1585 = vpop.permute.xlu0 %1584
      %1586 = vrot.lane.b32.xlu0 %v1489, 1
      %v1587 = vpop.permute.xlu0 %1586
      %v1590 = vsel %vm1142, 0.0, %v1585
      %v1591 = vsel %vm1142, 0.0, %v1587
      %v1592 = vmul.f32 %v1590, %v1503
      %v1593 = vmul.f32 %v1591, %v1503
      %s1594 = scalar_lea.vmem %s11, 12
      %v1595 = vld [vmem:[%s1594] sm:$0xf]
      %v1596 = vpack.c.bf16 %v1593, %v1592
      %v1598 = vsel %vm943, %v1595, 0
      %1600 = vmatpush.bf16.msra.mxu0 0
      %1601 = vmatpush.bf16.msra.mxu0 0
      %1602 = vmatpush.bf16.msra.mxu0 0
      %1603 = vmatpush.bf16.msra.mxu0 0
      %1604 = vmatpush.bf16.msra.mxu0 0
      %1605 = vmatpush.bf16.msra.mxu0 0
      %1606 = vmatpush.bf16.msra.mxu0 0
      %1607 = vmatpush.bf16.msra.mxu0 %v1596
      %1608 = vmatmul.bf16.gmra.mxu0 %v1598
      %v1609 = vpop.f32.mrf.mxu0
      %v1610 = vadd.f32 0.0, %v1609
      %v1611 = vpop.f32.mrf.mxu0
      %1612 = vdwg.mxu0
      %v1613 = vadd.f32 %v1583, %v1610
      %s1614 = scalar_lea.vmem %s11, 16
      %v1615 = vld [vmem:[%s1614] sm:$0xf]
      %v1616 = vpack.c.bf16 %v1489, %v1487
      %v1618 = vsel %vm943, %v1615, 0
      %1620 = vmatpush.bf16.msra.mxu0 0
      %1621 = vmatpush.bf16.msra.mxu0 0
      %1622 = vmatpush.bf16.msra.mxu0 0
      %1623 = vmatpush.bf16.msra.mxu0 0
      %1624 = vmatpush.bf16.msra.mxu0 0
      %1625 = vmatpush.bf16.msra.mxu0 0
      %1626 = vmatpush.bf16.msra.mxu0 0
      %1627 = vmatpush.bf16.msra.mxu0 %v1616
      %1628 = vmatmul.bf16.gmra.mxu0 %v1618
      %v1629 = vpop.f32.mrf.mxu0
      %v1630 = vadd.f32 0.0, %v1629
      %v1631 = vpop.f32.mrf.mxu0
      %1632 = vdwg.mxu0
      %v1633 = vadd.f32 %v1613, %v1630
      %1634 = vrot.lane.b32.xlu0 %v1487, 127
      %v1635 = vpop.permute.xlu0 %1634
      %1636 = vrot.lane.b32.xlu0 %v1489, 127
      %v1637 = vpop.permute.xlu0 %1636
      %vm1640 = vcmask 515072
      %v1641 = vsel %vm1640, %v1635, 0.0
      %v1642 = vsel %vm1640, %v1637, 0.0
      %v1643 = vmul.f32 %v1641, %v1561
      %v1644 = vmul.f32 %v1642, %v1561
      %s1645 = scalar_lea.vmem %s11, 20
      %v1646 = vld [vmem:[%s1645] sm:$0xf]
      %v1647 = vpack.c.bf16 %v1644, %v1643
      %v1649 = vsel %vm943, %v1646, 0
      %1651 = vmatpush.bf16.msra.mxu0 0
      %1652 = vmatpush.bf16.msra.mxu0 0
      %1653 = vmatpush.bf16.msra.mxu0 0
      %1654 = vmatpush.bf16.msra.mxu0 0
      %1655 = vmatpush.bf16.msra.mxu0 0
      %1656 = vmatpush.bf16.msra.mxu0 0
      %1657 = vmatpush.bf16.msra.mxu0 0
      %1658 = vmatpush.bf16.msra.mxu0 %v1647
      %1659 = vmatmul.bf16.gmra.mxu0 %v1649
      %v1660 = vpop.f32.mrf.mxu0
      %v1661 = vadd.f32 0.0, %v1660
      %v1662 = vpop.f32.mrf.mxu0
      %1663 = vdwg.mxu0
      %v1664 = vadd.f32 %v1633, %v1661
      %1665 = vrot.lane.b32.xlu0 %v1487, 121
      %v1666 = vpop.permute.xlu0 %1665
      %1667 = vrot.lane.b32.xlu0 %v1489, 121
      %v1668 = vpop.permute.xlu0 %1667
      %vm1671 = vcmask 465920
      %v1672 = vsel %vm1671, %v1666, 0.0
      %v1673 = vsel %vm1671, %v1668, 0.0
      %v1674 = vmul.f32 %v1672, %v1503
      %v1675 = vmul.f32 %v1673, %v1503
      %s1676 = scalar_lea.vmem %s11, 24
      %v1677 = vld [vmem:[%s1676] sm:$0xf]
      %v1678 = vpack.c.bf16 %v1675, %v1674
      %v1680 = vsel %vm943, %v1677, 0
      %1682 = vmatpush.bf16.msra.mxu0 0
      %1683 = vmatpush.bf16.msra.mxu0 0
      %1684 = vmatpush.bf16.msra.mxu0 0
      %1685 = vmatpush.bf16.msra.mxu0 0
      %1686 = vmatpush.bf16.msra.mxu0 0
      %1687 = vmatpush.bf16.msra.mxu0 0
      %1688 = vmatpush.bf16.msra.mxu0 0
      %1689 = vmatpush.bf16.msra.mxu0 %v1678
      %1690 = vmatmul.bf16.gmra.mxu0 %v1680
      %v1691 = vpop.f32.mrf.mxu0
      %v1692 = vadd.f32 0.0, %v1691
      %v1693 = vpop.f32.mrf.mxu0
      %1694 = vdwg.mxu0
      %v1695 = vadd.f32 %v1664, %v1692
      %1696 = vrot.lane.b32.xlu0 %v1487, 120
      %v1697 = vpop.permute.xlu0 %1696
      %1698 = vrot.lane.b32.xlu0 %v1489, 120
      %v1699 = vpop.permute.xlu0 %1698
      %vm1702 = vcmask 457728
      %v1703 = vsel %vm1702, %v1697, 0.0
      %v1704 = vsel %vm1702, %v1699, 0.0
      %s1705 = scalar_lea.vmem %s11, 28
      %v1706 = vld [vmem:[%s1705] sm:$0xf]
      %v1707 = vpack.c.bf16 %v1704, %v1703
      %v1709 = vsel %vm943, %v1706, 0
      %1711 = vmatpush.bf16.msra.mxu0 0
      %1712 = vmatpush.bf16.msra.mxu0 0
      %1713 = vmatpush.bf16.msra.mxu0 0
      %1714 = vmatpush.bf16.msra.mxu0 0
      %1715 = vmatpush.bf16.msra.mxu0 0
      %1716 = vmatpush.bf16.msra.mxu0 0
      %1717 = vmatpush.bf16.msra.mxu0 0
      %1718 = vmatpush.bf16.msra.mxu0 %v1707
      %1719 = vmatmul.bf16.gmra.mxu0 %v1709
      %v1720 = vpop.f32.mrf.mxu0
      %v1721 = vadd.f32 0.0, %v1720
      %v1722 = vpop.f32.mrf.mxu0
      %1723 = vdwg.mxu0
      %v1724 = vadd.f32 %v1695, %v1721
      %1725 = vrot.lane.b32.xlu0 %v1487, 119
      %v1726 = vpop.permute.xlu0 %1725
      %1727 = vrot.lane.b32.xlu0 %v1489, 119
      %v1728 = vpop.permute.xlu0 %1727
      %vm1731 = vcmask 449536
      %v1732 = vsel %vm1731, %v1726, 0.0
      %v1733 = vsel %vm1731, %v1728, 0.0
      %v1734 = vmul.f32 %v1732, %v1561
      %v1735 = vmul.f32 %v1733, %v1561
      %s1736 = scalar_lea.vmem %s11, 32
      %v1737 = vld [vmem:[%s1736] sm:$0xf]
      %v1738 = vpack.c.bf16 %v1735, %v1734
      %v1740 = vsel %vm943, %v1737, 0
      %1742 = vmatpush.bf16.msra.mxu0 0
      %1743 = vmatpush.bf16.msra.mxu0 0
      %1744 = vmatpush.bf16.msra.mxu0 0
      %1745 = vmatpush.bf16.msra.mxu0 0
      %1746 = vmatpush.bf16.msra.mxu0 0
      %1747 = vmatpush.bf16.msra.mxu0 0
      %1748 = vmatpush.bf16.msra.mxu0 0
      %1749 = vmatpush.bf16.msra.mxu0 %v1738
      %1750 = vmatmul.bf16.gmra.mxu0 %v1740
      %v1751 = vpop.f32.mrf.mxu0
      %v1752 = vadd.f32 0.0, %v1751
      %v1753 = vpop.f32.mrf.mxu0
      %1754 = vdwg.mxu0
      %v1755 = vadd.f32 %v1724, %v1752
      %v1756 = vld [vmem:[%s16] sm:$0xff]
      %1758 = vset.pattern.permute.xlu0 0
      %1759 = vperm.xlu0 %1758, %v1756
      %v1760 = vpop.permute.xlu0 %1759
      %v1762 = vadd.f32 %v1755, %v1760
      %v1763 = vld [vmem:[%s890] sm:$0x1]
      %v1764 = vld [vmem:[%s22] sm:$0xff]
      %1766 = vset.pattern.permute.xlu0 0
      %1767 = vperm.xlu0 %1766, %v1764
      %v1768 = vpop.permute.xlu0 %1767
      %v1770 = vperm.slane %v1763, 0
      %v1771 = vmul.f32 %v1768, %v1770
      %v1772 = vadd.f32 %v1762, %v1771
      %vm1773 = vcmp.ge.f32.partialorder %v1772, 0.0
      %v1774 = vmul.f32 %v1772, 0.2
      %v1775 = vsel %vm1773, %v1772, %v1774
      %vm1776 = vcmask 523264
      %v1777 = vsel %vm1776, %v1775, 0.0
      %1778 = vadd.xlane.f32.xlu0 %v1777
      %v1779 = vpop.xlane.xlu0 %1778
      %v1780 = vrcp.pop 64.0
      %v1781 = vmul.f32 64.0, %v1780
      %v1782 = vsub.f32 1.0, %v1781
      %v1783 = vmul.f32 %v1780, %v1782
      %v1784 = vadd.f32 %v1780, %v1783
      %vm1785 = vweird.f32 %v1780
      %v1786 = vsel %vm1785, %v1780, %v1784
      %v1787 = vmul.f32 %v1779, %v1786
      %v1788 = vsub.f32 %v1775, %v1787
      %v1789 = vmul.f32 %v1788, %v1788
      %v1790 = vsel %vm1776, %v1789, 0.0
      %1791 = vadd.xlane.f32.xlu0 %v1790
      %v1792 = vpop.xlane.xlu0 %1791
      %v1793 = vmul.f32 %v1792, %v1786
      %v1794 = vadd.f32 %v1793, 1e-05
      %v1795 = vrsqrt.pop %v1794
      %v1796 = vmul.f32 %v1795, %v1794
      %v1797 = vmul.f32 %v1796, %v1795
      %v1798 = vmul.f32 0.5, %v1797
      %v1799 = vsub.f32 1.5, %v1798
      %v1800 = vmul.f32 %v1795, %v1799
      %vm1801 = vweird.f32 %v1794
      %vm1802 = vweird.f32 %v1795
      %vm1803 = vmor %vm1801, %vm1802
      %v1804 = vsel %vm1803, %v1795, %v1800
      %v1805 = vmul.f32 %v1788, %v1804
      %v1806 = vadd.f32 %v909, 1.0
      %1808 = vset.pattern.permute.xlu0 0
      %1809 = vperm.xlu0 %1808, %v1806
      %v1810 = vpop.permute.xlu0 %1809
      %v1812 = vmul.f32 %v1805, %v1810
      %1814 = vset.pattern.permute.xlu0 0
      %1815 = vperm.xlu0 %1814, %v910
      %v1816 = vpop.permute.xlu0 %1815
      %v1818 = vadd.f32 %v1812, %v1816
      %1820 = vrot.lane.b32.xlu0 %v1818, 9
      %v1821 = vpop.permute.xlu0 %1820
      %v1823 = vsel %vm1500, 0.0, %v1821
      %v1824 = vmul.f32 %v1823, %v1503
      %v1825 = vld [vmem:[%s12] sm:$0xf]
      %v1826 = vpack.c.bf16 %v1824, %v1824
      %1827 = vrot.lane.b32.xlu0 %v1818, 8
      %v1828 = vpop.permute.xlu0 %1827
      %v1830 = vsel %vm1514, 0.0, %v1828
      %s1831 = scalar_lea.vmem %s12, 4
      %v1832 = vld [vmem:[%s1831] sm:$0xf]
      %v1833 = vpack.c.bf16 %v1830, %v1830
      %v1835 = vsel %vm1514, %v1832, 0
      %vm1837 = vcmask 1043456
      %v1839 = vsel %vm1837, %v1833, 0
      %1841 = vmatpush.bf16.msra.mxu0 0
      %1842 = vmatpush.bf16.msra.mxu0 0
      %1843 = vmatpush.bf16.msra.mxu0 0
      %1844 = vmatpush.bf16.msra.mxu0 0
      %1845 = vmatpush.bf16.msra.mxu0 0
      %1846 = vmatpush.bf16.msra.mxu0 0
      %1847 = vmatpush.bf16.msra.mxu0 0
      %1848 = vmatpush.bf16.msra.mxu0 %v1839
      %1849 = vmatmul.bf16.gmra.mxu0 %v1835
      %v1850 = vpop.f32.mrf.mxu0
      %v1851 = vadd.f32 0.0, %v1850
      %v1852 = vpop.f32.mrf.mxu0
      %1853 = vdwg.mxu0
      %v1855 = vsel %vm1514, %v1825, 0
      %v1858 = vsel %vm1837, %v1826, 0
      %1860 = vmatpush.bf16.msra.mxu0 0
      %1861 = vmatpush.bf16.msra.mxu0 0
      %1862 = vmatpush.bf16.msra.mxu0 0
      %1863 = vmatpush.bf16.msra.mxu0 0
      %1864 = vmatpush.bf16.msra.mxu0 0
      %1865 = vmatpush.bf16.msra.mxu0 0
      %1866 = vmatpush.bf16.msra.mxu0 0
      %1867 = vmatpush.bf16.msra.mxu0 %v1858
      %1868 = vmatmul.bf16.gmra.mxu0 %v1855
      %v1869 = vpop.f32.mrf.mxu0
      %v1870 = vadd.f32 %v1851, %v1869
      %v1871 = vpop.f32.mrf.mxu0
      %1872 = vdwg.mxu0
      %1873 = vrot.lane.b32.xlu0 %v1818, 7
      %v1874 = vpop.permute.xlu0 %1873
      %v1876 = vsel %vm1558, 0.0, %v1874
      %v1877 = vmul.f32 %v1876, %v1561
      %s1878 = scalar_lea.vmem %s12, 8
      %v1879 = vld [vmem:[%s1878] sm:$0xf]
      %v1880 = vpack.c.bf16 %v1877, %v1877
      %v1882 = vsel %vm1514, %v1879, 0
      %v1885 = vsel %vm1837, %v1880, 0
      %1887 = vmatpush.bf16.msra.mxu0 0
      %1888 = vmatpush.bf16.msra.mxu0 0
      %1889 = vmatpush.bf16.msra.mxu0 0
      %1890 = vmatpush.bf16.msra.mxu0 0
      %1891 = vmatpush.bf16.msra.mxu0 0
      %1892 = vmatpush.bf16.msra.mxu0 0
      %1893 = vmatpush.bf16.msra.mxu0 0
      %1894 = vmatpush.bf16.msra.mxu0 %v1885
      %1895 = vmatmul.bf16.gmra.mxu0 %v1882
      %v1896 = vpop.f32.mrf.mxu0
      %v1897 = vadd.f32 0.0, %v1896
      %v1898 = vpop.f32.mrf.mxu0
      %1899 = vdwg.mxu0
      %v1900 = vadd.f32 %v1870, %v1897
      %1901 = vrot.lane.b32.xlu0 %v1818, 1
      %v1902 = vpop.permute.xlu0 %1901
      %v1904 = vsel %vm1142, 0.0, %v1902
      %v1905 = vmul.f32 %v1904, %v1503
      %s1906 = scalar_lea.vmem %s12, 12
      %v1907 = vld [vmem:[%s1906] sm:$0xf]
      %v1908 = vpack.c.bf16 %v1905, %v1905
      %v1910 = vsel %vm1514, %v1907, 0
      %v1913 = vsel %vm1837, %v1908, 0
      %1915 = vmatpush.bf16.msra.mxu0 0
      %1916 = vmatpush.bf16.msra.mxu0 0
      %1917 = vmatpush.bf16.msra.mxu0 0
      %1918 = vmatpush.bf16.msra.mxu0 0
      %1919 = vmatpush.bf16.msra.mxu0 0
      %1920 = vmatpush.bf16.msra.mxu0 0
      %1921 = vmatpush.bf16.msra.mxu0 0
      %1922 = vmatpush.bf16.msra.mxu0 %v1913
      %1923 = vmatmul.bf16.gmra.mxu0 %v1910
      %v1924 = vpop.f32.mrf.mxu0
      %v1925 = vadd.f32 0.0, %v1924
      %v1926 = vpop.f32.mrf.mxu0
      %1927 = vdwg.mxu0
      %v1928 = vadd.f32 %v1900, %v1925
      %s1929 = scalar_lea.vmem %s12, 16
      %v1930 = vld [vmem:[%s1929] sm:$0xf]
      %v1931 = vpack.c.bf16 %v1818, %v1818
      %v1933 = vsel %vm1514, %v1930, 0
      %v1936 = vsel %vm1837, %v1931, 0
      %1938 = vmatpush.bf16.msra.mxu0 0
      %1939 = vmatpush.bf16.msra.mxu0 0
      %1940 = vmatpush.bf16.msra.mxu0 0
      %1941 = vmatpush.bf16.msra.mxu0 0
      %1942 = vmatpush.bf16.msra.mxu0 0
      %1943 = vmatpush.bf16.msra.mxu0 0
      %1944 = vmatpush.bf16.msra.mxu0 0
      %1945 = vmatpush.bf16.msra.mxu0 %v1936
      %1946 = vmatmul.bf16.gmra.mxu0 %v1933
      %v1947 = vpop.f32.mrf.mxu0
      %v1948 = vadd.f32 0.0, %v1947
      %v1949 = vpop.f32.mrf.mxu0
      %1950 = vdwg.mxu0
      %v1951 = vadd.f32 %v1928, %v1948
      %1952 = vrot.lane.b32.xlu0 %v1818, 127
      %v1953 = vpop.permute.xlu0 %1952
      %v1955 = vsel %vm1640, %v1953, 0.0
      %v1956 = vmul.f32 %v1955, %v1561
      %s1957 = scalar_lea.vmem %s12, 20
      %v1958 = vld [vmem:[%s1957] sm:$0xf]
      %v1959 = vpack.c.bf16 %v1956, %v1956
      %v1961 = vsel %vm1514, %v1958, 0
      %v1964 = vsel %vm1837, %v1959, 0
      %1966 = vmatpush.bf16.msra.mxu0 0
      %1967 = vmatpush.bf16.msra.mxu0 0
      %1968 = vmatpush.bf16.msra.mxu0 0
      %1969 = vmatpush.bf16.msra.mxu0 0
      %1970 = vmatpush.bf16.msra.mxu0 0
      %1971 = vmatpush.bf16.msra.mxu0 0
      %1972 = vmatpush.bf16.msra.mxu0 0
      %1973 = vmatpush.bf16.msra.mxu0 %v1964
      %1974 = vmatmul.bf16.gmra.mxu0 %v1961
      %v1975 = vpop.f32.mrf.mxu0
      %v1976 = vadd.f32 0.0, %v1975
      %v1977 = vpop.f32.mrf.mxu0
      %1978 = vdwg.mxu0
      %v1979 = vadd.f32 %v1951, %v1976
      %1980 = vrot.lane.b32.xlu0 %v1818, 121
      %v1981 = vpop.permute.xlu0 %1980
      %v1983 = vsel %vm1671, %v1981, 0.0
      %v1984 = vmul.f32 %v1983, %v1503
      %s1985 = scalar_lea.vmem %s12, 24
      %v1986 = vld [vmem:[%s1985] sm:$0xf]
      %v1987 = vpack.c.bf16 %v1984, %v1984
      %v1989 = vsel %vm1514, %v1986, 0
      %v1992 = vsel %vm1837, %v1987, 0
      %1994 = vmatpush.bf16.msra.mxu0 0
      %1995 = vmatpush.bf16.msra.mxu0 0
      %1996 = vmatpush.bf16.msra.mxu0 0
      %1997 = vmatpush.bf16.msra.mxu0 0
      %1998 = vmatpush.bf16.msra.mxu0 0
      %1999 = vmatpush.bf16.msra.mxu0 0
      %2000 = vmatpush.bf16.msra.mxu0 0
      %2001 = vmatpush.bf16.msra.mxu0 %v1992
      %2002 = vmatmul.bf16.gmra.mxu0 %v1989
      %v2003 = vpop.f32.mrf.mxu0
      %v2004 = vadd.f32 0.0, %v2003
      %v2005 = vpop.f32.mrf.mxu0
      %2006 = vdwg.mxu0
      %v2007 = vadd.f32 %v1979, %v2004
      %2008 = vrot.lane.b32.xlu0 %v1818, 120
      %v2009 = vpop.permute.xlu0 %2008
      %v2011 = vsel %vm1702, %v2009, 0.0
      %s2012 = scalar_lea.vmem %s12, 28
      %v2013 = vld [vmem:[%s2012] sm:$0xf]
      %v2014 = vpack.c.bf16 %v2011, %v2011
      %v2016 = vsel %vm1514, %v2013, 0
      %v2019 = vsel %vm1837, %v2014, 0
      %2021 = vmatpush.bf16.msra.mxu0 0
      %2022 = vmatpush.bf16.msra.mxu0 0
      %2023 = vmatpush.bf16.msra.mxu0 0
      %2024 = vmatpush.bf16.msra.mxu0 0
      %2025 = vmatpush.bf16.msra.mxu0 0
      %2026 = vmatpush.bf16.msra.mxu0 0
      %2027 = vmatpush.bf16.msra.mxu0 0
      %2028 = vmatpush.bf16.msra.mxu0 %v2019
      %2029 = vmatmul.bf16.gmra.mxu0 %v2016
      %v2030 = vpop.f32.mrf.mxu0
      %v2031 = vadd.f32 0.0, %v2030
      %v2032 = vpop.f32.mrf.mxu0
      %2033 = vdwg.mxu0
      %v2034 = vadd.f32 %v2007, %v2031
      %2035 = vrot.lane.b32.xlu0 %v1818, 119
      %v2036 = vpop.permute.xlu0 %2035
      %v2038 = vsel %vm1731, %v2036, 0.0
      %v2039 = vmul.f32 %v2038, %v1561
      %s2040 = scalar_lea.vmem %s12, 32
      %v2041 = vld [vmem:[%s2040] sm:$0xf]
      %v2042 = vpack.c.bf16 %v2039, %v2039
      %v2044 = vsel %vm1514, %v2041, 0
      %v2047 = vsel %vm1837, %v2042, 0
      %2049 = vmatpush.bf16.msra.mxu0 0
      %2050 = vmatpush.bf16.msra.mxu0 0
      %2051 = vmatpush.bf16.msra.mxu0 0
      %2052 = vmatpush.bf16.msra.mxu0 0
      %2053 = vmatpush.bf16.msra.mxu0 0
      %2054 = vmatpush.bf16.msra.mxu0 0
      %2055 = vmatpush.bf16.msra.mxu0 0
      %2056 = vmatpush.bf16.msra.mxu0 %v2047
      %2057 = vmatmul.bf16.gmra.mxu0 %v2044
      %v2058 = vpop.f32.mrf.mxu0
      %v2059 = vadd.f32 0.0, %v2058
      %v2060 = vpop.f32.mrf.mxu0
      %2061 = vdwg.mxu0
      %v2062 = vadd.f32 %v2034, %v2059
      %v2063 = vld [vmem:[%s17] sm:$0xff]
      %2065 = vset.pattern.permute.xlu0 0
      %2066 = vperm.xlu0 %2065, %v2063
      %v2067 = vpop.permute.xlu0 %2066
      %v2069 = vadd.f32 %v2062, %v2067
      %v2070 = vld [vmem:[%s890 + $0x1] sm:$0x1]
      %v2071 = vld [vmem:[%s23] sm:$0xff]
      %2073 = vset.pattern.permute.xlu0 0
      %2074 = vperm.xlu0 %2073, %v2071
      %v2075 = vpop.permute.xlu0 %2074
      %v2077 = vperm.slane %v2070, 0
      %v2078 = vmul.f32 %v2075, %v2077
      %v2079 = vadd.f32 %v2069, %v2078
      %vm2080 = vcmp.ge.f32.partialorder %v2079, 0.0
      %v2081 = vmul.f32 %v2079, 0.2
      %v2082 = vsel %vm2080, %v2079, %v2081
      %v2083 = vsel %vm1776, %v2082, 0.0
      %2084 = vadd.xlane.f32.xlu0 %v2083
      %v2085 = vpop.xlane.xlu0 %2084
      %v2086 = vmul.f32 %v2085, %v1786
      %v2087 = vsub.f32 %v2082, %v2086
      %v2088 = vmul.f32 %v2087, %v2087
      %v2089 = vsel %vm1776, %v2088, 0.0
      %2090 = vadd.xlane.f32.xlu0 %v2089
      %v2091 = vpop.xlane.xlu0 %2090
      %v2092 = vmul.f32 %v2091, %v1786
      %v2093 = vadd.f32 %v2092, 1e-05
      %v2094 = vrsqrt.pop %v2093
      %v2095 = vmul.f32 %v2094, %v2093
      %v2096 = vmul.f32 %v2095, %v2094
      %v2097 = vmul.f32 0.5, %v2096
      %v2098 = vsub.f32 1.5, %v2097
      %v2099 = vmul.f32 %v2094, %v2098
      %vm2100 = vweird.f32 %v2093
      %vm2101 = vweird.f32 %v2094
      %vm2102 = vmor %vm2100, %vm2101
      %v2103 = vsel %vm2102, %v2094, %v2099
      %v2104 = vmul.f32 %v2087, %v2103
      %v2105 = vadd.f32 %v911, 1.0
      %2107 = vset.pattern.permute.xlu0 0
      %2108 = vperm.xlu0 %2107, %v2105
      %v2109 = vpop.permute.xlu0 %2108
      %v2111 = vmul.f32 %v2104, %v2109
      %2113 = vset.pattern.permute.xlu0 0
      %2114 = vperm.xlu0 %2113, %v912
      %v2115 = vpop.permute.xlu0 %2114
      %v2117 = vadd.f32 %v2111, %v2115
      %v2118 = vpack.c.bf16 %v2117, %v2117
      %v2119 = vld [vmem:[%s9] sm:$0xff]
      %v2120 = vld [vmem:[%s9 + $0x8] sm:$0xff]
      %v2121 = vld [vmem:[%s9 + $0x10] sm:$0xff]
      %v2122 = vld [vmem:[%s9 + $0x18] sm:$0xff]
      %v2123 = vld [vmem:[%s9 + $0x20] sm:$0xff]
      %v2124 = vld [vmem:[%s9 + $0x28] sm:$0xff]
      %v2125 = vld [vmem:[%s9 + $0x30] sm:$0xff]
      %v2126 = vld [vmem:[%s9 + $0x38] sm:$0xff]
      %v2135 = vunpack.c.l.b16 %v2119
      %v2136 = vunpack.c.h.b16 %v2119
      %v2137 = vunpack.c.l.b16 %v2120
      %v2138 = vunpack.c.h.b16 %v2120
      %v2139 = vunpack.c.l.b16 %v2121
      %v2140 = vunpack.c.h.b16 %v2121
      %v2141 = vunpack.c.l.b16 %v2122
      %v2142 = vunpack.c.h.b16 %v2122
      %v2143 = vunpack.c.l.b16 %v2123
      %v2144 = vunpack.c.h.b16 %v2123
      %v2145 = vunpack.c.l.b16 %v2124
      %v2146 = vunpack.c.h.b16 %v2124
      %v2147 = vunpack.c.l.b16 %v2125
      %v2148 = vunpack.c.h.b16 %v2125
      %v2149 = vunpack.c.l.b16 %v2126
      %v2150 = vunpack.c.h.b16 %v2126
      %v2151 = vpack.c.b16 %v2137, %v2135
      %v2152 = vpack.c.b16 %v2138, %v2136
      %v2153 = vpack.c.b16 %v2141, %v2139
      %v2154 = vpack.c.b16 %v2142, %v2140
      %v2155 = vpack.c.b16 %v2145, %v2143
      %v2156 = vpack.c.b16 %v2146, %v2144
      %v2157 = vpack.c.b16 %v2149, %v2147
      %v2158 = vpack.c.b16 %v2150, %v2148
      %v2168 = vsel %vm1776, %v2118, 0
      %2170 = vmatpush.bf16.msra.mxu0 0
      %2171 = vmatpush.bf16.msra.mxu0 0
      %2172 = vmatpush.bf16.msra.mxu0 0
      %2173 = vmatpush.bf16.msra.mxu0 0
      %2174 = vmatpush.bf16.msra.mxu0 %v2157
      %2175 = vmatpush.bf16.msra.mxu0 %v2155
      %2176 = vmatpush.bf16.msra.mxu0 %v2153
      %2177 = vmatpush.bf16.msra.mxu0 %v2151
      %2178 = vmatmul.bf16.gmra.mxu0 %v2168
      %v2179 = vpop.f32.mrf.mxu0
      %v2180 = vadd.f32 0.0, %v2179
      %v2181 = vpop.f32.mrf.mxu0
      %2182 = vdwg.mxu0
      %2183 = vmatpush.bf16.msra.mxu0 0
      %2184 = vmatpush.bf16.msra.mxu0 0
      %2185 = vmatpush.bf16.msra.mxu0 0
      %2186 = vmatpush.bf16.msra.mxu0 0
      %2187 = vmatpush.bf16.msra.mxu0 %v2158
      %2188 = vmatpush.bf16.msra.mxu0 %v2156
      %2189 = vmatpush.bf16.msra.mxu0 %v2154
      %2190 = vmatpush.bf16.msra.mxu0 %v2152
      %2191 = vmatmul.bf16.gmra.mxu0 %v2168
      %v2192 = vpop.f32.mrf.mxu0
      %v2193 = vadd.f32 0.0, %v2192
      %v2194 = vpop.f32.mrf.mxu0
      %2195 = vdwg.mxu0
      %v2196 = vld [vmem:[%s6] sm:$0xf]
      %2199 = vrot.lane.b32.xlu0 %v2180, 17
      %v2200 = vpop.permute.xlu0 %2199
      %2201 = vrot.lane.b32.xlu0 %v2193, 17
      %v2202 = vpop.permute.xlu0 %2201
      %vm2203 = vcmask 138240
      %v2204 = vsel %vm2203, %v2200, %v2202
      %v2207 = vsel %vm2203, 0.0, %v2200
      %v2209 = vperm.slane %v2196, 0
      %v2210 = vperm.slane %v2196, 2
      %v2213 = vperm.slane %v2209, 0
      %v2214 = vperm.slane %v2210, 0
      %v2215 = vmul.f32 %v2207, %v2213
      %v2216 = vmul.f32 %v2204, %v2214
      %v2217 = vld [vmem:[%s13] sm:$0x3]
      %v2218 = vpack.c.bf16 %v2215, %v2215
      %v2219 = vpack.c.bf16 %v2216, %v2216
      %2220 = vrot.lane.b32.xlu0 %v2180, 16
      %v2221 = vpop.permute.xlu0 %2220
      %2222 = vrot.lane.b32.xlu0 %v2193, 16
      %v2223 = vpop.permute.xlu0 %2222
      %v2224 = vsel %vm943, %v2221, %v2223
      %v2227 = vsel %vm943, 0.0, %v2221
      %s2228 = scalar_lea.vmem %s13, 2
      %v2229 = vld [vmem:[%s2228] sm:$0x3]
      %v2230 = vpack.c.bf16 %v2227, %v2227
      %v2231 = vpack.c.bf16 %v2224, %v2224
      %v2233 = vsel %vm1514, %v2229, 0
      %v2236 = vsel %vm1837, %v2230, 0
      %v2239 = vsel %vm1837, %v2231, 0
      %2241 = vmatpush.bf16.msra.mxu0 0
      %2242 = vmatpush.bf16.msra.mxu0 0
      %2243 = vmatpush.bf16.msra.mxu0 0
      %2244 = vmatpush.bf16.msra.mxu0 0
      %2245 = vmatpush.bf16.msra.mxu0 0
      %2246 = vmatpush.bf16.msra.mxu0 0
      %2247 = vmatpush.bf16.msra.mxu0 0
      %2248 = vmatpush.bf16.msra.mxu0 %v2236
      %2249 = vmatmul.bf16.gmra.mxu0 %v2233
      %v2250 = vpop.f32.mrf.mxu0
      %v2251 = vadd.f32 0.0, %v2250
      %v2252 = vpop.f32.mrf.mxu0
      %2253 = vdwg.mxu0
      %2254 = vmatpush.bf16.msra.mxu0 0
      %2255 = vmatpush.bf16.msra.mxu0 0
      %2256 = vmatpush.bf16.msra.mxu0 0
      %2257 = vmatpush.bf16.msra.mxu0 0
      %2258 = vmatpush.bf16.msra.mxu0 0
      %2259 = vmatpush.bf16.msra.mxu0 0
      %2260 = vmatpush.bf16.msra.mxu0 0
      %2261 = vmatpush.bf16.msra.mxu0 %v2239
      %2262 = vmatmul.bf16.gmra.mxu0 %v2233
      %v2263 = vpop.f32.mrf.mxu0
      %v2264 = vadd.f32 0.0, %v2263
      %v2265 = vpop.f32.mrf.mxu0
      %2266 = vdwg.mxu0
      %v2268 = vsel %vm1514, %v2217, 0
      %v2271 = vsel %vm1837, %v2218, 0
      %v2274 = vsel %vm1837, %v2219, 0
      %2276 = vmatpush.bf16.msra.mxu0 0
      %2277 = vmatpush.bf16.msra.mxu0 0
      %2278 = vmatpush.bf16.msra.mxu0 0
      %2279 = vmatpush.bf16.msra.mxu0 0
      %2280 = vmatpush.bf16.msra.mxu0 0
      %2281 = vmatpush.bf16.msra.mxu0 0
      %2282 = vmatpush.bf16.msra.mxu0 0
      %2283 = vmatpush.bf16.msra.mxu0 %v2271
      %2284 = vmatmul.bf16.gmra.mxu0 %v2268
      %v2285 = vpop.f32.mrf.mxu0
      %v2286 = vadd.f32 %v2251, %v2285
      %v2287 = vpop.f32.mrf.mxu0
      %2288 = vdwg.mxu0
      %2289 = vmatpush.bf16.msra.mxu0 0
      %2290 = vmatpush.bf16.msra.mxu0 0
      %2291 = vmatpush.bf16.msra.mxu0 0
      %2292 = vmatpush.bf16.msra.mxu0 0
      %2293 = vmatpush.bf16.msra.mxu0 0
      %2294 = vmatpush.bf16.msra.mxu0 0
      %2295 = vmatpush.bf16.msra.mxu0 0
      %2296 = vmatpush.bf16.msra.mxu0 %v2274
      %2297 = vmatmul.bf16.gmra.mxu0 %v2268
      %v2298 = vpop.f32.mrf.mxu0
      %v2299 = vadd.f32 %v2264, %v2298
      %v2300 = vpop.f32.mrf.mxu0
      %2301 = vdwg.mxu0
      %2302 = vrot.lane.b32.xlu0 %v2180, 15
      %v2303 = vpop.permute.xlu0 %2302
      %2304 = vrot.lane.b32.xlu0 %v2193, 15
      %v2305 = vpop.permute.xlu0 %2304
      %v2306 = vsel %vm1209, %v2303, %v2305
      %v2309 = vsel %vm1209, 0.0, %v2303
      %v2310 = vperm.slane %v2196, 1
      %v2311 = vperm.slane %v2196, 3
      %v2314 = vperm.slane %v2310, 1
      %v2315 = vperm.slane %v2311, 1
      %v2316 = vmul.f32 %v2309, %v2314
      %v2317 = vmul.f32 %v2306, %v2315
      %s2318 = scalar_lea.vmem %s13, 4
      %v2319 = vld [vmem:[%s2318] sm:$0x3]
      %v2320 = vpack.c.bf16 %v2316, %v2316
      %v2321 = vpack.c.bf16 %v2317, %v2317
      %v2323 = vsel %vm1514, %v2319, 0
      %v2326 = vsel %vm1837, %v2320, 0
      %v2329 = vsel %vm1837, %v2321, 0
      %2331 = vmatpush.bf16.msra.mxu0 0
      %2332 = vmatpush.bf16.msra.mxu0 0
      %2333 = vmatpush.bf16.msra.mxu0 0
      %2334 = vmatpush.bf16.msra.mxu0 0
      %2335 = vmatpush.bf16.msra.mxu0 0
      %2336 = vmatpush.bf16.msra.mxu0 0
      %2337 = vmatpush.bf16.msra.mxu0 0
      %2338 = vmatpush.bf16.msra.mxu0 %v2326
      %2339 = vmatmul.bf16.gmra.mxu0 %v2323
      %v2340 = vpop.f32.mrf.mxu0
      %v2341 = vadd.f32 0.0, %v2340
      %v2342 = vpop.f32.mrf.mxu0
      %2343 = vdwg.mxu0
      %2344 = vmatpush.bf16.msra.mxu0 0
      %2345 = vmatpush.bf16.msra.mxu0 0
      %2346 = vmatpush.bf16.msra.mxu0 0
      %2347 = vmatpush.bf16.msra.mxu0 0
      %2348 = vmatpush.bf16.msra.mxu0 0
      %2349 = vmatpush.bf16.msra.mxu0 0
      %2350 = vmatpush.bf16.msra.mxu0 0
      %2351 = vmatpush.bf16.msra.mxu0 %v2329
      %2352 = vmatmul.bf16.gmra.mxu0 %v2323
      %v2353 = vpop.f32.mrf.mxu0
      %v2354 = vadd.f32 0.0, %v2353
      %v2355 = vpop.f32.mrf.mxu0
      %2356 = vdwg.mxu0
      %v2357 = vadd.f32 %v2286, %v2341
      %v2358 = vadd.f32 %v2299, %v2354
      %2359 = vrot.lane.b32.xlu0 %v2180, 1
      %v2360 = vpop.permute.xlu0 %2359
      %2361 = vrot.lane.b32.xlu0 %v2193, 1
      %v2362 = vpop.permute.xlu0 %2361
      %v2363 = vsel %vm1142, %v2360, %v2362
      %v2366 = vsel %vm1142, 0.0, %v2360
      %v2367 = vmul.f32 %v2366, %v2213
      %v2368 = vmul.f32 %v2363, %v2214
      %s2369 = scalar_lea.vmem %s13, 6
      %v2370 = vld [vmem:[%s2369] sm:$0x3]
      %v2371 = vpack.c.bf16 %v2367, %v2367
      %v2372 = vpack.c.bf16 %v2368, %v2368
      %v2374 = vsel %vm1514, %v2370, 0
      %v2377 = vsel %vm1837, %v2371, 0
      %v2380 = vsel %vm1837, %v2372, 0
      %2382 = vmatpush.bf16.msra.mxu0 0
      %2383 = vmatpush.bf16.msra.mxu0 0
      %2384 = vmatpush.bf16.msra.mxu0 0
      %2385 = vmatpush.bf16.msra.mxu0 0
      %2386 = vmatpush.bf16.msra.mxu0 0
      %2387 = vmatpush.bf16.msra.mxu0 0
      %2388 = vmatpush.bf16.msra.mxu0 0
      %2389 = vmatpush.bf16.msra.mxu0 %v2377
      %2390 = vmatmul.bf16.gmra.mxu0 %v2374
      %v2391 = vpop.f32.mrf.mxu0
      %v2392 = vadd.f32 0.0, %v2391
      %v2393 = vpop.f32.mrf.mxu0
      %2394 = vdwg.mxu0
      %2395 = vmatpush.bf16.msra.mxu0 0
      %2396 = vmatpush.bf16.msra.mxu0 0
      %2397 = vmatpush.bf16.msra.mxu0 0
      %2398 = vmatpush.bf16.msra.mxu0 0
      %2399 = vmatpush.bf16.msra.mxu0 0
      %2400 = vmatpush.bf16.msra.mxu0 0
      %2401 = vmatpush.bf16.msra.mxu0 0
      %2402 = vmatpush.bf16.msra.mxu0 %v2380
      %2403 = vmatmul.bf16.gmra.mxu0 %v2374
      %v2404 = vpop.f32.mrf.mxu0
      %v2405 = vadd.f32 0.0, %v2404
      %v2406 = vpop.f32.mrf.mxu0
      %2407 = vdwg.mxu0
      %v2408 = vadd.f32 %v2357, %v2392
      %v2409 = vadd.f32 %v2358, %v2405
      %s2410 = scalar_lea.vmem %s13, 8
      %v2411 = vld [vmem:[%s2410] sm:$0x3]
      %v2412 = vpack.c.bf16 %v2180, %v2180
      %v2413 = vpack.c.bf16 %v2193, %v2193
      %v2415 = vsel %vm1514, %v2411, 0
      %v2418 = vsel %vm1837, %v2412, 0
      %v2421 = vsel %vm1837, %v2413, 0
      %2423 = vmatpush.bf16.msra.mxu0 0
      %2424 = vmatpush.bf16.msra.mxu0 0
      %2425 = vmatpush.bf16.msra.mxu0 0
      %2426 = vmatpush.bf16.msra.mxu0 0
      %2427 = vmatpush.bf16.msra.mxu0 0
      %2428 = vmatpush.bf16.msra.mxu0 0
      %2429 = vmatpush.bf16.msra.mxu0 0
      %2430 = vmatpush.bf16.msra.mxu0 %v2418
      %2431 = vmatmul.bf16.gmra.mxu0 %v2415
      %v2432 = vpop.f32.mrf.mxu0
      %v2433 = vadd.f32 0.0, %v2432
      %v2434 = vpop.f32.mrf.mxu0
      %2435 = vdwg.mxu0
      %2436 = vmatpush.bf16.msra.mxu0 0
      %2437 = vmatpush.bf16.msra.mxu0 0
      %2438 = vmatpush.bf16.msra.mxu0 0
      %2439 = vmatpush.bf16.msra.mxu0 0
      %2440 = vmatpush.bf16.msra.mxu0 0
      %2441 = vmatpush.bf16.msra.mxu0 0
      %2442 = vmatpush.bf16.msra.mxu0 0
      %2443 = vmatpush.bf16.msra.mxu0 %v2421
      %2444 = vmatmul.bf16.gmra.mxu0 %v2415
      %v2445 = vpop.f32.mrf.mxu0
      %v2446 = vadd.f32 0.0, %v2445
      %v2447 = vpop.f32.mrf.mxu0
      %2448 = vdwg.mxu0
      %v2449 = vadd.f32 %v2408, %v2433
      %v2450 = vadd.f32 %v2409, %v2446
      %2451 = vrot.lane.b32.xlu0 %v2180, 127
      %v2452 = vpop.permute.xlu0 %2451
      %2453 = vrot.lane.b32.xlu0 %v2193, 127
      %v2454 = vpop.permute.xlu0 %2453
      %vm2455 = vcmask 1039360
      %v2456 = vsel %vm2455, %v2452, %v2454
      %v2459 = vsel %vm2455, %v2454, 0.0
      %v2460 = vmul.f32 %v2456, %v2314
      %v2461 = vmul.f32 %v2459, %v2315
      %s2462 = scalar_lea.vmem %s13, 10
      %v2463 = vld [vmem:[%s2462] sm:$0x3]
      %v2464 = vpack.c.bf16 %v2460, %v2460
      %v2465 = vpack.c.bf16 %v2461, %v2461
      %v2467 = vsel %vm1514, %v2463, 0
      %v2470 = vsel %vm1837, %v2464, 0
      %v2473 = vsel %vm1837, %v2465, 0
      %2475 = vmatpush.bf16.msra.mxu0 0
      %2476 = vmatpush.bf16.msra.mxu0 0
      %2477 = vmatpush.bf16.msra.mxu0 0
      %2478 = vmatpush.bf16.msra.mxu0 0
      %2479 = vmatpush.bf16.msra.mxu0 0
      %2480 = vmatpush.bf16.msra.mxu0 0
      %2481 = vmatpush.bf16.msra.mxu0 0
      %2482 = vmatpush.bf16.msra.mxu0 %v2470
      %2483 = vmatmul.bf16.gmra.mxu0 %v2467
      %v2484 = vpop.f32.mrf.mxu0
      %v2485 = vadd.f32 0.0, %v2484
      %v2486 = vpop.f32.mrf.mxu0
      %2487 = vdwg.mxu0
      %2488 = vmatpush.bf16.msra.mxu0 0
      %2489 = vmatpush.bf16.msra.mxu0 0
      %2490 = vmatpush.bf16.msra.mxu0 0
      %2491 = vmatpush.bf16.msra.mxu0 0
      %2492 = vmatpush.bf16.msra.mxu0 0
      %2493 = vmatpush.bf16.msra.mxu0 0
      %2494 = vmatpush.bf16.msra.mxu0 0
      %2495 = vmatpush.bf16.msra.mxu0 %v2473
      %2496 = vmatmul.bf16.gmra.mxu0 %v2467
      %v2497 = vpop.f32.mrf.mxu0
      %v2498 = vadd.f32 0.0, %v2497
      %v2499 = vpop.f32.mrf.mxu0
      %2500 = vdwg.mxu0
      %v2501 = vadd.f32 %v2449, %v2485
      %v2502 = vadd.f32 %v2450, %v2498
      %2503 = vrot.lane.b32.xlu0 %v2180, 113
      %v2504 = vpop.permute.xlu0 %2503
      %2505 = vrot.lane.b32.xlu0 %v2193, 113
      %v2506 = vpop.permute.xlu0 %2505
      %vm2507 = vcmask 924672
      %v2508 = vsel %vm2507, %v2504, %v2506
      %v2511 = vsel %vm2507, %v2506, 0.0
      %v2512 = vmul.f32 %v2508, %v2213
      %v2513 = vmul.f32 %v2511, %v2214
      %s2514 = scalar_lea.vmem %s13, 12
      %v2515 = vld [vmem:[%s2514] sm:$0x3]
      %v2516 = vpack.c.bf16 %v2512, %v2512
      %v2517 = vpack.c.bf16 %v2513, %v2513
      %v2519 = vsel %vm1514, %v2515, 0
      %v2522 = vsel %vm1837, %v2516, 0
      %v2525 = vsel %vm1837, %v2517, 0
      %2527 = vmatpush.bf16.msra.mxu0 0
      %2528 = vmatpush.bf16.msra.mxu0 0
      %2529 = vmatpush.bf16.msra.mxu0 0
      %2530 = vmatpush.bf16.msra.mxu0 0
      %2531 = vmatpush.bf16.msra.mxu0 0
      %2532 = vmatpush.bf16.msra.mxu0 0
      %2533 = vmatpush.bf16.msra.mxu0 0
      %2534 = vmatpush.bf16.msra.mxu0 %v2522
      %2535 = vmatmul.bf16.gmra.mxu0 %v2519
      %v2536 = vpop.f32.mrf.mxu0
      %v2537 = vadd.f32 0.0, %v2536
      %v2538 = vpop.f32.mrf.mxu0
      %2539 = vdwg.mxu0
      %2540 = vmatpush.bf16.msra.mxu0 0
      %2541 = vmatpush.bf16.msra.mxu0 0
      %2542 = vmatpush.bf16.msra.mxu0 0
      %2543 = vmatpush.bf16.msra.mxu0 0
      %2544 = vmatpush.bf16.msra.mxu0 0
      %2545 = vmatpush.bf16.msra.mxu0 0
      %2546 = vmatpush.bf16.msra.mxu0 0
      %2547 = vmatpush.bf16.msra.mxu0 %v2525
      %2548 = vmatmul.bf16.gmra.mxu0 %v2519
      %v2549 = vpop.f32.mrf.mxu0
      %v2550 = vadd.f32 0.0, %v2549
      %v2551 = vpop.f32.mrf.mxu0
      %2552 = vdwg.mxu0
      %v2553 = vadd.f32 %v2501, %v2537
      %v2554 = vadd.f32 %v2502, %v2550
      %2555 = vrot.lane.b32.xlu0 %v2180, 112
      %v2556 = vpop.permute.xlu0 %2555
      %2557 = vrot.lane.b32.xlu0 %v2193, 112
      %v2558 = vpop.permute.xlu0 %2557
      %vm2559 = vcmask 916480
      %v2560 = vsel %vm2559, %v2556, %v2558
      %v2563 = vsel %vm2559, %v2558, 0.0
      %s2564 = scalar_lea.vmem %s13, 14
      %v2565 = vld [vmem:[%s2564] sm:$0x3]
      %v2566 = vpack.c.bf16 %v2560, %v2560
      %v2567 = vpack.c.bf16 %v2563, %v2563
      %v2569 = vsel %vm1514, %v2565, 0
      %v2572 = vsel %vm1837, %v2566, 0
      %v2575 = vsel %vm1837, %v2567, 0
      %2577 = vmatpush.bf16.msra.mxu0 0
      %2578 = vmatpush.bf16.msra.mxu0 0
      %2579 = vmatpush.bf16.msra.mxu0 0
      %2580 = vmatpush.bf16.msra.mxu0 0
      %2581 = vmatpush.bf16.msra.mxu0 0
      %2582 = vmatpush.bf16.msra.mxu0 0
      %2583 = vmatpush.bf16.msra.mxu0 0
      %2584 = vmatpush.bf16.msra.mxu0 %v2572
      %2585 = vmatmul.bf16.gmra.mxu0 %v2569
      %v2586 = vpop.f32.mrf.mxu0
      %v2587 = vadd.f32 0.0, %v2586
      %v2588 = vpop.f32.mrf.mxu0
      %2589 = vdwg.mxu0
      %2590 = vmatpush.bf16.msra.mxu0 0
      %2591 = vmatpush.bf16.msra.mxu0 0
      %2592 = vmatpush.bf16.msra.mxu0 0
      %2593 = vmatpush.bf16.msra.mxu0 0
      %2594 = vmatpush.bf16.msra.mxu0 0
      %2595 = vmatpush.bf16.msra.mxu0 0
      %2596 = vmatpush.bf16.msra.mxu0 0
      %2597 = vmatpush.bf16.msra.mxu0 %v2575
      %2598 = vmatmul.bf16.gmra.mxu0 %v2569
      %v2599 = vpop.f32.mrf.mxu0
      %v2600 = vadd.f32 0.0, %v2599
      %v2601 = vpop.f32.mrf.mxu0
      %2602 = vdwg.mxu0
      %v2603 = vadd.f32 %v2553, %v2587
      %v2604 = vadd.f32 %v2554, %v2600
      %2605 = vrot.lane.b32.xlu0 %v2180, 111
      %v2606 = vpop.permute.xlu0 %2605
      %2607 = vrot.lane.b32.xlu0 %v2193, 111
      %v2608 = vpop.permute.xlu0 %2607
      %vm2609 = vcmask 908288
      %v2610 = vsel %vm2609, %v2606, %v2608
      %v2613 = vsel %vm2609, %v2608, 0.0
      %v2614 = vmul.f32 %v2610, %v2314
      %v2615 = vmul.f32 %v2613, %v2315
      %s2616 = scalar_lea.vmem %s13, 16
      %v2617 = vld [vmem:[%s2616] sm:$0x3]
      %v2618 = vpack.c.bf16 %v2614, %v2614
      %v2619 = vpack.c.bf16 %v2615, %v2615
      %v2621 = vsel %vm1514, %v2617, 0
      %v2624 = vsel %vm1837, %v2618, 0
      %v2627 = vsel %vm1837, %v2619, 0
      %2629 = vmatpush.bf16.msra.mxu0 0
      %2630 = vmatpush.bf16.msra.mxu0 0
      %2631 = vmatpush.bf16.msra.mxu0 0
      %2632 = vmatpush.bf16.msra.mxu0 0
      %2633 = vmatpush.bf16.msra.mxu0 0
      %2634 = vmatpush.bf16.msra.mxu0 0
      %2635 = vmatpush.bf16.msra.mxu0 0
      %2636 = vmatpush.bf16.msra.mxu0 %v2624
      %2637 = vmatmul.bf16.gmra.mxu0 %v2621
      %v2638 = vpop.f32.mrf.mxu0
      %v2639 = vadd.f32 0.0, %v2638
      %v2640 = vpop.f32.mrf.mxu0
      %2641 = vdwg.mxu0
      %2642 = vmatpush.bf16.msra.mxu0 0
      %2643 = vmatpush.bf16.msra.mxu0 0
      %2644 = vmatpush.bf16.msra.mxu0 0
      %2645 = vmatpush.bf16.msra.mxu0 0
      %2646 = vmatpush.bf16.msra.mxu0 0
      %2647 = vmatpush.bf16.msra.mxu0 0
      %2648 = vmatpush.bf16.msra.mxu0 0
      %2649 = vmatpush.bf16.msra.mxu0 %v2627
      %2650 = vmatmul.bf16.gmra.mxu0 %v2621
      %v2651 = vpop.f32.mrf.mxu0
      %v2652 = vadd.f32 0.0, %v2651
      %v2653 = vpop.f32.mrf.mxu0
      %2654 = vdwg.mxu0
      %v2655 = vadd.f32 %v2603, %v2639
      %v2656 = vadd.f32 %v2604, %v2652
      %v2657 = vld [vmem:[%s18] sm:$0xf]
      %2659 = vset.pattern.permute.xlu0 0
      %2660 = vperm.xlu0 %2659, %v2657
      %v2661 = vpop.permute.xlu0 %2660
      %v2663 = vadd.f32 %v2655, %v2661
      %v2664 = vadd.f32 %v2656, %v2661
      %v2665 = vld [vmem:[%s895] ss:$2 sm:$0x3]
      %v2666 = vld [vmem:[%s24] sm:$0xf]
      %2668 = vset.pattern.permute.xlu0 0
      %2669 = vperm.xlu0 %2668, %v2666
      %v2670 = vpop.permute.xlu0 %2669
      %v2673 = vperm.slane %v2665, 0
      %v2674 = vperm.slane %v2665, 1
      %v2677 = vmul.f32 %v2670, %v2673
      %v2678 = vmul.f32 %v2670, %v2674
      %v2679 = vadd.f32 %v2663, %v2677
      %v2680 = vadd.f32 %v2664, %v2678
      %vm2681 = vcmp.ge.f32.partialorder %v2679, 0.0
      %vm2682 = vcmp.ge.f32.partialorder %v2680, 0.0
      %v2683 = vmul.f32 %v2679, 0.2
      %v2684 = vmul.f32 %v2680, 0.2
      %v2685 = vsel %vm2681, %v2679, %v2683
      %v2686 = vsel %vm2682, %v2680, %v2684
      %v2687 = vsel %vm1837, %v2685, 0.0
      %v2688 = vsel %vm1837, %v2686, 0.0
      %v2689 = vadd.f32 %v2687, %v2688
      %2690 = vadd.xlane.f32.xlu0 %v2689
      %v2691 = vpop.xlane.xlu0 %2690
      %v2692 = vrcp.pop 256.0
      %v2693 = vmul.f32 256.0, %v2692
      %v2694 = vsub.f32 1.0, %v2693
      %v2695 = vmul.f32 %v2692, %v2694
      %v2696 = vadd.f32 %v2692, %v2695
      %vm2697 = vweird.f32 %v2692
      %v2698 = vsel %vm2697, %v2692, %v2696
      %v2699 = vmul.f32 %v2691, %v2698
      %v2700 = vsub.f32 %v2685, %v2699
      %v2701 = vsub.f32 %v2686, %v2699
      %v2702 = vmul.f32 %v2700, %v2700
      %v2703 = vmul.f32 %v2701, %v2701
      %v2704 = vsel %vm1837, %v2702, 0.0
      %v2705 = vsel %vm1837, %v2703, 0.0
      %v2706 = vadd.f32 %v2704, %v2705
      %2707 = vadd.xlane.f32.xlu0 %v2706
      %v2708 = vpop.xlane.xlu0 %2707
      %v2709 = vmul.f32 %v2708, %v2698
      %v2710 = vadd.f32 %v2709, 1e-05
      %v2711 = vrsqrt.pop %v2710
      %v2712 = vmul.f32 %v2711, %v2710
      %v2713 = vmul.f32 %v2712, %v2711
      %v2714 = vmul.f32 0.5, %v2713
      %v2715 = vsub.f32 1.5, %v2714
      %v2716 = vmul.f32 %v2711, %v2715
      %vm2717 = vweird.f32 %v2710
      %vm2718 = vweird.f32 %v2711
      %vm2719 = vmor %vm2717, %vm2718
      %v2720 = vsel %vm2719, %v2711, %v2716
      %v2721 = vmul.f32 %v2700, %v2720
      %v2722 = vmul.f32 %v2701, %v2720
      %v2723 = vadd.f32 %v913, 1.0
      %2725 = vset.pattern.permute.xlu0 0
      %2726 = vperm.xlu0 %2725, %v2723
      %v2727 = vpop.permute.xlu0 %2726
      %v2729 = vmul.f32 %v2721, %v2727
      %v2730 = vmul.f32 %v2722, %v2727
      %2732 = vset.pattern.permute.xlu0 0
      %2733 = vperm.xlu0 %2732, %v914
      %v2734 = vpop.permute.xlu0 %2733
      %v2736 = vadd.f32 %v2729, %v2734
      %v2737 = vadd.f32 %v2730, %v2734
      %2740 = vrot.lane.b32.xlu0 %v2736, 17
      %v2741 = vpop.permute.xlu0 %2740
      %2742 = vrot.lane.b32.xlu0 %v2737, 17
      %v2743 = vpop.permute.xlu0 %2742
      %v2744 = vsel %vm2203, %v2741, %v2743
      %v2747 = vsel %vm2203, 0.0, %v2741
      %v2748 = vmul.f32 %v2747, %v2213
      %v2749 = vmul.f32 %v2744, %v2214
      %v2750 = vld [vmem:[%s14] sm:$0x3]
      %v2751 = vpack.c.bf16 %v2748, %v2748
      %v2752 = vpack.c.bf16 %v2749, %v2749
      %2753 = vrot.lane.b32.xlu0 %v2736, 16
      %v2754 = vpop.permute.xlu0 %2753
      %2755 = vrot.lane.b32.xlu0 %v2737, 16
      %v2756 = vpop.permute.xlu0 %2755
      %v2757 = vsel %vm943, %v2754, %v2756
      %v2760 = vsel %vm943, 0.0, %v2754
      %s2761 = scalar_lea.vmem %s14, 2
      %v2762 = vld [vmem:[%s2761] sm:$0x3]
      %v2763 = vpack.c.bf16 %v2760, %v2760
      %v2764 = vpack.c.bf16 %v2757, %v2757
      %v2766 = vsel %vm1045, %v2762, 0
      %vm2768 = vcmask 1041408
      %v2770 = vsel %vm2768, %v2763, 0
      %v2773 = vsel %vm2768, %v2764, 0
      %2775 = vmatpush.bf16.msra.mxu0 0
      %2776 = vmatpush.bf16.msra.mxu0 0
      %2777 = vmatpush.bf16.msra.mxu0 0
      %2778 = vmatpush.bf16.msra.mxu0 0
      %2779 = vmatpush.bf16.msra.mxu0 0
      %2780 = vmatpush.bf16.msra.mxu0 0
      %2781 = vmatpush.bf16.msra.mxu0 0
      %2782 = vmatpush.bf16.msra.mxu0 %v2770
      %2783 = vmatmul.bf16.gmra.mxu0 %v2766
      %v2784 = vpop.f32.mrf.mxu0
      %v2785 = vadd.f32 0.0, %v2784
      %v2786 = vpop.f32.mrf.mxu0
      %2787 = vdwg.mxu0
      %2788 = vmatpush.bf16.msra.mxu0 0
      %2789 = vmatpush.bf16.msra.mxu0 0
      %2790 = vmatpush.bf16.msra.mxu0 0
      %2791 = vmatpush.bf16.msra.mxu0 0
      %2792 = vmatpush.bf16.msra.mxu0 0
      %2793 = vmatpush.bf16.msra.mxu0 0
      %2794 = vmatpush.bf16.msra.mxu0 0
      %2795 = vmatpush.bf16.msra.mxu0 %v2773
      %2796 = vmatmul.bf16.gmra.mxu0 %v2766
      %v2797 = vpop.f32.mrf.mxu0
      %v2798 = vadd.f32 0.0, %v2797
      %v2799 = vpop.f32.mrf.mxu0
      %2800 = vdwg.mxu0
      %v2802 = vsel %vm1045, %v2750, 0
      %v2805 = vsel %vm2768, %v2751, 0
      %v2808 = vsel %vm2768, %v2752, 0
      %2810 = vmatpush.bf16.msra.mxu0 0
      %2811 = vmatpush.bf16.msra.mxu0 0
      %2812 = vmatpush.bf16.msra.mxu0 0
      %2813 = vmatpush.bf16.msra.mxu0 0
      %2814 = vmatpush.bf16.msra.mxu0 0
      %2815 = vmatpush.bf16.msra.mxu0 0
      %2816 = vmatpush.bf16.msra.mxu0 0
      %2817 = vmatpush.bf16.msra.mxu0 %v2805
      %2818 = vmatmul.bf16.gmra.mxu0 %v2802
      %v2819 = vpop.f32.mrf.mxu0
      %v2820 = vadd.f32 %v2785, %v2819
      %v2821 = vpop.f32.mrf.mxu0
      %2822 = vdwg.mxu0
      %2823 = vmatpush.bf16.msra.mxu0 0
      %2824 = vmatpush.bf16.msra.mxu0 0
      %2825 = vmatpush.bf16.msra.mxu0 0
      %2826 = vmatpush.bf16.msra.mxu0 0
      %2827 = vmatpush.bf16.msra.mxu0 0
      %2828 = vmatpush.bf16.msra.mxu0 0
      %2829 = vmatpush.bf16.msra.mxu0 0
      %2830 = vmatpush.bf16.msra.mxu0 %v2808
      %2831 = vmatmul.bf16.gmra.mxu0 %v2802
      %v2832 = vpop.f32.mrf.mxu0
      %v2833 = vadd.f32 %v2798, %v2832
      %v2834 = vpop.f32.mrf.mxu0
      %2835 = vdwg.mxu0
      %2836 = vrot.lane.b32.xlu0 %v2736, 15
      %v2837 = vpop.permute.xlu0 %2836
      %2838 = vrot.lane.b32.xlu0 %v2737, 15
      %v2839 = vpop.permute.xlu0 %2838
      %v2840 = vsel %vm1209, %v2837, %v2839
      %v2843 = vsel %vm1209, 0.0, %v2837
      %v2844 = vmul.f32 %v2843, %v2314
      %v2845 = vmul.f32 %v2840, %v2315
      %s2846 = scalar_lea.vmem %s14, 4
      %v2847 = vld [vmem:[%s2846] sm:$0x3]
      %v2848 = vpack.c.bf16 %v2844, %v2844
      %v2849 = vpack.c.bf16 %v2845, %v2845
      %v2851 = vsel %vm1045, %v2847, 0
      %v2854 = vsel %vm2768, %v2848, 0
      %v2857 = vsel %vm2768, %v2849, 0
      %2859 = vmatpush.bf16.msra.mxu0 0
      %2860 = vmatpush.bf16.msra.mxu0 0
      %2861 = vmatpush.bf16.msra.mxu0 0
      %2862 = vmatpush.bf16.msra.mxu0 0
      %2863 = vmatpush.bf16.msra.mxu0 0
      %2864 = vmatpush.bf16.msra.mxu0 0
      %2865 = vmatpush.bf16.msra.mxu0 0
      %2866 = vmatpush.bf16.msra.mxu0 %v2854
      %2867 = vmatmul.bf16.gmra.mxu0 %v2851
      %v2868 = vpop.f32.mrf.mxu0
      %v2869 = vadd.f32 0.0, %v2868
      %v2870 = vpop.f32.mrf.mxu0
      %2871 = vdwg.mxu0
      %2872 = vmatpush.bf16.msra.mxu0 0
      %2873 = vmatpush.bf16.msra.mxu0 0
      %2874 = vmatpush.bf16.msra.mxu0 0
      %2875 = vmatpush.bf16.msra.mxu0 0
      %2876 = vmatpush.bf16.msra.mxu0 0
      %2877 = vmatpush.bf16.msra.mxu0 0
      %2878 = vmatpush.bf16.msra.mxu0 0
      %2879 = vmatpush.bf16.msra.mxu0 %v2857
      %2880 = vmatmul.bf16.gmra.mxu0 %v2851
      %v2881 = vpop.f32.mrf.mxu0
      %v2882 = vadd.f32 0.0, %v2881
      %v2883 = vpop.f32.mrf.mxu0
      %2884 = vdwg.mxu0
      %v2885 = vadd.f32 %v2820, %v2869
      %v2886 = vadd.f32 %v2833, %v2882
      %2887 = vrot.lane.b32.xlu0 %v2736, 1
      %v2888 = vpop.permute.xlu0 %2887
      %2889 = vrot.lane.b32.xlu0 %v2737, 1
      %v2890 = vpop.permute.xlu0 %2889
      %v2891 = vsel %vm1142, %v2888, %v2890
      %v2894 = vsel %vm1142, 0.0, %v2888
      %v2895 = vmul.f32 %v2894, %v2213
      %v2896 = vmul.f32 %v2891, %v2214
      %s2897 = scalar_lea.vmem %s14, 6
      %v2898 = vld [vmem:[%s2897] sm:$0x3]
      %v2899 = vpack.c.bf16 %v2895, %v2895
      %v2900 = vpack.c.bf16 %v2896, %v2896
      %v2902 = vsel %vm1045, %v2898, 0
      %v2905 = vsel %vm2768, %v2899, 0
      %v2908 = vsel %vm2768, %v2900, 0
      %2910 = vmatpush.bf16.msra.mxu0 0
      %2911 = vmatpush.bf16.msra.mxu0 0
      %2912 = vmatpush.bf16.msra.mxu0 0
      %2913 = vmatpush.bf16.msra.mxu0 0
      %2914 = vmatpush.bf16.msra.mxu0 0
      %2915 = vmatpush.bf16.msra.mxu0 0
      %2916 = vmatpush.bf16.msra.mxu0 0
      %2917 = vmatpush.bf16.msra.mxu0 %v2905
      %2918 = vmatmul.bf16.gmra.mxu0 %v2902
      %v2919 = vpop.f32.mrf.mxu0
      %v2920 = vadd.f32 0.0, %v2919
      %v2921 = vpop.f32.mrf.mxu0
      %2922 = vdwg.mxu0
      %2923 = vmatpush.bf16.msra.mxu0 0
      %2924 = vmatpush.bf16.msra.mxu0 0
      %2925 = vmatpush.bf16.msra.mxu0 0
      %2926 = vmatpush.bf16.msra.mxu0 0
      %2927 = vmatpush.bf16.msra.mxu0 0
      %2928 = vmatpush.bf16.msra.mxu0 0
      %2929 = vmatpush.bf16.msra.mxu0 0
      %2930 = vmatpush.bf16.msra.mxu0 %v2908
      %2931 = vmatmul.bf16.gmra.mxu0 %v2902
      %v2932 = vpop.f32.mrf.mxu0
      %v2933 = vadd.f32 0.0, %v2932
      %v2934 = vpop.f32.mrf.mxu0
      %2935 = vdwg.mxu0
      %v2936 = vadd.f32 %v2885, %v2920
      %v2937 = vadd.f32 %v2886, %v2933
      %s2938 = scalar_lea.vmem %s14, 8
      %v2939 = vld [vmem:[%s2938] sm:$0x3]
      %v2940 = vpack.c.bf16 %v2736, %v2736
      %v2941 = vpack.c.bf16 %v2737, %v2737
      %v2943 = vsel %vm1045, %v2939, 0
      %v2946 = vsel %vm2768, %v2940, 0
      %v2949 = vsel %vm2768, %v2941, 0
      %2951 = vmatpush.bf16.msra.mxu0 0
      %2952 = vmatpush.bf16.msra.mxu0 0
      %2953 = vmatpush.bf16.msra.mxu0 0
      %2954 = vmatpush.bf16.msra.mxu0 0
      %2955 = vmatpush.bf16.msra.mxu0 0
      %2956 = vmatpush.bf16.msra.mxu0 0
      %2957 = vmatpush.bf16.msra.mxu0 0
      %2958 = vmatpush.bf16.msra.mxu0 %v2946
      %2959 = vmatmul.bf16.gmra.mxu0 %v2943
      %v2960 = vpop.f32.mrf.mxu0
      %v2961 = vadd.f32 0.0, %v2960
      %v2962 = vpop.f32.mrf.mxu0
      %2963 = vdwg.mxu0
      %2964 = vmatpush.bf16.msra.mxu0 0
      %2965 = vmatpush.bf16.msra.mxu0 0
      %2966 = vmatpush.bf16.msra.mxu0 0
      %2967 = vmatpush.bf16.msra.mxu0 0
      %2968 = vmatpush.bf16.msra.mxu0 0
      %2969 = vmatpush.bf16.msra.mxu0 0
      %2970 = vmatpush.bf16.msra.mxu0 0
      %2971 = vmatpush.bf16.msra.mxu0 %v2949
      %2972 = vmatmul.bf16.gmra.mxu0 %v2943
      %v2973 = vpop.f32.mrf.mxu0
      %v2974 = vadd.f32 0.0, %v2973
      %v2975 = vpop.f32.mrf.mxu0
      %2976 = vdwg.mxu0
      %v2977 = vadd.f32 %v2936, %v2961
      %v2978 = vadd.f32 %v2937, %v2974
      %2979 = vrot.lane.b32.xlu0 %v2736, 127
      %v2980 = vpop.permute.xlu0 %2979
      %2981 = vrot.lane.b32.xlu0 %v2737, 127
      %v2982 = vpop.permute.xlu0 %2981
      %v2983 = vsel %vm2455, %v2980, %v2982
      %v2986 = vsel %vm2455, %v2982, 0.0
      %v2987 = vmul.f32 %v2983, %v2314
      %v2988 = vmul.f32 %v2986, %v2315
      %s2989 = scalar_lea.vmem %s14, 10
      %v2990 = vld [vmem:[%s2989] sm:$0x3]
      %v2991 = vpack.c.bf16 %v2987, %v2987
      %v2992 = vpack.c.bf16 %v2988, %v2988
      %v2994 = vsel %vm1045, %v2990, 0
      %v2997 = vsel %vm2768, %v2991, 0
      %v3000 = vsel %vm2768, %v2992, 0
      %3002 = vmatpush.bf16.msra.mxu0 0
      %3003 = vmatpush.bf16.msra.mxu0 0
      %3004 = vmatpush.bf16.msra.mxu0 0
      %3005 = vmatpush.bf16.msra.mxu0 0
      %3006 = vmatpush.bf16.msra.mxu0 0
      %3007 = vmatpush.bf16.msra.mxu0 0
      %3008 = vmatpush.bf16.msra.mxu0 0
      %3009 = vmatpush.bf16.msra.mxu0 %v2997
      %3010 = vmatmul.bf16.gmra.mxu0 %v2994
      %v3011 = vpop.f32.mrf.mxu0
      %v3012 = vadd.f32 0.0, %v3011
      %v3013 = vpop.f32.mrf.mxu0
      %3014 = vdwg.mxu0
      %3015 = vmatpush.bf16.msra.mxu0 0
      %3016 = vmatpush.bf16.msra.mxu0 0
      %3017 = vmatpush.bf16.msra.mxu0 0
      %3018 = vmatpush.bf16.msra.mxu0 0
      %3019 = vmatpush.bf16.msra.mxu0 0
      %3020 = vmatpush.bf16.msra.mxu0 0
      %3021 = vmatpush.bf16.msra.mxu0 0
      %3022 = vmatpush.bf16.msra.mxu0 %v3000
      %3023 = vmatmul.bf16.gmra.mxu0 %v2994
      %v3024 = vpop.f32.mrf.mxu0
      %v3025 = vadd.f32 0.0, %v3024
      %v3026 = vpop.f32.mrf.mxu0
      %3027 = vdwg.mxu0
      %v3028 = vadd.f32 %v2977, %v3012
      %v3029 = vadd.f32 %v2978, %v3025
      %3030 = vrot.lane.b32.xlu0 %v2736, 113
      %v3031 = vpop.permute.xlu0 %3030
      %3032 = vrot.lane.b32.xlu0 %v2737, 113
      %v3033 = vpop.permute.xlu0 %3032
      %v3034 = vsel %vm2507, %v3031, %v3033
      %v3037 = vsel %vm2507, %v3033, 0.0
      %v3038 = vmul.f32 %v3034, %v2213
      %v3039 = vmul.f32 %v3037, %v2214
      %s3040 = scalar_lea.vmem %s14, 12
      %v3041 = vld [vmem:[%s3040] sm:$0x3]
      %v3042 = vpack.c.bf16 %v3038, %v3038
      %v3043 = vpack.c.bf16 %v3039, %v3039
      %v3045 = vsel %vm1045, %v3041, 0
      %v3048 = vsel %vm2768, %v3042, 0
      %v3051 = vsel %vm2768, %v3043, 0
      %3053 = vmatpush.bf16.msra.mxu0 0
      %3054 = vmatpush.bf16.msra.mxu0 0
      %3055 = vmatpush.bf16.msra.mxu0 0
      %3056 = vmatpush.bf16.msra.mxu0 0
      %3057 = vmatpush.bf16.msra.mxu0 0
      %3058 = vmatpush.bf16.msra.mxu0 0
      %3059 = vmatpush.bf16.msra.mxu0 0
      %3060 = vmatpush.bf16.msra.mxu0 %v3048
      %3061 = vmatmul.bf16.gmra.mxu0 %v3045
      %v3062 = vpop.f32.mrf.mxu0
      %v3063 = vadd.f32 0.0, %v3062
      %v3064 = vpop.f32.mrf.mxu0
      %3065 = vdwg.mxu0
      %3066 = vmatpush.bf16.msra.mxu0 0
      %3067 = vmatpush.bf16.msra.mxu0 0
      %3068 = vmatpush.bf16.msra.mxu0 0
      %3069 = vmatpush.bf16.msra.mxu0 0
      %3070 = vmatpush.bf16.msra.mxu0 0
      %3071 = vmatpush.bf16.msra.mxu0 0
      %3072 = vmatpush.bf16.msra.mxu0 0
      %3073 = vmatpush.bf16.msra.mxu0 %v3051
      %3074 = vmatmul.bf16.gmra.mxu0 %v3045
      %v3075 = vpop.f32.mrf.mxu0
      %v3076 = vadd.f32 0.0, %v3075
      %v3077 = vpop.f32.mrf.mxu0
      %3078 = vdwg.mxu0
      %v3079 = vadd.f32 %v3028, %v3063
      %v3080 = vadd.f32 %v3029, %v3076
      %3081 = vrot.lane.b32.xlu0 %v2736, 112
      %v3082 = vpop.permute.xlu0 %3081
      %3083 = vrot.lane.b32.xlu0 %v2737, 112
      %v3084 = vpop.permute.xlu0 %3083
      %v3085 = vsel %vm2559, %v3082, %v3084
      %v3088 = vsel %vm2559, %v3084, 0.0
      %s3089 = scalar_lea.vmem %s14, 14
      %v3090 = vld [vmem:[%s3089] sm:$0x3]
      %v3091 = vpack.c.bf16 %v3085, %v3085
      %v3092 = vpack.c.bf16 %v3088, %v3088
      %v3094 = vsel %vm1045, %v3090, 0
      %v3097 = vsel %vm2768, %v3091, 0
      %v3100 = vsel %vm2768, %v3092, 0
      %3102 = vmatpush.bf16.msra.mxu0 0
      %3103 = vmatpush.bf16.msra.mxu0 0
      %3104 = vmatpush.bf16.msra.mxu0 0
      %3105 = vmatpush.bf16.msra.mxu0 0
      %3106 = vmatpush.bf16.msra.mxu0 0
      %3107 = vmatpush.bf16.msra.mxu0 0
      %3108 = vmatpush.bf16.msra.mxu0 0
      %3109 = vmatpush.bf16.msra.mxu0 %v3097
      %3110 = vmatmul.bf16.gmra.mxu0 %v3094
      %v3111 = vpop.f32.mrf.mxu0
      %v3112 = vadd.f32 0.0, %v3111
      %v3113 = vpop.f32.mrf.mxu0
      %3114 = vdwg.mxu0
      %3115 = vmatpush.bf16.msra.mxu0 0
      %3116 = vmatpush.bf16.msra.mxu0 0
      %3117 = vmatpush.bf16.msra.mxu0 0
      %3118 = vmatpush.bf16.msra.mxu0 0
      %3119 = vmatpush.bf16.msra.mxu0 0
      %3120 = vmatpush.bf16.msra.mxu0 0
      %3121 = vmatpush.bf16.msra.mxu0 0
      %3122 = vmatpush.bf16.msra.mxu0 %v3100
      %3123 = vmatmul.bf16.gmra.mxu0 %v3094
      %v3124 = vpop.f32.mrf.mxu0
      %v3125 = vadd.f32 0.0, %v3124
      %v3126 = vpop.f32.mrf.mxu0
      %3127 = vdwg.mxu0
      %v3128 = vadd.f32 %v3079, %v3112
      %v3129 = vadd.f32 %v3080, %v3125
      %3130 = vrot.lane.b32.xlu0 %v2736, 111
      %v3131 = vpop.permute.xlu0 %3130
      %3132 = vrot.lane.b32.xlu0 %v2737, 111
      %v3133 = vpop.permute.xlu0 %3132
      %v3134 = vsel %vm2609, %v3131, %v3133
      %v3137 = vsel %vm2609, %v3133, 0.0
      %v3138 = vmul.f32 %v3134, %v2314
      %v3139 = vmul.f32 %v3137, %v2315
      %s3140 = scalar_lea.vmem %s14, 16
      %v3141 = vld [vmem:[%s3140] sm:$0x3]
      %v3142 = vpack.c.bf16 %v3138, %v3138
      %v3143 = vpack.c.bf16 %v3139, %v3139
      %v3145 = vsel %vm1045, %v3141, 0
      %v3148 = vsel %vm2768, %v3142, 0
      %v3151 = vsel %vm2768, %v3143, 0
      %3153 = vmatpush.bf16.msra.mxu0 0
      %3154 = vmatpush.bf16.msra.mxu0 0
      %3155 = vmatpush.bf16.msra.mxu0 0
      %3156 = vmatpush.bf16.msra.mxu0 0
      %3157 = vmatpush.bf16.msra.mxu0 0
      %3158 = vmatpush.bf16.msra.mxu0 0
      %3159 = vmatpush.bf16.msra.mxu0 0
      %3160 = vmatpush.bf16.msra.mxu0 %v3148
      %3161 = vmatmul.bf16.gmra.mxu0 %v3145
      %v3162 = vpop.f32.mrf.mxu0
      %v3163 = vadd.f32 0.0, %v3162
      %v3164 = vpop.f32.mrf.mxu0
      %3165 = vdwg.mxu0
      %3166 = vmatpush.bf16.msra.mxu0 0
      %3167 = vmatpush.bf16.msra.mxu0 0
      %3168 = vmatpush.bf16.msra.mxu0 0
      %3169 = vmatpush.bf16.msra.mxu0 0
      %3170 = vmatpush.bf16.msra.mxu0 0
      %3171 = vmatpush.bf16.msra.mxu0 0
      %3172 = vmatpush.bf16.msra.mxu0 0
      %3173 = vmatpush.bf16.msra.mxu0 %v3151
      %3174 = vmatmul.bf16.gmra.mxu0 %v3145
      %v3175 = vpop.f32.mrf.mxu0
      %v3176 = vadd.f32 0.0, %v3175
      %v3177 = vpop.f32.mrf.mxu0
      %3178 = vdwg.mxu0
      %v3179 = vadd.f32 %v3128, %v3163
      %v3180 = vadd.f32 %v3129, %v3176
      %v3181 = vld [vmem:[%s19] sm:$0xf]
      %3183 = vset.pattern.permute.xlu0 0
      %3184 = vperm.xlu0 %3183, %v3181
      %v3185 = vpop.permute.xlu0 %3184
      %v3187 = vadd.f32 %v3179, %v3185
      %v3188 = vadd.f32 %v3180, %v3185
      %s3189 = scalar_lea.vmem %s895, 1
      %v3190 = vld [vmem:[%s3189] ss:$2 sm:$0x3]
      %v3191 = vld [vmem:[%s25] sm:$0xf]
      %3193 = vset.pattern.permute.xlu0 0
      %3194 = vperm.xlu0 %3193, %v3191
      %v3195 = vpop.permute.xlu0 %3194
      %v3198 = vperm.slane %v3190, 0
      %v3199 = vperm.slane %v3190, 1
      %v3202 = vmul.f32 %v3195, %v3198
      %v3203 = vmul.f32 %v3195, %v3199
      %v3204 = vadd.f32 %v3187, %v3202
      %v3205 = vadd.f32 %v3188, %v3203
      %vm3206 = vcmp.ge.f32.partialorder %v3204, 0.0
      %vm3207 = vcmp.ge.f32.partialorder %v3205, 0.0
      %v3208 = vmul.f32 %v3204, 0.2
      %v3209 = vmul.f32 %v3205, 0.2
      %v3210 = vsel %vm3206, %v3204, %v3208
      %v3211 = vsel %vm3207, %v3205, %v3209
      %v3212 = vsel %vm1837, %v3210, 0.0
      %v3213 = vsel %vm1837, %v3211, 0.0
      %v3214 = vadd.f32 %v3212, %v3213
      %3215 = vadd.xlane.f32.xlu0 %v3214
      %v3216 = vpop.xlane.xlu0 %3215
      %v3217 = vmul.f32 %v3216, %v2698
      %v3218 = vsub.f32 %v3210, %v3217
      %v3219 = vsub.f32 %v3211, %v3217
      %v3220 = vmul.f32 %v3218, %v3218
      %v3221 = vmul.f32 %v3219, %v3219
      %v3222 = vsel %vm1837, %v3220, 0.0
      %v3223 = vsel %vm1837, %v3221, 0.0
      %v3224 = vadd.f32 %v3222, %v3223
      %3225 = vadd.xlane.f32.xlu0 %v3224
      %v3226 = vpop.xlane.xlu0 %3225
      %v3227 = vmul.f32 %v3226, %v2698
      %v3228 = vadd.f32 %v3227, 1e-05
      %v3229 = vrsqrt.pop %v3228
      %v3230 = vmul.f32 %v3229, %v3228
      %v3231 = vmul.f32 %v3230, %v3229
      %v3232 = vmul.f32 0.5, %v3231
      %v3233 = vsub.f32 1.5, %v3232
      %v3234 = vmul.f32 %v3229, %v3233
      %vm3235 = vweird.f32 %v3228
      %vm3236 = vweird.f32 %v3229
      %vm3237 = vmor %vm3235, %vm3236
      %v3238 = vsel %vm3237, %v3229, %v3234
      %v3239 = vmul.f32 %v3218, %v3238
      %v3240 = vmul.f32 %v3219, %v3238
      %v3241 = vadd.f32 %v915, 1.0
      %3243 = vset.pattern.permute.xlu0 0
      %3244 = vperm.xlu0 %3243, %v3241
      %v3245 = vpop.permute.xlu0 %3244
      %v3247 = vmul.f32 %v3239, %v3245
      %v3248 = vmul.f32 %v3240, %v3245
      %3250 = vset.pattern.permute.xlu0 0
      %3251 = vperm.xlu0 %3250, %v916
      %v3252 = vpop.permute.xlu0 %3251
      %v3254 = vadd.f32 %v3247, %v3252
      %v3255 = vadd.f32 %v3248, %v3252
      %v3256 = vld [vmem:[%s26] sm:$0xf]
      %3258 = vset.pattern.permute.xlu0 0
      %3259 = vperm.xlu0 %3258, %v3256
      %v3260 = vpop.permute.xlu0 %3259
      %v3262 = vmul.f32 %v3260, %v3254
      %v3263 = vmul.f32 %v3260, %v3255
      %v3264 = vsel %vm1837, %v3262, 0.0
      %v3265 = vrot.slane %v3264, 4
      %v3266 = vadd.f32 %v3264, %v3265
      %v3267 = vrot.slane %v3266, 2
      %v3268 = vadd.f32 %v3266, %v3267
      %v3269 = vrot.slane %v3268, 1
      %v3270 = vadd.f32 %v3268, %v3269
      %v3271 = vsel %vm1837, %v3263, 0.0
      %v3272 = vrot.slane %v3271, 4
      %v3273 = vadd.f32 %v3271, %v3272
      %v3274 = vrot.slane %v3273, 2
      %v3275 = vadd.f32 %v3273, %v3274
      %v3276 = vrot.slane %v3275, 1
      %v3277 = vadd.f32 %v3275, %v3276
      %v3278 = vld [vmem:[#allocation2] sm:$0x1]
      %3280 = vset.pattern.permute.xlu0 0
      %3281 = vperm.xlu0 %3280, %v3278
      %v3282 = vpop.permute.xlu0 %3281
      %v3284 = vperm.slane %v3282, 0
      %v3285 = vadd.f32 %v3270, %v3284
      %v3286 = vadd.f32 %v3277, %v3284
      %v3287 = vtanh.pop %v3285
      %v3288 = vtanh.pop %v3286
      %v3291 = vrot.slane %v3288, 7
      %vm3292 = vcmask 1040384
      %v3293 = vsel %vm3292, %v3287, %v3291
      %v3295 = vlaneseq
      %vm3296 = vcmp.ge.s32.totalorder %v3295, 0
      %vm3297 = vcmp.lt.s32.totalorder %v3295, 256
      %vm3298 = vmand %vm3296, %vm3297
      %3299 = vst.msk [vmem:[%s899] sm:$0x3] %vm3298, %v3293
      %p3300 = scmp.lt.s32.totalorder %s41, 1
      %s3301 = scalar_select %p3300, %s41, 1
      %s3302 = smul.addr %s3301, 2
      %s3303 = scalar_lea.vmem %s28, %s3302
      // Predicated region
      $region133: #{style_generator_forward.1} parent=131 // pred_check
        %p3304 = pneg %p667
      $region134: #{style_generator_forward.1} parent=131 // pred_check_branch
        %3306 = sbr.rel (%p3304) target = $region136
      $region135: #{style_generator_forward.1} parent=131 // pred_region
        _
      $region136: #{style_generator_forward.1} parent=131 // pred_fallthru
        _
    $region132: #{style_generator_forward.1} parent=5 // pred_fallthru
      _
    %p3307 = scmp.le.s32.totalorder 2, %s36
    // Predicated region
    $region137: #{style_generator_forward.1} parent=5 // pred_check
      %p3308 = pneg %p3307
    $region138: #{style_generator_forward.1} parent=5 // pred_check_branch
      %3310 = sbr.rel (%p3308) target = $region140
    $region139: #{style_generator_forward.1} parent=5 // pred_region
      %s3311 = ssub.s32 %s36, 2
      // Predicated region
      $region141: #{style_generator_forward.1} parent=139 // pred_check
        %p3312 = pneg %p673
      $region142: #{style_generator_forward.1} parent=139 // pred_check_branch
        %3314 = sbr.rel (%p3312) target = $region144
      $region143: #{style_generator_forward.1} parent=139 // pred_region
        %p3315 = scmp.lt.s32.totalorder %s42, 1
        %s3316 = scalar_select %p3315, %s42, 1
        %s3317 = smul.addr %s3316, 2
        %s3318 = scalar_lea.vmem %s28, %s3317
      $region144: #{style_generator_forward.1} parent=139 // pred_fallthru
        _
    $region140: #{style_generator_forward.1} parent=5 // pred_fallthru
      _
  $region6: #{style_generator_forward.1} parent=0 // loop_footer
    %s40 = sadd.s32 1, %s36
  $region7: #{style_generator_forward.1} parent=0 // loop_footer_branch
    %35 = sbr.rel target = $region3
  $region8: #{style_generator_forward.1} parent=0 // loop_exit
    _

</llo_original>
